<compile_context>
chip_gen: v6e
topology: v6e:2x2x1
jax: 0.10.0
libtpu: 0.0.40
codegen_flags: <defaults>
</compile_context>

<pallas_src>
import jax
import jax.numpy as jnp
import numpy as np
from jax.experimental import pallas as pl
from jax.experimental.pallas import tpu as pltpu

HALO = 5  # five chained 3x3 convs -> 5 halo rows on each side of an output strip


def lfb_kernel(x_ref, hm_ref,
               w1a_ref, b1a_ref, w1b_ref, b1b_ref,
               w2a_ref, b2a_ref, w2b_ref, b2b_ref,
               wfa_ref, wfb_ref, bfu_ref,
               eps_ref, o_ref):
    Hs, W, C = o_ref.shape
    s = pl.program_id(1)
    g0 = s * Hs                                   # first output row of this strip

    # Extended input strip: image rows [g0-HALO, g0+Hs+HALO); out-of-image rows are
    # true zeros (wrapper-side halo padding).
    x_s = x_ref[pl.ds(g0, Hs + 2 * HALO), :, :]   # (Hs+10, W, C) f32

    def kx_slab(v):
        """(R, W, Ci) -> (R, W, 3*Ci) bf16 slab: slab[r, w, kx*Ci+ci] =
        zero-W-padded(v)[r, w+kx, ci].  One bf16 cast per conv; staging in bf16."""
        vb = v.astype(jnp.bfloat16)
        R, _, Ci = vb.shape
        zc = jnp.zeros((R, 1, Ci), jnp.bfloat16)
        vp = jnp.concatenate([zc, vb, zc], axis=1)                       # (R, W+2, Ci)
        return jnp.concatenate([vp[:, 0:W], vp[:, 1:1 + W], vp[:, 2:2 + W]], axis=-1)

    def mxu(slab, w_ref):
        """(R, W, K) bf16 x (K, 3C) bf16 -> (R, W, 3C) f32, single fat matmul."""
        R, _, K = slab.shape
        y = jax.lax.dot_general(
            slab.reshape(R * W, K), w_ref[...],
            dimension_numbers=(((1,), (0,)), ((), ())),
            preferred_element_type=jnp.float32)
        return y.reshape(R, W, 3 * C)

    def ky_sum(y):
        """Combine ky output column groups with H-shifted adds (valid in H):
        out[r] = y[r, :, 0:C] + y[r+1, :, C:2C] + y[r+2, :, 2C:3C]."""
        R = y.shape[0]
        return y[0:R - 2, :, 0:C] + y[1:R - 1, :, C:2 * C] + y[2:R, :, 2 * C:3 * C]

    def rowmask(v, pad_row0):
        """Zero rows of v lying outside the image (pad_row0 = padded-array row of v[0])."""
        R = v.shape[0]
        m = hm_ref[pl.ds(pad_row0, R), :]                                # (R, 1) {0,1}
        return v * m[:, :, None]

    def conv(v, w_ref):
        return ky_sum(mxu(kx_slab(v), w_ref))

    # ---- res1: r1 = x + conv1b(relu(conv1a(x))) ----
    h = rowmask(jnp.maximum(conv(x_s, w1a_ref) + b1a_ref[...], 0.0), g0 + 1)
    r1 = rowmask(x_s[2:2 + Hs + 6] + conv(h, w1b_ref) + b1b_ref[...], g0 + 2)

    # ---- res2: r2 = r1 + conv2b(relu(conv2a(r1))) ----
    slab_r1 = kx_slab(r1)                         # reused below by the fuse conv
    h2 = rowmask(jnp.maximum(ky_sum(mxu(slab_r1, w2a_ref)) + b2a_ref[...], 0.0), g0 + 3)
    r1c = r1[2:2 + Hs + 2]                        # rows [g0-1, g0+Hs+1)
    r2 = rowmask(r1c + conv(h2, w2b_ref) + b2b_ref[...], g0 + 4)

    # ---- fuse: conv3x3(cat([r1, r2], C), Wf) == conv(r1, Wf[:, :C]) + conv(r2, Wf[:, C:]) ----
    yf = mxu(slab_r1[2:2 + Hs + 2], wfa_ref) + mxu(kx_slab(r2), wfb_ref)
    r3 = ky_sum(yf) + bfu_ref[...]                # (Hs, W, C)

    # ---- blend: out = ep1 * x + ep2 * r3 ----
    eps = eps_ref[...]                            # (1, 2) f32 runtime scalars
    out = x_s[HALO:HALO + Hs] * eps[:, 0:1] + r3 * eps[:, 1:2]
    o_ref[...] = out.astype(o_ref.dtype)


def _prep_w(w):
    """PyTorch OIHW (Co, Ci, 3, 3) -> (3*Ci, 3*Co) bf16; rows = kx*Ci + ci (MXU K),
    cols = ky*Co + co (ky on the MXU N axis)."""
    co, ci = w.shape[0], w.shape[1]
    return (jnp.transpose(w, (3, 1, 2, 0))        # (kx, ci, ky, co)
            .reshape(3 * ci, 3 * co)
            .astype(jnp.bfloat16))


def residual_block_nobn_lfb(x_nchw, params, ep1=1.0, ep2=1.0, strip_rows=None):
    """x_nchw: (B, C, H, W) f32.
    params: {'res1': (w1, b1, w2, b2), 'res2': (w1, b1, w2, b2), 'fuse': (w, b)}
    with PyTorch OIHW conv weights ((C,C,3,3) / (C,2C,3,3)) and (C,) biases."""
    B, C, H, W = x_nchw.shape
    if strip_rows is None or not (0 < strip_rows <= H) or H % strip_rows != 0:
        strip_rows = H                            # single-strip fallback
    Hs = strip_rows
    n_strips = H // Hs
    Hp = H + 2 * HALO

    # NHWC inside the kernel (channels on the lane axis) + H halo rows of zeros.
    x_nhwc = jnp.transpose(x_nchw, (0, 2, 3, 1)).astype(jnp.float32)
    xh = jnp.pad(x_nhwc, ((0, 0), (HALO, HALO), (0, 0), (0, 0)))         # (B, Hp, W, C)

    # In-image row indicator in the padded layout; the kernel multiplies intermediate
    # strips by slices of this column to zero rows outside the true image.
    hmask = jnp.pad(jnp.ones((H, 1), jnp.float32), ((HALO, HALO), (0, 0)))  # (Hp, 1)

    w1a, b1a, w1b, b1b = params["res1"]
    w2a, b2a, w2b, b2b = params["res2"]
    wf, bfu = params["fuse"]
    wfa, wfb = wf[:, :C], wf[:, C:]               # split of the fuse conv over r1 / r2

    def as_row(b):
        return b.reshape(1, C).astype(jnp.float32)

    eps = jnp.asarray([ep1, ep2], dtype=jnp.float32).reshape(1, 2)

    x_spec = pl.BlockSpec((None, Hp, W, C), lambda b, s: (b, 0, 0, 0))
    hm_spec = pl.BlockSpec((Hp, 1), lambda b, s: (0, 0))
    w_spec = pl.BlockSpec((3 * C, 3 * C), lambda b, s: (0, 0))
    b_spec = pl.BlockSpec((1, C), lambda b, s: (0, 0))
    eps_spec = pl.BlockSpec((1, 2), lambda b, s: (0, 0))
    o_spec = pl.BlockSpec((None, Hs, W, C), lambda b, s: (b, s, 0, 0))

    out_nhwc = pl.pallas_call(
        lfb_kernel,
        out_shape=jax.ShapeDtypeStruct((B, H, W, C), x_nchw.dtype),
        grid_spec=pltpu.PrefetchScalarGridSpec(
            num_scalar_prefetch=0,
            grid=(B, n_strips),
            in_specs=[x_spec, hm_spec,
                      w_spec, b_spec, w_spec, b_spec,
                      w_spec, b_spec, w_spec, b_spec,
                      w_spec, w_spec, b_spec,
                      eps_spec],
            out_specs=o_spec),
        compiler_params=pltpu.CompilerParams(
            dimension_semantics=("parallel", "parallel"),
            vmem_limit_bytes=48 * 1024 * 1024),
    )(xh, hmask,
      _prep_w(w1a), as_row(b1a), _prep_w(w1b), as_row(b1b),
      _prep_w(w2a), as_row(b2a), _prep_w(w2b), as_row(b2b),
      _prep_w(wfa), _prep_w(wfb), as_row(bfu),
      eps)

    return jnp.transpose(out_nhwc, (0, 3, 1, 2))


def _lfb_reference(x, params, ep1, ep2):
    """Pure-JAX f32 reference matching the PyTorch forward (NCHW, OIHW, pad=1)."""
    dn = ("NCHW", "OIHW", "NCHW")

    def conv(v, w, b):
        y = jax.lax.conv_general_dilated(v, w, (1, 1), "SAME", dimension_numbers=dn)
        return y + b[None, :, None, None]

    def resblock(v, w1, b1, w2, b2):
        return v + conv(jnp.maximum(conv(v, w1, b1), 0.0), w2, b2)

    r1 = resblock(x, *params["res1"])
    r2 = resblock(r1, *params["res2"])
    r3 = conv(jnp.concatenate([r1, r2], axis=1), *params["fuse"])
    return x * ep1 + r3 * ep2


if __name__ == "__main__":
    nf = 64                       # module default channel count
    B, H, W = 2, 16, 16
    ep1, ep2 = 0.9, 1.1           # exercise the runtime blend scalars

    key = jax.random.PRNGKey(0)
    ks = jax.random.split(key, 11)

    x = jax.random.normal(ks[0], (B, nf, H, W), dtype=jnp.float32)

    std_res = float(np.sqrt(2.0 / (nf * 9)) * 0.1)       # kaiming_normal_(fan_in) * 0.1
    std_fuse = float(np.sqrt(2.0 / (2 * nf * 9)) * 0.1)

    def mk_w(k, c_out, c_in, std):
        return jax.random.normal(k, (c_out, c_in, 3, 3), jnp.float32) * std

    def mk_b(k, c):
        # module init zeroes biases; use nonzero values to exercise the bias path
        # and the strip-boundary masking (which only matters when biases != 0).
        return jax.random.normal(k, (c,), jnp.float32) * 0.05

    params = {
        "res1": (mk_w(ks[1], nf, nf, std_res), mk_b(ks[2], nf),
                 mk_w(ks[3], nf, nf, std_res), mk_b(ks[4], nf)),
        "res2": (mk_w(ks[5], nf, nf, std_res), mk_b(ks[6], nf),
                 mk_w(ks[7], nf, nf, std_res), mk_b(ks[8], nf)),
        "fuse": (mk_w(ks[9], nf, 2 * nf, std_fuse), mk_b(ks[10], nf)),
    }

    # strip_rows=8 -> grid (B, 2): exercises halo recomputation plus the top /
    # interior / bottom boundary-masking paths of the strip pipeline.
    out = residual_block_nobn_lfb(x, params, ep1=ep1, ep2=ep2, strip_rows=8)
    out = jax.block_until_ready(out)

    ref = jax.block_until_ready(_lfb_reference(x, params, ep1, ep2))
    # bf16 MXU operands with f32 accumulation -> slightly loosened tolerance
    np.testing.assert_allclose(np.asarray(out), np.asarray(ref), rtol=2e-2, atol=2e-2)

    print("KERNEL_OK")
</pallas_src>

<mosaic_0001>
module attributes {stable_mosaic.version = 11 : i64} {
  func.func @lfb_kernel(%arg0: i32, %arg1: i32, %arg2: memref<1x26x16x64xf32, #tpu.memory_space<vmem>>, %arg3: memref<26x1xf32, #tpu.memory_space<vmem>>, %arg4: memref<192x192xbf16, #tpu.memory_space<vmem>>, %arg5: memref<1x64xf32, #tpu.memory_space<vmem>>, %arg6: memref<192x192xbf16, #tpu.memory_space<vmem>>, %arg7: memref<1x64xf32, #tpu.memory_space<vmem>>, %arg8: memref<192x192xbf16, #tpu.memory_space<vmem>>, %arg9: memref<1x64xf32, #tpu.memory_space<vmem>>, %arg10: memref<192x192xbf16, #tpu.memory_space<vmem>>, %arg11: memref<1x64xf32, #tpu.memory_space<vmem>>, %arg12: memref<192x192xbf16, #tpu.memory_space<vmem>>, %arg13: memref<192x192xbf16, #tpu.memory_space<vmem>>, %arg14: memref<1x64xf32, #tpu.memory_space<vmem>>, %arg15: memref<1x2xf32, #tpu.memory_space<vmem>>, %arg16: memref<1x8x16x64xf32, #tpu.memory_space<vmem>>) attributes {dimension_semantics = [#tpu.dimension_semantics<parallel>, #tpu.dimension_semantics<parallel>], iteration_bounds = array<i64: 2, 2>, scalar_prefetch = 0 : i64, scratch_operands = 0 : i64, tpu.core_type = #tpu.core_type<tc>, window_params = [{transform_indices = @transform_0, window_bounds = array<i64: 1, 26, 16, 64>}, {pipeline_mode = #tpu.pipeline_mode<synchronous>, transform_indices = @transform_1, window_bounds = array<i64: 26, 1>}, {pipeline_mode = #tpu.pipeline_mode<synchronous>, transform_indices = @transform_2, window_bounds = array<i64: 192, 192>}, {pipeline_mode = #tpu.pipeline_mode<synchronous>, transform_indices = @transform_3, window_bounds = array<i64: 1, 64>}, {pipeline_mode = #tpu.pipeline_mode<synchronous>, transform_indices = @transform_4, window_bounds = array<i64: 192, 192>}, {pipeline_mode = #tpu.pipeline_mode<synchronous>, transform_indices = @transform_5, window_bounds = array<i64: 1, 64>}, {pipeline_mode = #tpu.pipeline_mode<synchronous>, transform_indices = @transform_6, window_bounds = array<i64: 192, 192>}, {pipeline_mode = #tpu.pipeline_mode<synchronous>, transform_indices = @transform_7, window_bounds = array<i64: 1, 64>}, {pipeline_mode = #tpu.pipeline_mode<synchronous>, transform_indices = @transform_8, window_bounds = array<i64: 192, 192>}, {pipeline_mode = #tpu.pipeline_mode<synchronous>, transform_indices = @transform_9, window_bounds = array<i64: 1, 64>}, {pipeline_mode = #tpu.pipeline_mode<synchronous>, transform_indices = @transform_10, window_bounds = array<i64: 192, 192>}, {pipeline_mode = #tpu.pipeline_mode<synchronous>, transform_indices = @transform_11, window_bounds = array<i64: 192, 192>}, {pipeline_mode = #tpu.pipeline_mode<synchronous>, transform_indices = @transform_12, window_bounds = array<i64: 1, 64>}, {pipeline_mode = #tpu.pipeline_mode<synchronous>, transform_indices = @transform_13, window_bounds = array<i64: 1, 2>}, {transform_indices = @transform_14, window_bounds = array<i64: 1, 8, 16, 64>}]} {
    %c8_i32 = arith.constant 8 : i32
    %0 = arith.muli %arg1, %c8_i32 : i32
    %c0 = arith.constant 0 : index
    %1 = arith.index_cast %0 : i32 to index
    %c0_0 = arith.constant 0 : index
    %c0_1 = arith.constant 0 : index
    %2 = vector.load %arg2[%c0, %1, %c0_0, %c0_1] : memref<1x26x16x64xf32, #tpu.memory_space<vmem>>, vector<1x18x16x64xf32>
    %3 = vector.shape_cast %2 : vector<1x18x16x64xf32> to vector<18x16x64xf32>
    %4 = arith.truncf %3 : vector<18x16x64xf32> to vector<18x16x64xbf16>
    %cst = arith.constant 0.000000e+00 : bf16
    %5 = vector.broadcast %cst : bf16 to vector<18x1x64xbf16>
    %6 = tpu.concatenate %5, %4, %5 in 1 : vector<18x1x64xbf16>, vector<18x16x64xbf16>, vector<18x1x64xbf16> -> vector<18x18x64xbf16>
    %7 = vector.extract_strided_slice %6 {offsets = [0, 0, 0], sizes = [18, 16, 64], strides = [1, 1, 1]} : vector<18x18x64xbf16> to vector<18x16x64xbf16>
    %8 = vector.extract_strided_slice %6 {offsets = [0, 1, 0], sizes = [18, 16, 64], strides = [1, 1, 1]} : vector<18x18x64xbf16> to vector<18x16x64xbf16>
    %9 = vector.extract_strided_slice %6 {offsets = [0, 2, 0], sizes = [18, 16, 64], strides = [1, 1, 1]} : vector<18x18x64xbf16> to vector<18x16x64xbf16>
    %10 = tpu.concatenate %7, %8, %9 in 2 : vector<18x16x64xbf16>, vector<18x16x64xbf16>, vector<18x16x64xbf16> -> vector<18x16x192xbf16>
    %11 = vector.shape_cast %10 : vector<18x16x192xbf16> to vector<288x192xbf16>
    %c0_2 = arith.constant 0 : index
    %c0_3 = arith.constant 0 : index
    %12 = vector.load %arg4[%c0_2, %c0_3] : memref<192x192xbf16, #tpu.memory_space<vmem>>, vector<192x192xbf16>
    %cst_4 = arith.constant dense<0.000000e+00> : vector<288x192xf32>
    %13 = tpu.matmul %11, %12, %cst_4 {dimension_numbers = #tpu.dot_dimension_numbers<[1], [0], [0], [1], [0, 0, 1, 1], [], []>} : vector<288x192xbf16>, vector<192x192xbf16>, vector<288x192xf32> -> vector<288x192xf32>
    %14 = vector.shape_cast %13 : vector<288x192xf32> to vector<18x16x192xf32>
    %15 = vector.extract_strided_slice %14 {offsets = [0, 0, 0], sizes = [16, 16, 64], strides = [1, 1, 1]} : vector<18x16x192xf32> to vector<16x16x64xf32>
    %16 = vector.extract_strided_slice %14 {offsets = [1, 0, 64], sizes = [16, 16, 64], strides = [1, 1, 1]} : vector<18x16x192xf32> to vector<16x16x64xf32>
    %17 = arith.addf %15, %16 : vector<16x16x64xf32>
    %18 = vector.extract_strided_slice %14 {offsets = [2, 0, 128], sizes = [16, 16, 64], strides = [1, 1, 1]} : vector<18x16x192xf32> to vector<16x16x64xf32>
    %19 = arith.addf %17, %18 : vector<16x16x64xf32>
    %c0_5 = arith.constant 0 : index
    %c0_6 = arith.constant 0 : index
    %20 = vector.load %arg5[%c0_5, %c0_6] : memref<1x64xf32, #tpu.memory_space<vmem>>, vector<1x64xf32>
    %21 = vector.shape_cast %20 : vector<1x64xf32> to vector<1x1x64xf32>
    %22 = vector.broadcast %21 : vector<1x1x64xf32> to vector<16x16x64xf32>
    %23 = arith.addf %19, %22 : vector<16x16x64xf32>
    %cst_7 = arith.constant 0.000000e+00 : f32
    %24 = vector.broadcast %cst_7 : f32 to vector<16x16x64xf32>
    %25 = arith.maximumf %23, %24 : vector<16x16x64xf32>
    %c1_i32 = arith.constant 1 : i32
    %26 = arith.addi %0, %c1_i32 : i32
    %27 = arith.index_cast %26 : i32 to index
    %c0_8 = arith.constant 0 : index
    %28 = vector.load %arg3[%27, %c0_8] : memref<26x1xf32, #tpu.memory_space<vmem>>, vector<16x1xf32>
    %29 = vector.shape_cast %28 : vector<16x1xf32> to vector<16x1x1xf32>
    %30 = vector.broadcast %29 : vector<16x1x1xf32> to vector<16x16x64xf32>
    %31 = arith.mulf %25, %30 : vector<16x16x64xf32>
    %32 = vector.extract_strided_slice %3 {offsets = [2, 0, 0], sizes = [14, 16, 64], strides = [1, 1, 1]} : vector<18x16x64xf32> to vector<14x16x64xf32>
    %33 = arith.truncf %31 : vector<16x16x64xf32> to vector<16x16x64xbf16>
    %cst_9 = arith.constant 0.000000e+00 : bf16
    %34 = vector.broadcast %cst_9 : bf16 to vector<16x1x64xbf16>
    %35 = tpu.concatenate %34, %33, %34 in 1 : vector<16x1x64xbf16>, vector<16x16x64xbf16>, vector<16x1x64xbf16> -> vector<16x18x64xbf16>
    %36 = vector.extract_strided_slice %35 {offsets = [0, 0, 0], sizes = [16, 16, 64], strides = [1, 1, 1]} : vector<16x18x64xbf16> to vector<16x16x64xbf16>
    %37 = vector.extract_strided_slice %35 {offsets = [0, 1, 0], sizes = [16, 16, 64], strides = [1, 1, 1]} : vector<16x18x64xbf16> to vector<16x16x64xbf16>
    %38 = vector.extract_strided_slice %35 {offsets = [0, 2, 0], sizes = [16, 16, 64], strides = [1, 1, 1]} : vector<16x18x64xbf16> to vector<16x16x64xbf16>
    %39 = tpu.concatenate %36, %37, %38 in 2 : vector<16x16x64xbf16>, vector<16x16x64xbf16>, vector<16x16x64xbf16> -> vector<16x16x192xbf16>
    %40 = vector.shape_cast %39 : vector<16x16x192xbf16> to vector<256x192xbf16>
    %c0_10 = arith.constant 0 : index
    %c0_11 = arith.constant 0 : index
    %41 = vector.load %arg6[%c0_10, %c0_11] : memref<192x192xbf16, #tpu.memory_space<vmem>>, vector<192x192xbf16>
    %cst_12 = arith.constant dense<0.000000e+00> : vector<256x192xf32>
    %42 = tpu.matmul %40, %41, %cst_12 {dimension_numbers = #tpu.dot_dimension_numbers<[1], [0], [0], [1], [0, 0, 1, 1], [], []>} : vector<256x192xbf16>, vector<192x192xbf16>, vector<256x192xf32> -> vector<256x192xf32>
    %43 = vector.shape_cast %42 : vector<256x192xf32> to vector<16x16x192xf32>
    %44 = vector.extract_strided_slice %43 {offsets = [0, 0, 0], sizes = [14, 16, 64], strides = [1, 1, 1]} : vector<16x16x192xf32> to vector<14x16x64xf32>
    %45 = vector.extract_strided_slice %43 {offsets = [1, 0, 64], sizes = [14, 16, 64], strides = [1, 1, 1]} : vector<16x16x192xf32> to vector<14x16x64xf32>
    %46 = arith.addf %44, %45 : vector<14x16x64xf32>
    %47 = vector.extract_strided_slice %43 {offsets = [2, 0, 128], sizes = [14, 16, 64], strides = [1, 1, 1]} : vector<16x16x192xf32> to vector<14x16x64xf32>
    %48 = arith.addf %46, %47 : vector<14x16x64xf32>
    %49 = arith.addf %32, %48 : vector<14x16x64xf32>
    %c0_13 = arith.constant 0 : index
    %c0_14 = arith.constant 0 : index
    %50 = vector.load %arg7[%c0_13, %c0_14] : memref<1x64xf32, #tpu.memory_space<vmem>>, vector<1x64xf32>
    %51 = vector.shape_cast %50 : vector<1x64xf32> to vector<1x1x64xf32>
    %52 = vector.broadcast %51 : vector<1x1x64xf32> to vector<14x16x64xf32>
    %53 = arith.addf %49, %52 : vector<14x16x64xf32>
    %c2_i32 = arith.constant 2 : i32
    %54 = arith.addi %0, %c2_i32 : i32
    %55 = arith.index_cast %54 : i32 to index
    %c0_15 = arith.constant 0 : index
    %56 = vector.load %arg3[%55, %c0_15] : memref<26x1xf32, #tpu.memory_space<vmem>>, vector<14x1xf32>
    %57 = vector.shape_cast %56 : vector<14x1xf32> to vector<14x1x1xf32>
    %58 = vector.broadcast %57 : vector<14x1x1xf32> to vector<14x16x64xf32>
    %59 = arith.mulf %53, %58 : vector<14x16x64xf32>
    %60 = arith.truncf %59 : vector<14x16x64xf32> to vector<14x16x64xbf16>
    %cst_16 = arith.constant 0.000000e+00 : bf16
    %61 = vector.broadcast %cst_16 : bf16 to vector<14x1x64xbf16>
    %62 = tpu.concatenate %61, %60, %61 in 1 : vector<14x1x64xbf16>, vector<14x16x64xbf16>, vector<14x1x64xbf16> -> vector<14x18x64xbf16>
    %63 = vector.extract_strided_slice %62 {offsets = [0, 0, 0], sizes = [14, 16, 64], strides = [1, 1, 1]} : vector<14x18x64xbf16> to vector<14x16x64xbf16>
    %64 = vector.extract_strided_slice %62 {offsets = [0, 1, 0], sizes = [14, 16, 64], strides = [1, 1, 1]} : vector<14x18x64xbf16> to vector<14x16x64xbf16>
    %65 = vector.extract_strided_slice %62 {offsets = [0, 2, 0], sizes = [14, 16, 64], strides = [1, 1, 1]} : vector<14x18x64xbf16> to vector<14x16x64xbf16>
    %66 = tpu.concatenate %63, %64, %65 in 2 : vector<14x16x64xbf16>, vector<14x16x64xbf16>, vector<14x16x64xbf16> -> vector<14x16x192xbf16>
    %67 = vector.shape_cast %66 : vector<14x16x192xbf16> to vector<224x192xbf16>
    %c0_17 = arith.constant 0 : index
    %c0_18 = arith.constant 0 : index
    %68 = vector.load %arg8[%c0_17, %c0_18] : memref<192x192xbf16, #tpu.memory_space<vmem>>, vector<192x192xbf16>
    %cst_19 = arith.constant dense<0.000000e+00> : vector<224x192xf32>
    %69 = tpu.matmul %67, %68, %cst_19 {dimension_numbers = #tpu.dot_dimension_numbers<[1], [0], [0], [1], [0, 0, 1, 1], [], []>} : vector<224x192xbf16>, vector<192x192xbf16>, vector<224x192xf32> -> vector<224x192xf32>
    %70 = vector.shape_cast %69 : vector<224x192xf32> to vector<14x16x192xf32>
    %71 = vector.extract_strided_slice %70 {offsets = [0, 0, 0], sizes = [12, 16, 64], strides = [1, 1, 1]} : vector<14x16x192xf32> to vector<12x16x64xf32>
    %72 = vector.extract_strided_slice %70 {offsets = [1, 0, 64], sizes = [12, 16, 64], strides = [1, 1, 1]} : vector<14x16x192xf32> to vector<12x16x64xf32>
    %73 = arith.addf %71, %72 : vector<12x16x64xf32>
    %74 = vector.extract_strided_slice %70 {offsets = [2, 0, 128], sizes = [12, 16, 64], strides = [1, 1, 1]} : vector<14x16x192xf32> to vector<12x16x64xf32>
    %75 = arith.addf %73, %74 : vector<12x16x64xf32>
    %c0_20 = arith.constant 0 : index
    %c0_21 = arith.constant 0 : index
    %76 = vector.load %arg9[%c0_20, %c0_21] : memref<1x64xf32, #tpu.memory_space<vmem>>, vector<1x64xf32>
    %77 = vector.shape_cast %76 : vector<1x64xf32> to vector<1x1x64xf32>
    %78 = vector.broadcast %77 : vector<1x1x64xf32> to vector<12x16x64xf32>
    %79 = arith.addf %75, %78 : vector<12x16x64xf32>
    %cst_22 = arith.constant 0.000000e+00 : f32
    %80 = vector.broadcast %cst_22 : f32 to vector<12x16x64xf32>
    %81 = arith.maximumf %79, %80 : vector<12x16x64xf32>
    %c3_i32 = arith.constant 3 : i32
    %82 = arith.addi %0, %c3_i32 : i32
    %83 = arith.index_cast %82 : i32 to index
    %c0_23 = arith.constant 0 : index
    %84 = vector.load %arg3[%83, %c0_23] : memref<26x1xf32, #tpu.memory_space<vmem>>, vector<12x1xf32>
    %85 = vector.shape_cast %84 : vector<12x1xf32> to vector<12x1x1xf32>
    %86 = vector.broadcast %85 : vector<12x1x1xf32> to vector<12x16x64xf32>
    %87 = arith.mulf %81, %86 : vector<12x16x64xf32>
    %88 = vector.extract_strided_slice %59 {offsets = [2, 0, 0], sizes = [10, 16, 64], strides = [1, 1, 1]} : vector<14x16x64xf32> to vector<10x16x64xf32>
    %89 = arith.truncf %87 : vector<12x16x64xf32> to vector<12x16x64xbf16>
    %cst_24 = arith.constant 0.000000e+00 : bf16
    %90 = vector.broadcast %cst_24 : bf16 to vector<12x1x64xbf16>
    %91 = tpu.concatenate %90, %89, %90 in 1 : vector<12x1x64xbf16>, vector<12x16x64xbf16>, vector<12x1x64xbf16> -> vector<12x18x64xbf16>
    %92 = vector.extract_strided_slice %91 {offsets = [0, 0, 0], sizes = [12, 16, 64], strides = [1, 1, 1]} : vector<12x18x64xbf16> to vector<12x16x64xbf16>
    %93 = vector.extract_strided_slice %91 {offsets = [0, 1, 0], sizes = [12, 16, 64], strides = [1, 1, 1]} : vector<12x18x64xbf16> to vector<12x16x64xbf16>
    %94 = vector.extract_strided_slice %91 {offsets = [0, 2, 0], sizes = [12, 16, 64], strides = [1, 1, 1]} : vector<12x18x64xbf16> to vector<12x16x64xbf16>
    %95 = tpu.concatenate %92, %93, %94 in 2 : vector<12x16x64xbf16>, vector<12x16x64xbf16>, vector<12x16x64xbf16> -> vector<12x16x192xbf16>
    %96 = vector.shape_cast %95 : vector<12x16x192xbf16> to vector<192x192xbf16>
    %c0_25 = arith.constant 0 : index
    %c0_26 = arith.constant 0 : index
    %97 = vector.load %arg10[%c0_25, %c0_26] : memref<192x192xbf16, #tpu.memory_space<vmem>>, vector<192x192xbf16>
    %cst_27 = arith.constant dense<0.000000e+00> : vector<192x192xf32>
    %98 = tpu.matmul %96, %97, %cst_27 {dimension_numbers = #tpu.dot_dimension_numbers<[1], [0], [0], [1], [0, 0, 1, 1], [], []>} : vector<192x192xbf16>, vector<192x192xbf16>, vector<192x192xf32> -> vector<192x192xf32>
    %99 = vector.shape_cast %98 : vector<192x192xf32> to vector<12x16x192xf32>
    %100 = vector.extract_strided_slice %99 {offsets = [0, 0, 0], sizes = [10, 16, 64], strides = [1, 1, 1]} : vector<12x16x192xf32> to vector<10x16x64xf32>
    %101 = vector.extract_strided_slice %99 {offsets = [1, 0, 64], sizes = [10, 16, 64], strides = [1, 1, 1]} : vector<12x16x192xf32> to vector<10x16x64xf32>
    %102 = arith.addf %100, %101 : vector<10x16x64xf32>
    %103 = vector.extract_strided_slice %99 {offsets = [2, 0, 128], sizes = [10, 16, 64], strides = [1, 1, 1]} : vector<12x16x192xf32> to vector<10x16x64xf32>
    %104 = arith.addf %102, %103 : vector<10x16x64xf32>
    %105 = arith.addf %88, %104 : vector<10x16x64xf32>
    %c0_28 = arith.constant 0 : index
    %c0_29 = arith.constant 0 : index
    %106 = vector.load %arg11[%c0_28, %c0_29] : memref<1x64xf32, #tpu.memory_space<vmem>>, vector<1x64xf32>
    %107 = vector.shape_cast %106 : vector<1x64xf32> to vector<1x1x64xf32>
    %108 = vector.broadcast %107 : vector<1x1x64xf32> to vector<10x16x64xf32>
    %109 = arith.addf %105, %108 : vector<10x16x64xf32>
    %c4_i32 = arith.constant 4 : i32
    %110 = arith.addi %0, %c4_i32 : i32
    %111 = arith.index_cast %110 : i32 to index
    %c0_30 = arith.constant 0 : index
    %112 = vector.load %arg3[%111, %c0_30] : memref<26x1xf32, #tpu.memory_space<vmem>>, vector<10x1xf32>
    %113 = vector.shape_cast %112 : vector<10x1xf32> to vector<10x1x1xf32>
    %114 = vector.broadcast %113 : vector<10x1x1xf32> to vector<10x16x64xf32>
    %115 = arith.mulf %109, %114 : vector<10x16x64xf32>
    %116 = vector.extract_strided_slice %66 {offsets = [2, 0, 0], sizes = [10, 16, 192], strides = [1, 1, 1]} : vector<14x16x192xbf16> to vector<10x16x192xbf16>
    %117 = vector.shape_cast %116 : vector<10x16x192xbf16> to vector<160x192xbf16>
    %c0_31 = arith.constant 0 : index
    %c0_32 = arith.constant 0 : index
    %118 = vector.load %arg12[%c0_31, %c0_32] : memref<192x192xbf16, #tpu.memory_space<vmem>>, vector<192x192xbf16>
    %cst_33 = arith.constant dense<0.000000e+00> : vector<160x192xf32>
    %119 = tpu.matmul %117, %118, %cst_33 {dimension_numbers = #tpu.dot_dimension_numbers<[1], [0], [0], [1], [0, 0, 1, 1], [], []>} : vector<160x192xbf16>, vector<192x192xbf16>, vector<160x192xf32> -> vector<160x192xf32>
    %120 = vector.shape_cast %119 : vector<160x192xf32> to vector<10x16x192xf32>
    %121 = arith.truncf %115 : vector<10x16x64xf32> to vector<10x16x64xbf16>
    %cst_34 = arith.constant 0.000000e+00 : bf16
    %122 = vector.broadcast %cst_34 : bf16 to vector<10x1x64xbf16>
    %123 = tpu.concatenate %122, %121, %122 in 1 : vector<10x1x64xbf16>, vector<10x16x64xbf16>, vector<10x1x64xbf16> -> vector<10x18x64xbf16>
    %124 = vector.extract_strided_slice %123 {offsets = [0, 0, 0], sizes = [10, 16, 64], strides = [1, 1, 1]} : vector<10x18x64xbf16> to vector<10x16x64xbf16>
    %125 = vector.extract_strided_slice %123 {offsets = [0, 1, 0], sizes = [10, 16, 64], strides = [1, 1, 1]} : vector<10x18x64xbf16> to vector<10x16x64xbf16>
    %126 = vector.extract_strided_slice %123 {offsets = [0, 2, 0], sizes = [10, 16, 64], strides = [1, 1, 1]} : vector<10x18x64xbf16> to vector<10x16x64xbf16>
    %127 = tpu.concatenate %124, %125, %126 in 2 : vector<10x16x64xbf16>, vector<10x16x64xbf16>, vector<10x16x64xbf16> -> vector<10x16x192xbf16>
    %128 = vector.shape_cast %127 : vector<10x16x192xbf16> to vector<160x192xbf16>
    %c0_35 = arith.constant 0 : index
    %c0_36 = arith.constant 0 : index
    %129 = vector.load %arg13[%c0_35, %c0_36] : memref<192x192xbf16, #tpu.memory_space<vmem>>, vector<192x192xbf16>
    %cst_37 = arith.constant dense<0.000000e+00> : vector<160x192xf32>
    %130 = tpu.matmul %128, %129, %cst_37 {dimension_numbers = #tpu.dot_dimension_numbers<[1], [0], [0], [1], [0, 0, 1, 1], [], []>} : vector<160x192xbf16>, vector<192x192xbf16>, vector<160x192xf32> -> vector<160x192xf32>
    %131 = vector.shape_cast %130 : vector<160x192xf32> to vector<10x16x192xf32>
    %132 = arith.addf %120, %131 : vector<10x16x192xf32>
    %133 = vector.extract_strided_slice %132 {offsets = [0, 0, 0], sizes = [8, 16, 64], strides = [1, 1, 1]} : vector<10x16x192xf32> to vector<8x16x64xf32>
    %134 = vector.extract_strided_slice %132 {offsets = [1, 0, 64], sizes = [8, 16, 64], strides = [1, 1, 1]} : vector<10x16x192xf32> to vector<8x16x64xf32>
    %135 = arith.addf %133, %134 : vector<8x16x64xf32>
    %136 = vector.extract_strided_slice %132 {offsets = [2, 0, 128], sizes = [8, 16, 64], strides = [1, 1, 1]} : vector<10x16x192xf32> to vector<8x16x64xf32>
    %137 = arith.addf %135, %136 : vector<8x16x64xf32>
    %c0_38 = arith.constant 0 : index
    %c0_39 = arith.constant 0 : index
    %138 = vector.load %arg14[%c0_38, %c0_39] : memref<1x64xf32, #tpu.memory_space<vmem>>, vector<1x64xf32>
    %139 = vector.shape_cast %138 : vector<1x64xf32> to vector<1x1x64xf32>
    %140 = vector.broadcast %139 : vector<1x1x64xf32> to vector<8x16x64xf32>
    %141 = arith.addf %137, %140 : vector<8x16x64xf32>
    %c0_40 = arith.constant 0 : index
    %c0_41 = arith.constant 0 : index
    %142 = vector.load %arg15[%c0_40, %c0_41] : memref<1x2xf32, #tpu.memory_space<vmem>>, vector<1x2xf32>
    %143 = vector.extract_strided_slice %3 {offsets = [5, 0, 0], sizes = [8, 16, 64], strides = [1, 1, 1]} : vector<18x16x64xf32> to vector<8x16x64xf32>
    %144 = vector.extract_strided_slice %142 {offsets = [0, 0], sizes = [1, 1], strides = [1, 1]} : vector<1x2xf32> to vector<1x1xf32>
    %145 = vector.shape_cast %144 : vector<1x1xf32> to vector<1x1x1xf32>
    %146 = vector.broadcast %145 : vector<1x1x1xf32> to vector<8x16x64xf32>
    %147 = arith.mulf %143, %146 : vector<8x16x64xf32>
    %148 = vector.extract_strided_slice %142 {offsets = [0, 1], sizes = [1, 1], strides = [1, 1]} : vector<1x2xf32> to vector<1x1xf32>
    %149 = vector.shape_cast %148 : vector<1x1xf32> to vector<1x1x1xf32>
    %150 = vector.broadcast %149 : vector<1x1x1xf32> to vector<8x16x64xf32>
    %151 = arith.mulf %141, %150 : vector<8x16x64xf32>
    %152 = arith.addf %147, %151 : vector<8x16x64xf32>
    %c0_42 = arith.constant 0 : index
    %c0_43 = arith.constant 0 : index
    %c0_44 = arith.constant 0 : index
    %c0_45 = arith.constant 0 : index
    %153 = vector.load %arg16[%c0_42, %c0_43, %c0_44, %c0_45] : memref<1x8x16x64xf32, #tpu.memory_space<vmem>>, vector<1x8x16x64xf32>
    %154 = vector.shape_cast %153 : vector<1x8x16x64xf32> to vector<8x16x64xf32>
    %155 = vector.shape_cast %152 : vector<8x16x64xf32> to vector<1x8x16x64xf32>
    tpu.vector_store %arg16[%c0_42, %c0_43, %c0_44, %c0_45], %155 {strides = array<i32>} : memref<1x8x16x64xf32, #tpu.memory_space<vmem>>, vector<1x8x16x64xf32>,
    return
  }
  func.func @transform_0(%arg0: i32, %arg1: i32) -> (i32, i32, i32, i32) {
    %c0_i32 = arith.constant 0 : i32
    %c0_i32_0 = arith.constant 0 : i32
    %c0_i32_1 = arith.constant 0 : i32
    %c0_i32_2 = arith.constant 0 : i32
    return %arg0, %c0_i32, %c0_i32_0, %c0_i32_1 : i32, i32, i32, i32
  }
  func.func @transform_1(%arg0: i32, %arg1: i32) -> (i32, i32) {
    %c0_i32 = arith.constant 0 : i32
    %c0_i32_0 = arith.constant 0 : i32
    %c0_i32_1 = arith.constant 0 : i32
    return %c0_i32, %c0_i32_0 : i32, i32
  }
  func.func @transform_2(%arg0: i32, %arg1: i32) -> (i32, i32) {
    %c0_i32 = arith.constant 0 : i32
    %c0_i32_0 = arith.constant 0 : i32
    %c0_i32_1 = arith.constant 0 : i32
    return %c0_i32, %c0_i32_0 : i32, i32
  }
  func.func @transform_3(%arg0: i32, %arg1: i32) -> (i32, i32) {
    %c0_i32 = arith.constant 0 : i32
    %c0_i32_0 = arith.constant 0 : i32
    %c0_i32_1 = arith.constant 0 : i32
    return %c0_i32, %c0_i32_0 : i32, i32
  }
  func.func @transform_4(%arg0: i32, %arg1: i32) -> (i32, i32) {
    %c0_i32 = arith.constant 0 : i32
    %c0_i32_0 = arith.constant 0 : i32
    %c0_i32_1 = arith.constant 0 : i32
    return %c0_i32, %c0_i32_0 : i32, i32
  }
  func.func @transform_5(%arg0: i32, %arg1: i32) -> (i32, i32) {
    %c0_i32 = arith.constant 0 : i32
    %c0_i32_0 = arith.constant 0 : i32
    %c0_i32_1 = arith.constant 0 : i32
    return %c0_i32, %c0_i32_0 : i32, i32
  }
  func.func @transform_6(%arg0: i32, %arg1: i32) -> (i32, i32) {
    %c0_i32 = arith.constant 0 : i32
    %c0_i32_0 = arith.constant 0 : i32
    %c0_i32_1 = arith.constant 0 : i32
    return %c0_i32, %c0_i32_0 : i32, i32
  }
  func.func @transform_7(%arg0: i32, %arg1: i32) -> (i32, i32) {
    %c0_i32 = arith.constant 0 : i32
    %c0_i32_0 = arith.constant 0 : i32
    %c0_i32_1 = arith.constant 0 : i32
    return %c0_i32, %c0_i32_0 : i32, i32
  }
  func.func @transform_8(%arg0: i32, %arg1: i32) -> (i32, i32) {
    %c0_i32 = arith.constant 0 : i32
    %c0_i32_0 = arith.constant 0 : i32
    %c0_i32_1 = arith.constant 0 : i32
    return %c0_i32, %c0_i32_0 : i32, i32
  }
  func.func @transform_9(%arg0: i32, %arg1: i32) -> (i32, i32) {
    %c0_i32 = arith.constant 0 : i32
    %c0_i32_0 = arith.constant 0 : i32
    %c0_i32_1 = arith.constant 0 : i32
    return %c0_i32, %c0_i32_0 : i32, i32
  }
  func.func @transform_10(%arg0: i32, %arg1: i32) -> (i32, i32) {
    %c0_i32 = arith.constant 0 : i32
    %c0_i32_0 = arith.constant 0 : i32
    %c0_i32_1 = arith.constant 0 : i32
    return %c0_i32, %c0_i32_0 : i32, i32
  }
  func.func @transform_11(%arg0: i32, %arg1: i32) -> (i32, i32) {
    %c0_i32 = arith.constant 0 : i32
    %c0_i32_0 = arith.constant 0 : i32
    %c0_i32_1 = arith.constant 0 : i32
    return %c0_i32, %c0_i32_0 : i32, i32
  }
  func.func @transform_12(%arg0: i32, %arg1: i32) -> (i32, i32) {
    %c0_i32 = arith.constant 0 : i32
    %c0_i32_0 = arith.constant 0 : i32
    %c0_i32_1 = arith.constant 0 : i32
    return %c0_i32, %c0_i32_0 : i32, i32
  }
  func.func @transform_13(%arg0: i32, %arg1: i32) -> (i32, i32) {
    %c0_i32 = arith.constant 0 : i32
    %c0_i32_0 = arith.constant 0 : i32
    %c0_i32_1 = arith.constant 0 : i32
    return %c0_i32, %c0_i32_0 : i32, i32
  }
  func.func @transform_14(%arg0: i32, %arg1: i32) -> (i32, i32, i32, i32) {
    %c0_i32 = arith.constant 0 : i32
    %c0_i32_0 = arith.constant 0 : i32
    %c0_i32_1 = arith.constant 0 : i32
    return %arg0, %arg1, %c0_i32, %c0_i32_0 : i32, i32, i32, i32
  }
}

</mosaic_0001>

<llo_original>
// kernel: tpu_custom_call.1
$region0: #{tpu_custom_call.1}
  #allocation0 [shape = 'u32[]', space=smem, size = 0x4, offset = 0x4, fixed_abs, tag = 'smem constant byte address 0x4 - core index']
  #allocation1 [shape = 'u32[144,128]{1,0:T(1,128)}', space=vmem, size = 0x12000, scoped, tag = 'internal scratch']
  %s0 = inlined_call_operand.hbm [shape: f32[2,26,16,64], index: 0, kind: input, shape index: {}]
  %s1 = inlined_call_operand.vmem [shape: f32[26,1], index: 1, kind: input, shape index: {}]
  %s2 = inlined_call_operand.hbm [shape: bf16[192,192], index: 2, kind: input, shape index: {}]
  %s3 = inlined_call_operand.vmem [shape: f32[1,64], index: 3, kind: input, shape index: {}]
  %s4 = inlined_call_operand.hbm [shape: bf16[192,192], index: 4, kind: input, shape index: {}]
  %s5 = inlined_call_operand.vmem [shape: f32[1,64], index: 5, kind: input, shape index: {}]
  %s6 = inlined_call_operand.hbm [shape: bf16[192,192], index: 6, kind: input, shape index: {}]
  %s7 = inlined_call_operand.vmem [shape: f32[1,64], index: 7, kind: input, shape index: {}]
  %s8 = inlined_call_operand.hbm [shape: bf16[192,192], index: 8, kind: input, shape index: {}]
  %s9 = inlined_call_operand.vmem [shape: f32[1,64], index: 9, kind: input, shape index: {}]
  %s10 = inlined_call_operand.hbm [shape: bf16[192,192], index: 10, kind: input, shape index: {}]
  %s11 = inlined_call_operand.hbm [shape: bf16[192,192], index: 11, kind: input, shape index: {}]
  %s12 = inlined_call_operand.vmem [shape: f32[1,64], index: 12, kind: input, shape index: {}]
  %s13 = inlined_call_operand.vmem [shape: f32[1,2], index: 13, kind: input, shape index: {}]
  %s14 = inlined_call_operand.hbm [shape: f32[2,16,16,64], index: 14, kind: output, shape index: {}]
  %s15 = sld [smem:[#allocation0]]
  $region117: #{tpu_custom_call.1} parent=0
    _
  %s17 = ssub.s32 1, %s15
  %s18 = scalar_select 0, %s17, %s15
  $region1: #{tpu_custom_call.1} parent=0
    #allocation2 [shape = 'u8[425984]{0}', space=vmem, size = 0x68000, scoped, tag = 'input window, operand 0']
    #allocation3 [shape = 's32[2]{0}', space=sflag, size = 0x8, scoped, tag = 'scoped memory for tpu_custom_call.1']
    #allocation4 [shape = 's32[2]{0}', space=sflag, size = 0x8, scoped, tag = 'scoped memory for tpu_custom_call.1']
    #allocation5 [shape = 'u8[98304]{0}', space=vmem, size = 0x18000, scoped, tag = 'input window, operand 2, single buffered']
    #allocation6 [shape = 's32[1]{0}', space=sflag, size = 0x4, scoped, tag = 'scoped memory for tpu_custom_call.1']
    #allocation7 [shape = 'u8[98304]{0}', space=vmem, size = 0x18000, scoped, tag = 'input window, operand 4, single buffered']
    #allocation8 [shape = 'u8[98304]{0}', space=vmem, size = 0x18000, scoped, tag = 'input window, operand 6, single buffered']
    #allocation9 [shape = 's32[1]{0}', space=sflag, size = 0x4, scoped, tag = 'scoped memory for tpu_custom_call.1']
    #allocation10 [shape = 'u8[98304]{0}', space=vmem, size = 0x18000, scoped, tag = 'input window, operand 8, single buffered']
    #allocation11 [shape = 'u8[98304]{0}', space=vmem, size = 0x18000, scoped, tag = 'input window, operand 10, single buffered']
    #allocation12 [shape = 's32[1]{0}', space=sflag, size = 0x4, scoped, tag = 'scoped memory for tpu_custom_call.1']
    #allocation13 [shape = 'u8[98304]{0}', space=vmem, size = 0x18000, scoped, tag = 'input window, operand 11, single buffered']
    #allocation14 [shape = 'u8[131072]{0}', space=vmem, size = 0x20000, scoped, tag = 'output window, operand 0']
    %19 = vsyncpa [#allocation3], 0
    %s20 = scalar_lea.sflag [#allocation3], 1
    %21 = vsyncpa %s20, 0
    %22 = vsyncpa [#allocation6], 0
    %23 = vsyncpa [#allocation9], 0
    %24 = vsyncpa [#allocation12], 0
    %25 = vsyncpa [#allocation4], 0
    %s26 = scalar_lea.sflag [#allocation4], 1
    %27 = vsyncpa %s26, 0
    loop: start=0, step=1, limit=6
    $region2: #{tpu_custom_call.1} parent=1 // loop_pre_header
      _
    $region3: #{tpu_custom_call.1} parent=1 // loop_header
      %s29 = sphi 0, %s33
      %p30 = scmp.ge.s32.totalorder %s29, 6
      %s36 = sphi 0, %s48
      %s37 = sphi 0, %s44
      %s38 = sphi 0, %s36
      %s39 = sphi 0, %s37
      %s40 = sphi 0, %s38
      %s41 = sphi 0, %s39
      %s51 = sphi 0, %s53
      %s54 = sphi 0, %s51
      %s55 = sphi 0, %s54
      %s71 = sphi 0, %s55
      %s75 = sphi 0, %s75
      %s77 = sphi 0, %s75
      %s78 = sphi 0, %s77
      %s92 = sphi 0, %s78
      %s96 = sphi 0, %s96
      %s98 = sphi 0, %s96
      %s99 = sphi 0, %s98
      %s113 = sphi 0, %s99
      %s117 = sphi 0, %s117
      %s119 = sphi 0, %s117
      %s120 = sphi 0, %s119
      %s134 = sphi 0, %s120
      %s138 = sphi 0, %s138
      %s140 = sphi 0, %s138
      %s141 = sphi 0, %s140
      %s155 = sphi 0, %s141
      %s159 = sphi 0, %s159
      %s161 = sphi 0, %s159
      %s162 = sphi 0, %s161
      %s176 = sphi 0, %s162
      %s180 = sphi 0, %s180
      %s182 = sphi 0, %s180
      %s183 = sphi 0, %s182
      %s197 = sphi 0, %s183
      %s201 = sphi 0, %s201
      %s203 = sphi 0, %s201
      %s204 = sphi 0, %s203
      %s218 = sphi 0, %s204
      %s222 = sphi 0, %s222
      %s224 = sphi 0, %s222
      %s225 = sphi 0, %s224
      %s239 = sphi 0, %s225
      %s243 = sphi 0, %s243
      %s245 = sphi 0, %s243
      %s246 = sphi 0, %s245
      %s260 = sphi 0, %s246
      %s264 = sphi 0, %s264
      %s266 = sphi 0, %s264
      %s267 = sphi 0, %s266
      %s281 = sphi 0, %s267
      %s285 = sphi 0, %s285
      %s287 = sphi 0, %s285
      %s288 = sphi 0, %s287
      %s302 = sphi 0, %s288
      %s306 = sphi 0, %s306
      %s308 = sphi 0, %s306
      %s309 = sphi 0, %s308
      %s323 = sphi 0, %s309
      %s327 = sphi 0, %s327
      %s329 = sphi 0, %s327
      %s330 = sphi 0, %s329
      %s344 = sphi 0, %s330
      %s352 = sphi 0, %s354
      %s355 = sphi 0, %s352
      %s356 = sphi 0, %s355
      %s372 = sphi 0, %s356
    $region4: #{tpu_custom_call.1} parent=1 // loop_header_branch
      %32 = sbr.rel (%p30) target = $region8
    $region5: #{tpu_custom_call.1} parent=1 // loop_body
      %s34 = ssub.s32 %s29, 1
      %s35 = ssub.s32 %s29, 2
      %s42 = sadd.s32 1, %s37
      %p43 = scmp.ge.s32.totalorder %s42, 2
      %s44 = scalar_select %p43, 0, %s42
      %s45 = sadd.s32 1, %s36
      %s46 = scalar_select %p43, %s45, %s36
      %p47 = scmp.ge.s32.totalorder %s46, 2
      %s48 = scalar_select %p47, 0, %s46
      %s49 = ssub.s32 %s36, %s48
      %p50 = scmp.eq.s32.totalorder %s49, 0
      %s52 = sadd.s32 %s51, 1
      %s53 = scalar_select %p50, %s51, %s52
      %p56 = pneg %p50
      %p57 = scmp.eq.s32.totalorder %s29, 3
      %p58 = por %p56, %p57
      %p59 = scmp.ne.s32.totalorder %s51, %s54
      %p60 = scmp.eq.s32.totalorder %s29, 0
      %p61 = por %p59, %p60
      %p62 = scmp.ne.s32.totalorder %s51, %s54
      %p63 = scmp.eq.s32.totalorder %s34, 3
      %p64 = por %p62, %p63
      %p65 = scmp.ne.s32.totalorder %s54, %s55
      %p66 = scmp.eq.s32.totalorder %s34, 0
      %p67 = por %p65, %p66
      %p68 = scmp.ne.s32.totalorder %s54, %s55
      %p69 = scmp.eq.s32.totalorder %s35, 3
      %p70 = por %p68, %p69
      %p72 = scmp.ne.s32.totalorder %s55, %s71
      %p73 = scmp.eq.s32.totalorder %s35, 0
      %p74 = por %p72, %p73
      %s76 = sadd.s32 %s75, 1
      %p79 = scmp.eq.s32.totalorder %s29, 3
      %p80 = scmp.ne.s32.totalorder %s75, %s77
      %p81 = scmp.eq.s32.totalorder %s29, 0
      %p82 = por %p80, %p81
      %p83 = scmp.ne.s32.totalorder %s75, %s77
      %p84 = scmp.eq.s32.totalorder %s34, 3
      %p85 = por %p83, %p84
      %p86 = scmp.ne.s32.totalorder %s77, %s78
      %p87 = scmp.eq.s32.totalorder %s34, 0
      %p88 = por %p86, %p87
      %p89 = scmp.ne.s32.totalorder %s77, %s78
      %p90 = scmp.eq.s32.totalorder %s35, 3
      %p91 = por %p89, %p90
      %p93 = scmp.ne.s32.totalorder %s78, %s92
      %p94 = scmp.eq.s32.totalorder %s35, 0
      %p95 = por %p93, %p94
      %s97 = sadd.s32 %s96, 1
      %p100 = scmp.eq.s32.totalorder %s29, 3
      %p101 = scmp.ne.s32.totalorder %s96, %s98
      %p102 = scmp.eq.s32.totalorder %s29, 0
      %p103 = por %p101, %p102
      %p104 = scmp.ne.s32.totalorder %s96, %s98
      %p105 = scmp.eq.s32.totalorder %s34, 3
      %p106 = por %p104, %p105
      %p107 = scmp.ne.s32.totalorder %s98, %s99
      %p108 = scmp.eq.s32.totalorder %s34, 0
      %p109 = por %p107, %p108
      %p110 = scmp.ne.s32.totalorder %s98, %s99
      %p111 = scmp.eq.s32.totalorder %s35, 3
      %p112 = por %p110, %p111
      %p114 = scmp.ne.s32.totalorder %s99, %s113
      %p115 = scmp.eq.s32.totalorder %s35, 0
      %p116 = por %p114, %p115
      %s118 = sadd.s32 %s117, 1
      %p121 = scmp.eq.s32.totalorder %s29, 3
      %p122 = scmp.ne.s32.totalorder %s117, %s119
      %p123 = scmp.eq.s32.totalorder %s29, 0
      %p124 = por %p122, %p123
      %p125 = scmp.ne.s32.totalorder %s117, %s119
      %p126 = scmp.eq.s32.totalorder %s34, 3
      %p127 = por %p125, %p126
      %p128 = scmp.ne.s32.totalorder %s119, %s120
      %p129 = scmp.eq.s32.totalorder %s34, 0
      %p130 = por %p128, %p129
      %p131 = scmp.ne.s32.totalorder %s119, %s120
      %p132 = scmp.eq.s32.totalorder %s35, 3
      %p133 = por %p131, %p132
      %p135 = scmp.ne.s32.totalorder %s120, %s134
      %p136 = scmp.eq.s32.totalorder %s35, 0
      %p137 = por %p135, %p136
      %s139 = sadd.s32 %s138, 1
      %p142 = scmp.eq.s32.totalorder %s29, 3
      %p143 = scmp.ne.s32.totalorder %s138, %s140
      %p144 = scmp.eq.s32.totalorder %s29, 0
      %p145 = por %p143, %p144
      %p146 = scmp.ne.s32.totalorder %s138, %s140
      %p147 = scmp.eq.s32.totalorder %s34, 3
      %p148 = por %p146, %p147
      %p149 = scmp.ne.s32.totalorder %s140, %s141
      %p150 = scmp.eq.s32.totalorder %s34, 0
      %p151 = por %p149, %p150
      %p152 = scmp.ne.s32.totalorder %s140, %s141
      %p153 = scmp.eq.s32.totalorder %s35, 3
      %p154 = por %p152, %p153
      %p156 = scmp.ne.s32.totalorder %s141, %s155
      %p157 = scmp.eq.s32.totalorder %s35, 0
      %p158 = por %p156, %p157
      %s160 = sadd.s32 %s159, 1
      %p163 = scmp.eq.s32.totalorder %s29, 3
      %p164 = scmp.ne.s32.totalorder %s159, %s161
      %p165 = scmp.eq.s32.totalorder %s29, 0
      %p166 = por %p164, %p165
      %p167 = scmp.ne.s32.totalorder %s159, %s161
      %p168 = scmp.eq.s32.totalorder %s34, 3
      %p169 = por %p167, %p168
      %p170 = scmp.ne.s32.totalorder %s161, %s162
      %p171 = scmp.eq.s32.totalorder %s34, 0
      %p172 = por %p170, %p171
      %p173 = scmp.ne.s32.totalorder %s161, %s162
      %p174 = scmp.eq.s32.totalorder %s35, 3
      %p175 = por %p173, %p174
      %p177 = scmp.ne.s32.totalorder %s162, %s176
      %p178 = scmp.eq.s32.totalorder %s35, 0
      %p179 = por %p177, %p178
      %s181 = sadd.s32 %s180, 1
      %p184 = scmp.eq.s32.totalorder %s29, 3
      %p185 = scmp.ne.s32.totalorder %s180, %s182
      %p186 = scmp.eq.s32.totalorder %s29, 0
      %p187 = por %p185, %p186
      %p188 = scmp.ne.s32.totalorder %s180, %s182
      %p189 = scmp.eq.s32.totalorder %s34, 3
      %p190 = por %p188, %p189
      %p191 = scmp.ne.s32.totalorder %s182, %s183
      %p192 = scmp.eq.s32.totalorder %s34, 0
      %p193 = por %p191, %p192
      %p194 = scmp.ne.s32.totalorder %s182, %s183
      %p195 = scmp.eq.s32.totalorder %s35, 3
      %p196 = por %p194, %p195
      %p198 = scmp.ne.s32.totalorder %s183, %s197
      %p199 = scmp.eq.s32.totalorder %s35, 0
      %p200 = por %p198, %p199
      %s202 = sadd.s32 %s201, 1
      %p205 = scmp.eq.s32.totalorder %s29, 3
      %p206 = scmp.ne.s32.totalorder %s201, %s203
      %p207 = scmp.eq.s32.totalorder %s29, 0
      %p208 = por %p206, %p207
      %p209 = scmp.ne.s32.totalorder %s201, %s203
      %p210 = scmp.eq.s32.totalorder %s34, 3
      %p211 = por %p209, %p210
      %p212 = scmp.ne.s32.totalorder %s203, %s204
      %p213 = scmp.eq.s32.totalorder %s34, 0
      %p214 = por %p212, %p213
      %p215 = scmp.ne.s32.totalorder %s203, %s204
      %p216 = scmp.eq.s32.totalorder %s35, 3
      %p217 = por %p215, %p216
      %p219 = scmp.ne.s32.totalorder %s204, %s218
      %p220 = scmp.eq.s32.totalorder %s35, 0
      %p221 = por %p219, %p220
      %s223 = sadd.s32 %s222, 1
      %p226 = scmp.eq.s32.totalorder %s29, 3
      %p227 = scmp.ne.s32.totalorder %s222, %s224
      %p228 = scmp.eq.s32.totalorder %s29, 0
      %p229 = por %p227, %p228
      %p230 = scmp.ne.s32.totalorder %s222, %s224
      %p231 = scmp.eq.s32.totalorder %s34, 3
      %p232 = por %p230, %p231
      %p233 = scmp.ne.s32.totalorder %s224, %s225
      %p234 = scmp.eq.s32.totalorder %s34, 0
      %p235 = por %p233, %p234
      %p236 = scmp.ne.s32.totalorder %s224, %s225
      %p237 = scmp.eq.s32.totalorder %s35, 3
      %p238 = por %p236, %p237
      %p240 = scmp.ne.s32.totalorder %s225, %s239
      %p241 = scmp.eq.s32.totalorder %s35, 0
      %p242 = por %p240, %p241
      %s244 = sadd.s32 %s243, 1
      %p247 = scmp.eq.s32.totalorder %s29, 3
      %p248 = scmp.ne.s32.totalorder %s243, %s245
      %p249 = scmp.eq.s32.totalorder %s29, 0
      %p250 = por %p248, %p249
      %p251 = scmp.ne.s32.totalorder %s243, %s245
      %p252 = scmp.eq.s32.totalorder %s34, 3
      %p253 = por %p251, %p252
      %p254 = scmp.ne.s32.totalorder %s245, %s246
      %p255 = scmp.eq.s32.totalorder %s34, 0
      %p256 = por %p254, %p255
      %p257 = scmp.ne.s32.totalorder %s245, %s246
      %p258 = scmp.eq.s32.totalorder %s35, 3
      %p259 = por %p257, %p258
      %p261 = scmp.ne.s32.totalorder %s246, %s260
      %p262 = scmp.eq.s32.totalorder %s35, 0
      %p263 = por %p261, %p262
      %s265 = sadd.s32 %s264, 1
      %p268 = scmp.eq.s32.totalorder %s29, 3
      %p269 = scmp.ne.s32.totalorder %s264, %s266
      %p270 = scmp.eq.s32.totalorder %s29, 0
      %p271 = por %p269, %p270
      %p272 = scmp.ne.s32.totalorder %s264, %s266
      %p273 = scmp.eq.s32.totalorder %s34, 3
      %p274 = por %p272, %p273
      %p275 = scmp.ne.s32.totalorder %s266, %s267
      %p276 = scmp.eq.s32.totalorder %s34, 0
      %p277 = por %p275, %p276
      %p278 = scmp.ne.s32.totalorder %s266, %s267
      %p279 = scmp.eq.s32.totalorder %s35, 3
      %p280 = por %p278, %p279
      %p282 = scmp.ne.s32.totalorder %s267, %s281
      %p283 = scmp.eq.s32.totalorder %s35, 0
      %p284 = por %p282, %p283
      %s286 = sadd.s32 %s285, 1
      %p289 = scmp.eq.s32.totalorder %s29, 3
      %p290 = scmp.ne.s32.totalorder %s285, %s287
      %p291 = scmp.eq.s32.totalorder %s29, 0
      %p292 = por %p290, %p291
      %p293 = scmp.ne.s32.totalorder %s285, %s287
      %p294 = scmp.eq.s32.totalorder %s34, 3
      %p295 = por %p293, %p294
      %p296 = scmp.ne.s32.totalorder %s287, %s288
      %p297 = scmp.eq.s32.totalorder %s34, 0
      %p298 = por %p296, %p297
      %p299 = scmp.ne.s32.totalorder %s287, %s288
      %p300 = scmp.eq.s32.totalorder %s35, 3
      %p301 = por %p299, %p300
      %p303 = scmp.ne.s32.totalorder %s288, %s302
      %p304 = scmp.eq.s32.totalorder %s35, 0
      %p305 = por %p303, %p304
      %s307 = sadd.s32 %s306, 1
      %p310 = scmp.eq.s32.totalorder %s29, 3
      %p311 = scmp.ne.s32.totalorder %s306, %s308
      %p312 = scmp.eq.s32.totalorder %s29, 0
      %p313 = por %p311, %p312
      %p314 = scmp.ne.s32.totalorder %s306, %s308
      %p315 = scmp.eq.s32.totalorder %s34, 3
      %p316 = por %p314, %p315
      %p317 = scmp.ne.s32.totalorder %s308, %s309
      %p318 = scmp.eq.s32.totalorder %s34, 0
      %p319 = por %p317, %p318
      %p320 = scmp.ne.s32.totalorder %s308, %s309
      %p321 = scmp.eq.s32.totalorder %s35, 3
      %p322 = por %p320, %p321
      %p324 = scmp.ne.s32.totalorder %s309, %s323
      %p325 = scmp.eq.s32.totalorder %s35, 0
      %p326 = por %p324, %p325
      %s328 = sadd.s32 %s327, 1
      %p331 = scmp.eq.s32.totalorder %s29, 3
      %p332 = scmp.ne.s32.totalorder %s327, %s329
      %p333 = scmp.eq.s32.totalorder %s29, 0
      %p334 = por %p332, %p333
      %p335 = scmp.ne.s32.totalorder %s327, %s329
      %p336 = scmp.eq.s32.totalorder %s34, 3
      %p337 = por %p335, %p336
      %p338 = scmp.ne.s32.totalorder %s329, %s330
      %p339 = scmp.eq.s32.totalorder %s34, 0
      %p340 = por %p338, %p339
      %p341 = scmp.ne.s32.totalorder %s329, %s330
      %p342 = scmp.eq.s32.totalorder %s35, 3
      %p343 = por %p341, %p342
      %p345 = scmp.ne.s32.totalorder %s330, %s344
      %p346 = scmp.eq.s32.totalorder %s35, 0
      %p347 = por %p345, %p346
      %s348 = ssub.s32 %s36, %s48
      %s349 = ssub.s32 %s37, %s44
      %s350 = sor.u32 %s348, %s349
      %p351 = scmp.eq.s32.totalorder %s350, 0
      %s353 = sadd.s32 %s352, 1
      %s354 = scalar_select %p351, %s352, %s353
      %p357 = pneg %p351
      %p358 = scmp.eq.s32.totalorder %s29, 3
      %p359 = por %p357, %p358
      %p360 = scmp.ne.s32.totalorder %s352, %s355
      %p361 = scmp.eq.s32.totalorder %s29, 0
      %p362 = por %p360, %p361
      %p363 = scmp.ne.s32.totalorder %s352, %s355
      %p364 = scmp.eq.s32.totalorder %s34, 3
      %p365 = por %p363, %p364
      %p366 = scmp.ne.s32.totalorder %s355, %s356
      %p367 = scmp.eq.s32.totalorder %s34, 0
      %p368 = por %p366, %p367
      %p369 = scmp.ne.s32.totalorder %s355, %s356
      %p370 = scmp.eq.s32.totalorder %s35, 3
      %p371 = por %p369, %p370
      %p373 = scmp.ne.s32.totalorder %s356, %s372
      %p374 = scmp.eq.s32.totalorder %s35, 0
      %p375 = por %p373, %p374
      %p376 = scmp.le.s32.totalorder 1, %s29
      %p377 = scmp.lt.s32.totalorder %s29, 5
      %p378 = pnand %p376, %p377
      %p379 = pneg %p378
      // Predicated region
      $region9: #{tpu_custom_call.1} parent=5 // pred_check
        _
      $region10: #{tpu_custom_call.1} parent=5 // pred_check_branch
        %381 = sbr.rel (%p378) target = $region12
      $region11: #{tpu_custom_call.1} parent=5 // pred_region
        %s382 = ssub.s32 %s29, 1
        // Predicated region
        $region13: #{tpu_custom_call.1} parent=11 // pred_check
          %p383 = pneg %p88
        $region14: #{tpu_custom_call.1} parent=11 // pred_check_branch
          %385 = sbr.rel (%p383) target = $region16
        $region15: #{tpu_custom_call.1} parent=11 // pred_region
          _
        $region16: #{tpu_custom_call.1} parent=11 // pred_fallthru
          _
        // Predicated region
        $region17: #{tpu_custom_call.1} parent=11 // pred_check
          %p386 = pneg %p109
        $region18: #{tpu_custom_call.1} parent=11 // pred_check_branch
          %388 = sbr.rel (%p386) target = $region20
        $region19: #{tpu_custom_call.1} parent=11 // pred_region
          %s390 = ssub.s32 3072, 3072
          %391 = vsyncadd [#allocation6], %s390
          %s392 = sshll.u32 [#allocation5], 4
          %s393 = int_to_ptr.vmem [resolvable:$true] %s392
          %398 = dma.hbm_to_vmem [thread:$0]  %s2, 3072, %s393, [#allocation6], 128, 128, 8
        $region20: #{tpu_custom_call.1} parent=11 // pred_fallthru
          _
        // Predicated region
        $region21: #{tpu_custom_call.1} parent=11 // pred_check
          %p399 = pneg %p130
        $region22: #{tpu_custom_call.1} parent=11 // pred_check_branch
          %401 = sbr.rel (%p399) target = $region24
        $region23: #{tpu_custom_call.1} parent=11 // pred_region
          _
        $region24: #{tpu_custom_call.1} parent=11 // pred_fallthru
          _
        // Predicated region
        $region25: #{tpu_custom_call.1} parent=11 // pred_check
          %p402 = pneg %p151
        $region26: #{tpu_custom_call.1} parent=11 // pred_check_branch
          %404 = sbr.rel (%p402) target = $region28
        $region27: #{tpu_custom_call.1} parent=11 // pred_region
          %s406 = ssub.s32 3072, 3072
          %407 = vsyncadd [#allocation6], %s406
          %s408 = sshll.u32 [#allocation7], 4
          %s409 = int_to_ptr.vmem [resolvable:$true] %s408
          %414 = dma.hbm_to_vmem [thread:$0]  %s4, 3072, %s409, [#allocation6], 128, 128, 8
        $region28: #{tpu_custom_call.1} parent=11 // pred_fallthru
          _
        // Predicated region
        $region29: #{tpu_custom_call.1} parent=11 // pred_check
          %p415 = pneg %p172
        $region30: #{tpu_custom_call.1} parent=11 // pred_check_branch
          %417 = sbr.rel (%p415) target = $region32
        $region31: #{tpu_custom_call.1} parent=11 // pred_region
          _
        $region32: #{tpu_custom_call.1} parent=11 // pred_fallthru
          _
        // Predicated region
        $region33: #{tpu_custom_call.1} parent=11 // pred_check
          %p418 = pneg %p193
        $region34: #{tpu_custom_call.1} parent=11 // pred_check_branch
          %420 = sbr.rel (%p418) target = $region36
        $region35: #{tpu_custom_call.1} parent=11 // pred_region
          %s422 = ssub.s32 3072, 3072
          %423 = vsyncadd [#allocation9], %s422
          %s424 = sshll.u32 [#allocation8], 4
          %s425 = int_to_ptr.vmem [resolvable:$true] %s424
          %430 = dma.hbm_to_vmem [thread:$0]  %s6, 3072, %s425, [#allocation9], 128, 128, 8
        $region36: #{tpu_custom_call.1} parent=11 // pred_fallthru
          _
        // Predicated region
        $region37: #{tpu_custom_call.1} parent=11 // pred_check
          %p431 = pneg %p214
        $region38: #{tpu_custom_call.1} parent=11 // pred_check_branch
          %433 = sbr.rel (%p431) target = $region40
        $region39: #{tpu_custom_call.1} parent=11 // pred_region
          _
        $region40: #{tpu_custom_call.1} parent=11 // pred_fallthru
          _
        // Predicated region
        $region41: #{tpu_custom_call.1} parent=11 // pred_check
          %p434 = pneg %p235
        $region42: #{tpu_custom_call.1} parent=11 // pred_check_branch
          %436 = sbr.rel (%p434) target = $region44
        $region43: #{tpu_custom_call.1} parent=11 // pred_region
          %s438 = ssub.s32 3072, 3072
          %439 = vsyncadd [#allocation9], %s438
          %s440 = sshll.u32 [#allocation10], 4
          %s441 = int_to_ptr.vmem [resolvable:$true] %s440
          %446 = dma.hbm_to_vmem [thread:$0]  %s8, 3072, %s441, [#allocation9], 128, 128, 8
        $region44: #{tpu_custom_call.1} parent=11 // pred_fallthru
          _
        // Predicated region
        $region45: #{tpu_custom_call.1} parent=11 // pred_check
          %p447 = pneg %p256
        $region46: #{tpu_custom_call.1} parent=11 // pred_check_branch
          %449 = sbr.rel (%p447) target = $region48
        $region47: #{tpu_custom_call.1} parent=11 // pred_region
          _
        $region48: #{tpu_custom_call.1} parent=11 // pred_fallthru
          _
        // Predicated region
        $region49: #{tpu_custom_call.1} parent=11 // pred_check
          %p450 = pneg %p277
        $region50: #{tpu_custom_call.1} parent=11 // pred_check_branch
          %452 = sbr.rel (%p450) target = $region52
        $region51: #{tpu_custom_call.1} parent=11 // pred_region
          %s454 = ssub.s32 3072, 3072
          %455 = vsyncadd [#allocation12], %s454
          %s456 = sshll.u32 [#allocation11], 4
          %s457 = int_to_ptr.vmem [resolvable:$true] %s456
          %462 = dma.hbm_to_vmem [thread:$0]  %s10, 3072, %s457, [#allocation12], 128, 128, 8
        $region52: #{tpu_custom_call.1} parent=11 // pred_fallthru
          _
        // Predicated region
        $region53: #{tpu_custom_call.1} parent=11 // pred_check
          %p463 = pneg %p298
        $region54: #{tpu_custom_call.1} parent=11 // pred_check_branch
          %465 = sbr.rel (%p463) target = $region56
        $region55: #{tpu_custom_call.1} parent=11 // pred_region
          %s467 = ssub.s32 3072, 3072
          %468 = vsyncadd [#allocation12], %s467
          %s469 = sshll.u32 [#allocation13], 4
          %s470 = int_to_ptr.vmem [resolvable:$true] %s469
          %475 = dma.hbm_to_vmem [thread:$0]  %s11, 3072, %s470, [#allocation12], 128, 128, 8
        $region56: #{tpu_custom_call.1} parent=11 // pred_fallthru
          _
        // Predicated region
        $region57: #{tpu_custom_call.1} parent=11 // pred_check
          %p476 = pneg %p319
        $region58: #{tpu_custom_call.1} parent=11 // pred_check_branch
          %478 = sbr.rel (%p476) target = $region60
        $region59: #{tpu_custom_call.1} parent=11 // pred_region
          _
        $region60: #{tpu_custom_call.1} parent=11 // pred_fallthru
          _
        // Predicated region
        $region61: #{tpu_custom_call.1} parent=11 // pred_check
          %p479 = pneg %p340
        $region62: #{tpu_custom_call.1} parent=11 // pred_check_branch
          %481 = sbr.rel (%p479) target = $region64
        $region63: #{tpu_custom_call.1} parent=11 // pred_region
          _
        $region64: #{tpu_custom_call.1} parent=11 // pred_fallthru
          _
      $region12: #{tpu_custom_call.1} parent=5 // pred_fallthru
        _
      %p482 = scmp.lt.s32.totalorder %s29, 4
      // Predicated region
      $region65: #{tpu_custom_call.1} parent=5 // pred_check
        %p483 = pneg %p482
      $region66: #{tpu_custom_call.1} parent=5 // pred_check_branch
        %485 = sbr.rel (%p483) target = $region68
      $region67: #{tpu_custom_call.1} parent=5 // pred_region
        // Predicated region
        $region69: #{tpu_custom_call.1} parent=67 // pred_check
          %p486 = pneg %p61
        $region70: #{tpu_custom_call.1} parent=67 // pred_check_branch
          %488 = sbr.rel (%p486) target = $region72
        $region71: #{tpu_custom_call.1} parent=67 // pred_region
          %s489 = sand.u32 %s51, 1
          %s490 = scalar_lea.sflag [#allocation3], %s489
          %s491 = sand.u32 %s51, 1
          %s492 = smul.addr %s491, 416
          %s493 = scalar_lea.vmem [#allocation2], %s492
          %s495 = ssub.s32 6656, 6656
          %496 = vsyncadd %s490, %s495
          %s497 = smul.addr %s36, 52
          %s498 = smul.addr %s497, 128
          %s499 = scalar_lea.hbm %s0, %s498
          %s500 = sshll.u32 %s493, 4
          %s501 = int_to_ptr.vmem [resolvable:$true] %s500
          %506 = dma.hbm_to_vmem [thread:$0]  %s499, 6656, %s501, %s490, 128, 128, 8
        $region72: #{tpu_custom_call.1} parent=67 // pred_fallthru
          _
      $region68: #{tpu_custom_call.1} parent=5 // pred_fallthru
        _
      %p507 = scmp.le.s32.totalorder 1, %s29
      %p508 = scmp.lt.s32.totalorder %s29, 5
      %p509 = pnand %p507, %p508
      %p510 = pneg %p509
      // Predicated region
      $region73: #{tpu_custom_call.1} parent=5 // pred_check
        _
      $region74: #{tpu_custom_call.1} parent=5 // pred_check_branch
        %512 = sbr.rel (%p509) target = $region76
      $region75: #{tpu_custom_call.1} parent=5 // pred_region
        %s513 = ssub.s32 %s29, 1
        %s514 = sand.u32 %s54, 1
        %s515 = scalar_lea.sflag [#allocation3], %s514
        %s516 = sand.u32 %s54, 1
        %s517 = smul.addr %s516, 416
        %s518 = scalar_lea.vmem [#allocation2], %s517
        // Predicated region
        $region77: #{tpu_custom_call.1} parent=75 // pred_check
          %p519 = pneg %p67
        $region78: #{tpu_custom_call.1} parent=75 // pred_check_branch
          %521 = sbr.rel (%p519) target = $region80
        $region79: #{tpu_custom_call.1} parent=75 // pred_region
          %522 = dma.done %s515, 6656
        $region80: #{tpu_custom_call.1} parent=75 // pred_fallthru
          _
        // Predicated region
        $region81: #{tpu_custom_call.1} parent=75 // pred_check
          %p523 = pneg %p109
        $region82: #{tpu_custom_call.1} parent=75 // pred_check_branch
          %525 = sbr.rel (%p523) target = $region84
        $region83: #{tpu_custom_call.1} parent=75 // pred_region
          %526 = dma.done [#allocation6], 3072
        $region84: #{tpu_custom_call.1} parent=75 // pred_fallthru
          _
        // Predicated region
        $region85: #{tpu_custom_call.1} parent=75 // pred_check
          %p527 = pneg %p151
        $region86: #{tpu_custom_call.1} parent=75 // pred_check_branch
          %529 = sbr.rel (%p527) target = $region88
        $region87: #{tpu_custom_call.1} parent=75 // pred_region
          %530 = dma.done [#allocation6], 3072
        $region88: #{tpu_custom_call.1} parent=75 // pred_fallthru
          _
        // Predicated region
        $region89: #{tpu_custom_call.1} parent=75 // pred_check
          %p531 = pneg %p193
        $region90: #{tpu_custom_call.1} parent=75 // pred_check_branch
          %533 = sbr.rel (%p531) target = $region92
        $region91: #{tpu_custom_call.1} parent=75 // pred_region
          %534 = dma.done [#allocation9], 3072
        $region92: #{tpu_custom_call.1} parent=75 // pred_fallthru
          _
        // Predicated region
        $region93: #{tpu_custom_call.1} parent=75 // pred_check
          %p535 = pneg %p235
        $region94: #{tpu_custom_call.1} parent=75 // pred_check_branch
          %537 = sbr.rel (%p535) target = $region96
        $region95: #{tpu_custom_call.1} parent=75 // pred_region
          %538 = dma.done [#allocation9], 3072
        $region96: #{tpu_custom_call.1} parent=75 // pred_fallthru
          _
        // Predicated region
        $region97: #{tpu_custom_call.1} parent=75 // pred_check
          %p539 = pneg %p277
        $region98: #{tpu_custom_call.1} parent=75 // pred_check_branch
          %541 = sbr.rel (%p539) target = $region100
        $region99: #{tpu_custom_call.1} parent=75 // pred_region
          %542 = dma.done [#allocation12], 3072
        $region100: #{tpu_custom_call.1} parent=75 // pred_fallthru
          _
        // Predicated region
        $region101: #{tpu_custom_call.1} parent=75 // pred_check
          %p543 = pneg %p298
        $region102: #{tpu_custom_call.1} parent=75 // pred_check_branch
          %545 = sbr.rel (%p543) target = $region104
        $region103: #{tpu_custom_call.1} parent=75 // pred_region
          %546 = dma.done [#allocation12], 3072
        $region104: #{tpu_custom_call.1} parent=75 // pred_fallthru
          _
        %s547 = sand.u32 %s54, 1
        %s548 = scalar_lea.sflag [#allocation3], %s547
        %s549 = sand.u32 %s54, 1
        %s550 = smul.addr %s549, 416
        %s551 = scalar_lea.vmem [#allocation2], %s550
        %p552 = pneg %p67
        %p553 = pneg %p64
        %p554 = pneg %p88
        %p555 = pneg %p85
        %p556 = pneg %p109
        %p557 = pneg %p106
        %p558 = pneg %p130
        %p559 = pneg %p127
        %p560 = pneg %p151
        %p561 = pneg %p148
        %p562 = pneg %p172
        %p563 = pneg %p169
        %p564 = pneg %p193
        %p565 = pneg %p190
        %p566 = pneg %p214
        %p567 = pneg %p211
        %p568 = pneg %p235
        %p569 = pneg %p232
        %p570 = pneg %p256
        %p571 = pneg %p253
        %p572 = pneg %p277
        %p573 = pneg %p274
        %p574 = pneg %p298
        %p575 = pneg %p295
        %p576 = pneg %p319
        %p577 = pneg %p316
        %p578 = pneg %p340
        %p579 = pneg %p337
        %p580 = pneg %p368
        %p581 = pneg %p365
        %s582 = sand.u32 %s355, 1
        %s583 = scalar_lea.sflag [#allocation4], %s582
        %s584 = sand.u32 %s355, 1
        %s585 = smul.addr %s584, 128
        %s586 = scalar_lea.vmem [#allocation14], %s585
        %s587 = smul.u32 8, %s39
        %s589 = smul.u32 %s39, 8
        %s590 = smul.u32 %s589, 16
        %s591 = scalar_lea.vmem %s518, %s590 [#allocation2]
        %v592 = vld [vmem:[%s591] sm:$0xff]
        %v593 = vld [vmem:[%s591 + $0x8] sm:$0xff]
        %v594 = vld [vmem:[%s591 + $0x10] sm:$0xff]
        %v595 = vld [vmem:[%s591 + $0x18] sm:$0xff]
        %v596 = vld [vmem:[%s591 + $0x20] sm:$0xff]
        %v597 = vld [vmem:[%s591 + $0x28] sm:$0xff]
        %v598 = vld [vmem:[%s591 + $0x30] sm:$0xff]
        %v599 = vld [vmem:[%s591 + $0x38] sm:$0xff]
        %v600 = vld [vmem:[%s591 + $0x40] sm:$0xff]
        %v601 = vld [vmem:[%s591 + $0x48] sm:$0xff]
        %v602 = vld [vmem:[%s591 + $0x50] sm:$0xff]
        %v603 = vld [vmem:[%s591 + $0x58] sm:$0xff]
        %v604 = vld [vmem:[%s591 + $0x60] sm:$0xff]
        %v605 = vld [vmem:[%s591 + $0x68] sm:$0xff]
        %v606 = vld [vmem:[%s591 + $0x70] sm:$0xff]
        %v607 = vld [vmem:[%s591 + $0x78] sm:$0xff]
        %v608 = vld [vmem:[%s591 + $0x80] sm:$0xff]
        %v609 = vld [vmem:[%s591 + $0x88] sm:$0xff]
        %v610 = vld [vmem:[%s591 + $0x90] sm:$0xff]
        %v611 = vld [vmem:[%s591 + $0x98] sm:$0xff]
        %v612 = vld [vmem:[%s591 + $0xa0] sm:$0xff]
        %v613 = vld [vmem:[%s591 + $0xa8] sm:$0xff]
        %v614 = vld [vmem:[%s591 + $0xb0] sm:$0xff]
        %v615 = vld [vmem:[%s591 + $0xb8] sm:$0xff]
        %v616 = vld [vmem:[%s591 + $0xc0] sm:$0xff]
        %v617 = vld [vmem:[%s591 + $0xc8] sm:$0xff]
        %v618 = vld [vmem:[%s591 + $0xd0] sm:$0xff]
        %v619 = vld [vmem:[%s591 + $0xd8] sm:$0xff]
        %v620 = vld [vmem:[%s591 + $0xe0] sm:$0xff]
        %v621 = vld [vmem:[%s591 + $0xe8] sm:$0xff]
        %v622 = vld [vmem:[%s591 + $0xf0] sm:$0xff]
        %v623 = vld [vmem:[%s591 + $0xf8] sm:$0xff]
        %v624 = vld [vmem:[%s591 + $0x100] sm:$0xff]
        %v625 = vld [vmem:[%s591 + $0x108] sm:$0xff]
        %v626 = vld [vmem:[%s591 + $0x110] sm:$0xff]
        %v627 = vld [vmem:[%s591 + $0x118] sm:$0xff]
        %v628 = vpack.c.bf16 %v593, %v592
        %v629 = vpack.c.bf16 %v595, %v594
        %v630 = vpack.c.bf16 %v597, %v596
        %v631 = vpack.c.bf16 %v599, %v598
        %v632 = vpack.c.bf16 %v601, %v600
        %v633 = vpack.c.bf16 %v603, %v602
        %v634 = vpack.c.bf16 %v605, %v604
        %v635 = vpack.c.bf16 %v607, %v606
        %v636 = vpack.c.bf16 %v609, %v608
        %v637 = vpack.c.bf16 %v611, %v610
        %v638 = vpack.c.bf16 %v613, %v612
        %v639 = vpack.c.bf16 %v615, %v614
        %v640 = vpack.c.bf16 %v617, %v616
        %v641 = vpack.c.bf16 %v619, %v618
        %v642 = vpack.c.bf16 %v621, %v620
        %v643 = vpack.c.bf16 %v623, %v622
        %v644 = vpack.c.bf16 %v625, %v624
        %v645 = vpack.c.bf16 %v627, %v626
        %v647 = vshrl.u32 %v628, 16
        %v649 = vrot.slane %v647, 7
        %v650 = vshll.u32 %v628, 16
        %v652 = vor.u32 %v649, %v650
        %v654 = vshrl.u32 %v629, 16
        %v656 = vrot.slane %v654, 7
        %v657 = vshll.u32 %v629, 16
        %v659 = vor.u32 %v656, %v657
        %v661 = vshrl.u32 %v630, 16
        %v663 = vrot.slane %v661, 7
        %v664 = vshll.u32 %v630, 16
        %v666 = vor.u32 %v663, %v664
        %v668 = vshrl.u32 %v631, 16
        %v670 = vrot.slane %v668, 7
        %v671 = vshll.u32 %v631, 16
        %v673 = vor.u32 %v670, %v671
        %v675 = vshrl.u32 %v632, 16
        %v677 = vrot.slane %v675, 7
        %v678 = vshll.u32 %v632, 16
        %v680 = vor.u32 %v677, %v678
        %v682 = vshrl.u32 %v633, 16
        %v684 = vrot.slane %v682, 7
        %v685 = vshll.u32 %v633, 16
        %v687 = vor.u32 %v684, %v685
        %v689 = vshrl.u32 %v634, 16
        %v691 = vrot.slane %v689, 7
        %v692 = vshll.u32 %v634, 16
        %v694 = vor.u32 %v691, %v692
        %v696 = vshrl.u32 %v635, 16
        %v698 = vrot.slane %v696, 7
        %v699 = vshll.u32 %v635, 16
        %v701 = vor.u32 %v698, %v699
        %v703 = vshrl.u32 %v636, 16
        %v705 = vrot.slane %v703, 7
        %v706 = vshll.u32 %v636, 16
        %v708 = vor.u32 %v705, %v706
        %v710 = vshrl.u32 %v637, 16
        %v712 = vrot.slane %v710, 7
        %v713 = vshll.u32 %v637, 16
        %v715 = vor.u32 %v712, %v713
        %v717 = vshrl.u32 %v638, 16
        %v719 = vrot.slane %v717, 7
        %v720 = vshll.u32 %v638, 16
        %v722 = vor.u32 %v719, %v720
        %v724 = vshrl.u32 %v639, 16
        %v726 = vrot.slane %v724, 7
        %v727 = vshll.u32 %v639, 16
        %v729 = vor.u32 %v726, %v727
        %v731 = vshrl.u32 %v640, 16
        %v733 = vrot.slane %v731, 7
        %v734 = vshll.u32 %v640, 16
        %v736 = vor.u32 %v733, %v734
        %v738 = vshrl.u32 %v641, 16
        %v740 = vrot.slane %v738, 7
        %v741 = vshll.u32 %v641, 16
        %v743 = vor.u32 %v740, %v741
        %v745 = vshrl.u32 %v642, 16
        %v747 = vrot.slane %v745, 7
        %v748 = vshll.u32 %v642, 16
        %v750 = vor.u32 %v747, %v748
        %v752 = vshrl.u32 %v643, 16
        %v754 = vrot.slane %v752, 7
        %v755 = vshll.u32 %v643, 16
        %v757 = vor.u32 %v754, %v755
        %v759 = vshrl.u32 %v644, 16
        %v761 = vrot.slane %v759, 7
        %v762 = vshll.u32 %v644, 16
        %v764 = vor.u32 %v761, %v762
        %v766 = vshrl.u32 %v645, 16
        %v768 = vrot.slane %v766, 7
        %v769 = vshll.u32 %v645, 16
        %v771 = vor.u32 %v768, %v769
        %vm808 = vcmask 1040384
        %vm809 = vsmask.f32 256
        %vm810 = vmand %vm808, %vm809
        %v811 = vsel %vm810, 0, %v652
        %v812 = vsel %vm810, 0, %v659
        %v813 = vsel %vm810, 0, %v666
        %v814 = vsel %vm810, 0, %v673
        %v815 = vsel %vm810, 0, %v680
        %v816 = vsel %vm810, 0, %v687
        %v817 = vsel %vm810, 0, %v694
        %v818 = vsel %vm810, 0, %v701
        %v819 = vsel %vm810, 0, %v708
        %v820 = vsel %vm810, 0, %v715
        %v821 = vsel %vm810, 0, %v722
        %v822 = vsel %vm810, 0, %v729
        %v823 = vsel %vm810, 0, %v736
        %v824 = vsel %vm810, 0, %v743
        %v825 = vsel %vm810, 0, %v750
        %v826 = vsel %vm810, 0, %v757
        %v827 = vsel %vm810, 0, %v764
        %v828 = vsel %vm810, 0, %v771
        %v829 = vsel %vm810, %v649, 0
        %v830 = vsel %vm810, %v656, 0
        %v831 = vsel %vm810, %v663, 0
        %v832 = vsel %vm810, %v670, 0
        %v833 = vsel %vm810, %v677, 0
        %v834 = vsel %vm810, %v684, 0
        %v835 = vsel %vm810, %v691, 0
        %v836 = vsel %vm810, %v698, 0
        %v837 = vsel %vm810, %v705, 0
        %v838 = vsel %vm810, %v712, 0
        %v839 = vsel %vm810, %v719, 0
        %v840 = vsel %vm810, %v726, 0
        %v841 = vsel %vm810, %v733, 0
        %v842 = vsel %vm810, %v740, 0
        %v843 = vsel %vm810, %v747, 0
        %v844 = vsel %vm810, %v754, 0
        %v845 = vsel %vm810, %v761, 0
        %v846 = vsel %vm810, %v768, 0
        %vm847 = vsmask.f32 7424
        %v849 = vshrl.u32 %v811, 16
        %v851 = vshll.u32 %v811, 16
        %v853 = vrot.slane %v851, 1
        %v854 = vor.u32 %v849, %v853
        %v856 = vshll.u32 %v829, 16
        %v858 = vrot.slane %v856, 1
        %v859 = vsel %vm847, %v854, %v858
        %v861 = vshrl.u32 %v812, 16
        %v863 = vshll.u32 %v812, 16
        %v865 = vrot.slane %v863, 1
        %v866 = vor.u32 %v861, %v865
        %v868 = vshll.u32 %v830, 16
        %v870 = vrot.slane %v868, 1
        %v871 = vsel %vm847, %v866, %v870
        %v873 = vshrl.u32 %v813, 16
        %v875 = vshll.u32 %v813, 16
        %v877 = vrot.slane %v875, 1
        %v878 = vor.u32 %v873, %v877
        %v880 = vshll.u32 %v831, 16
        %v882 = vrot.slane %v880, 1
        %v883 = vsel %vm847, %v878, %v882
        %v885 = vshrl.u32 %v814, 16
        %v887 = vshll.u32 %v814, 16
        %v889 = vrot.slane %v887, 1
        %v890 = vor.u32 %v885, %v889
        %v892 = vshll.u32 %v832, 16
        %v894 = vrot.slane %v892, 1
        %v895 = vsel %vm847, %v890, %v894
        %v897 = vshrl.u32 %v815, 16
        %v899 = vshll.u32 %v815, 16
        %v901 = vrot.slane %v899, 1
        %v902 = vor.u32 %v897, %v901
        %v904 = vshll.u32 %v833, 16
        %v906 = vrot.slane %v904, 1
        %v907 = vsel %vm847, %v902, %v906
        %v909 = vshrl.u32 %v816, 16
        %v911 = vshll.u32 %v816, 16
        %v913 = vrot.slane %v911, 1
        %v914 = vor.u32 %v909, %v913
        %v916 = vshll.u32 %v834, 16
        %v918 = vrot.slane %v916, 1
        %v919 = vsel %vm847, %v914, %v918
        %v921 = vshrl.u32 %v817, 16
        %v923 = vshll.u32 %v817, 16
        %v925 = vrot.slane %v923, 1
        %v926 = vor.u32 %v921, %v925
        %v928 = vshll.u32 %v835, 16
        %v930 = vrot.slane %v928, 1
        %v931 = vsel %vm847, %v926, %v930
        %v933 = vshrl.u32 %v818, 16
        %v935 = vshll.u32 %v818, 16
        %v937 = vrot.slane %v935, 1
        %v938 = vor.u32 %v933, %v937
        %v940 = vshll.u32 %v836, 16
        %v942 = vrot.slane %v940, 1
        %v943 = vsel %vm847, %v938, %v942
        %v945 = vshrl.u32 %v819, 16
        %v947 = vshll.u32 %v819, 16
        %v949 = vrot.slane %v947, 1
        %v950 = vor.u32 %v945, %v949
        %v952 = vshll.u32 %v837, 16
        %v954 = vrot.slane %v952, 1
        %v955 = vsel %vm847, %v950, %v954
        %v957 = vshrl.u32 %v820, 16
        %v959 = vshll.u32 %v820, 16
        %v961 = vrot.slane %v959, 1
        %v962 = vor.u32 %v957, %v961
        %v964 = vshll.u32 %v838, 16
        %v966 = vrot.slane %v964, 1
        %v967 = vsel %vm847, %v962, %v966
        %v969 = vshrl.u32 %v821, 16
        %v971 = vshll.u32 %v821, 16
        %v973 = vrot.slane %v971, 1
        %v974 = vor.u32 %v969, %v973
        %v976 = vshll.u32 %v839, 16
        %v978 = vrot.slane %v976, 1
        %v979 = vsel %vm847, %v974, %v978
        %v981 = vshrl.u32 %v822, 16
        %v983 = vshll.u32 %v822, 16
        %v985 = vrot.slane %v983, 1
        %v986 = vor.u32 %v981, %v985
        %v988 = vshll.u32 %v840, 16
        %v990 = vrot.slane %v988, 1
        %v991 = vsel %vm847, %v986, %v990
        %v993 = vshrl.u32 %v823, 16
        %v995 = vshll.u32 %v823, 16
        %v997 = vrot.slane %v995, 1
        %v998 = vor.u32 %v993, %v997
        %v1000 = vshll.u32 %v841, 16
        %v1002 = vrot.slane %v1000, 1
        %v1003 = vsel %vm847, %v998, %v1002
        %v1005 = vshrl.u32 %v824, 16
        %v1007 = vshll.u32 %v824, 16
        %v1009 = vrot.slane %v1007, 1
        %v1010 = vor.u32 %v1005, %v1009
        %v1012 = vshll.u32 %v842, 16
        %v1014 = vrot.slane %v1012, 1
        %v1015 = vsel %vm847, %v1010, %v1014
        %v1017 = vshrl.u32 %v825, 16
        %v1019 = vshll.u32 %v825, 16
        %v1021 = vrot.slane %v1019, 1
        %v1022 = vor.u32 %v1017, %v1021
        %v1024 = vshll.u32 %v843, 16
        %v1026 = vrot.slane %v1024, 1
        %v1027 = vsel %vm847, %v1022, %v1026
        %v1029 = vshrl.u32 %v826, 16
        %v1031 = vshll.u32 %v826, 16
        %v1033 = vrot.slane %v1031, 1
        %v1034 = vor.u32 %v1029, %v1033
        %v1036 = vshll.u32 %v844, 16
        %v1038 = vrot.slane %v1036, 1
        %v1039 = vsel %vm847, %v1034, %v1038
        %v1041 = vshrl.u32 %v827, 16
        %v1043 = vshll.u32 %v827, 16
        %v1045 = vrot.slane %v1043, 1
        %v1046 = vor.u32 %v1041, %v1045
        %v1048 = vshll.u32 %v845, 16
        %v1050 = vrot.slane %v1048, 1
        %v1051 = vsel %vm847, %v1046, %v1050
        %v1053 = vshrl.u32 %v828, 16
        %v1055 = vshll.u32 %v828, 16
        %v1057 = vrot.slane %v1055, 1
        %v1058 = vor.u32 %v1053, %v1057
        %v1060 = vshll.u32 %v846, 16
        %v1062 = vrot.slane %v1060, 1
        %v1063 = vsel %vm847, %v1058, %v1062
        %1064 = vrot.lane.b32.xlu0 %v859, 64
        %v1065 = vpop.permute.xlu0 %1064
        %1066 = vrot.lane.b32.xlu0 %v871, 64
        %v1067 = vpop.permute.xlu0 %1066
        %1068 = vrot.lane.b32.xlu0 %v883, 64
        %v1069 = vpop.permute.xlu0 %1068
        %1070 = vrot.lane.b32.xlu0 %v895, 64
        %v1071 = vpop.permute.xlu0 %1070
        %1072 = vrot.lane.b32.xlu0 %v907, 64
        %v1073 = vpop.permute.xlu0 %1072
        %1074 = vrot.lane.b32.xlu0 %v919, 64
        %v1075 = vpop.permute.xlu0 %1074
        %1076 = vrot.lane.b32.xlu0 %v931, 64
        %v1077 = vpop.permute.xlu0 %1076
        %1078 = vrot.lane.b32.xlu0 %v943, 64
        %v1079 = vpop.permute.xlu0 %1078
        %1080 = vrot.lane.b32.xlu0 %v955, 64
        %v1081 = vpop.permute.xlu0 %1080
        %1082 = vrot.lane.b32.xlu0 %v967, 64
        %v1083 = vpop.permute.xlu0 %1082
        %1084 = vrot.lane.b32.xlu0 %v979, 64
        %v1085 = vpop.permute.xlu0 %1084
        %1086 = vrot.lane.b32.xlu0 %v991, 64
        %v1087 = vpop.permute.xlu0 %1086
        %1088 = vrot.lane.b32.xlu0 %v1003, 64
        %v1089 = vpop.permute.xlu0 %1088
        %1090 = vrot.lane.b32.xlu0 %v1015, 64
        %v1091 = vpop.permute.xlu0 %1090
        %1092 = vrot.lane.b32.xlu0 %v1027, 64
        %v1093 = vpop.permute.xlu0 %1092
        %1094 = vrot.lane.b32.xlu0 %v1039, 64
        %v1095 = vpop.permute.xlu0 %1094
        %1096 = vrot.lane.b32.xlu0 %v1051, 64
        %v1097 = vpop.permute.xlu0 %1096
        %1098 = vrot.lane.b32.xlu0 %v1063, 64
        %v1099 = vpop.permute.xlu0 %1098
        %vm1136 = vcmask 1046528
        %v1137 = vrot.slane %v811, 1
        %v1138 = vrot.slane %v829, 1
        %v1139 = vsel %vm1136, %v1137, %v1138
        %v1140 = vrot.slane %v812, 1
        %v1141 = vrot.slane %v830, 1
        %v1142 = vsel %vm1136, %v1140, %v1141
        %v1143 = vrot.slane %v813, 1
        %v1144 = vrot.slane %v831, 1
        %v1145 = vsel %vm1136, %v1143, %v1144
        %v1146 = vrot.slane %v814, 1
        %v1147 = vrot.slane %v832, 1
        %v1148 = vsel %vm1136, %v1146, %v1147
        %v1149 = vrot.slane %v815, 1
        %v1150 = vrot.slane %v833, 1
        %v1151 = vsel %vm1136, %v1149, %v1150
        %v1152 = vrot.slane %v816, 1
        %v1153 = vrot.slane %v834, 1
        %v1154 = vsel %vm1136, %v1152, %v1153
        %v1155 = vrot.slane %v817, 1
        %v1156 = vrot.slane %v835, 1
        %v1157 = vsel %vm1136, %v1155, %v1156
        %v1158 = vrot.slane %v818, 1
        %v1159 = vrot.slane %v836, 1
        %v1160 = vsel %vm1136, %v1158, %v1159
        %v1161 = vrot.slane %v819, 1
        %v1162 = vrot.slane %v837, 1
        %v1163 = vsel %vm1136, %v1161, %v1162
        %v1164 = vrot.slane %v820, 1
        %v1165 = vrot.slane %v838, 1
        %v1166 = vsel %vm1136, %v1164, %v1165
        %v1167 = vrot.slane %v821, 1
        %v1168 = vrot.slane %v839, 1
        %v1169 = vsel %vm1136, %v1167, %v1168
        %v1170 = vrot.slane %v822, 1
        %v1171 = vrot.slane %v840, 1
        %v1172 = vsel %vm1136, %v1170, %v1171
        %v1173 = vrot.slane %v823, 1
        %v1174 = vrot.slane %v841, 1
        %v1175 = vsel %vm1136, %v1173, %v1174
        %v1176 = vrot.slane %v824, 1
        %v1177 = vrot.slane %v842, 1
        %v1178 = vsel %vm1136, %v1176, %v1177
        %v1179 = vrot.slane %v825, 1
        %v1180 = vrot.slane %v843, 1
        %v1181 = vsel %vm1136, %v1179, %v1180
        %v1182 = vrot.slane %v826, 1
        %v1183 = vrot.slane %v844, 1
        %v1184 = vsel %vm1136, %v1182, %v1183
        %v1185 = vrot.slane %v827, 1
        %v1186 = vrot.slane %v845, 1
        %v1187 = vsel %vm1136, %v1185, %v1186
        %v1188 = vrot.slane %v828, 1
        %v1189 = vrot.slane %v846, 1
        %v1190 = vsel %vm1136, %v1188, %v1189
        %vm1191 = vcmask 523264
        %v1193 = vsel %vm1191, %v811, %v1065
        %v1196 = vsel %vm1191, %v812, %v1067
        %v1199 = vsel %vm1191, %v813, %v1069
        %v1202 = vsel %vm1191, %v814, %v1071
        %v1205 = vsel %vm1191, %v815, %v1073
        %v1208 = vsel %vm1191, %v816, %v1075
        %v1211 = vsel %vm1191, %v817, %v1077
        %v1214 = vsel %vm1191, %v818, %v1079
        %v1217 = vsel %vm1191, %v819, %v1081
        %v1220 = vsel %vm1191, %v820, %v1083
        %v1223 = vsel %vm1191, %v821, %v1085
        %v1226 = vsel %vm1191, %v822, %v1087
        %v1229 = vsel %vm1191, %v823, %v1089
        %v1232 = vsel %vm1191, %v824, %v1091
        %v1235 = vsel %vm1191, %v825, %v1093
        %v1238 = vsel %vm1191, %v826, %v1095
        %v1241 = vsel %vm1191, %v827, %v1097
        %v1244 = vsel %vm1191, %v828, %v1099
        %v1246 = vld [vmem:[#allocation5] sm:$0xff]
        %v1247 = vld [vmem:[#allocation5 + $0x8] sm:$0xff]
        %v1248 = vld [vmem:[#allocation5 + $0x10] sm:$0xff]
        %v1249 = vld [vmem:[#allocation5 + $0x18] sm:$0xff]
        %v1250 = vld [vmem:[#allocation5 + $0x20] sm:$0xff]
        %v1251 = vld [vmem:[#allocation5 + $0x28] sm:$0xff]
        %v1252 = vld [vmem:[#allocation5 + $0x30] sm:$0xff]
        %v1253 = vld [vmem:[#allocation5 + $0x38] sm:$0xff]
        %v1254 = vld [vmem:[#allocation5 + $0x40] sm:$0xff]
        %v1255 = vld [vmem:[#allocation5 + $0x48] sm:$0xff]
        %v1256 = vld [vmem:[#allocation5 + $0x50] sm:$0xff]
        %v1257 = vld [vmem:[#allocation5 + $0x58] sm:$0xff]
        %v1258 = vld [vmem:[#allocation5 + $0x60] sm:$0xff]
        %v1259 = vld [vmem:[#allocation5 + $0x68] sm:$0xff]
        %v1260 = vld [vmem:[#allocation5 + $0x70] sm:$0xff]
        %v1261 = vld [vmem:[#allocation5 + $0x78] sm:$0xff]
        %v1262 = vld [vmem:[#allocation5 + $0x80] sm:$0xff]
        %v1263 = vld [vmem:[#allocation5 + $0x88] sm:$0xff]
        %v1264 = vld [vmem:[#allocation5 + $0x90] sm:$0xff]
        %v1265 = vld [vmem:[#allocation5 + $0x98] sm:$0xff]
        %v1266 = vld [vmem:[#allocation5 + $0xa0] sm:$0xff]
        %v1267 = vld [vmem:[#allocation5 + $0xa8] sm:$0xff]
        %v1268 = vld [vmem:[#allocation5 + $0xb0] sm:$0xff]
        %v1269 = vld [vmem:[#allocation5 + $0xb8] sm:$0xff]
        %v1294 = vunpack.c.l.b16 %v1246
        %v1295 = vunpack.c.h.b16 %v1246
        %v1296 = vunpack.c.l.b16 %v1247
        %v1297 = vunpack.c.h.b16 %v1247
        %v1298 = vunpack.c.l.b16 %v1248
        %v1299 = vunpack.c.h.b16 %v1248
        %v1300 = vunpack.c.l.b16 %v1249
        %v1301 = vunpack.c.h.b16 %v1249
        %v1302 = vunpack.c.l.b16 %v1250
        %v1303 = vunpack.c.h.b16 %v1250
        %v1304 = vunpack.c.l.b16 %v1251
        %v1305 = vunpack.c.h.b16 %v1251
        %v1306 = vunpack.c.l.b16 %v1252
        %v1307 = vunpack.c.h.b16 %v1252
        %v1308 = vunpack.c.l.b16 %v1253
        %v1309 = vunpack.c.h.b16 %v1253
        %v1310 = vunpack.c.l.b16 %v1254
        %v1311 = vunpack.c.h.b16 %v1254
        %v1312 = vunpack.c.l.b16 %v1255
        %v1313 = vunpack.c.h.b16 %v1255
        %v1314 = vunpack.c.l.b16 %v1256
        %v1315 = vunpack.c.h.b16 %v1256
        %v1316 = vunpack.c.l.b16 %v1257
        %v1317 = vunpack.c.h.b16 %v1257
        %v1318 = vunpack.c.l.b16 %v1258
        %v1319 = vunpack.c.h.b16 %v1258
        %v1320 = vunpack.c.l.b16 %v1259
        %v1321 = vunpack.c.h.b16 %v1259
        %v1322 = vunpack.c.l.b16 %v1260
        %v1323 = vunpack.c.h.b16 %v1260
        %v1324 = vunpack.c.l.b16 %v1261
        %v1325 = vunpack.c.h.b16 %v1261
        %v1326 = vunpack.c.l.b16 %v1262
        %v1327 = vunpack.c.h.b16 %v1262
        %v1328 = vunpack.c.l.b16 %v1263
        %v1329 = vunpack.c.h.b16 %v1263
        %v1330 = vunpack.c.l.b16 %v1264
        %v1331 = vunpack.c.h.b16 %v1264
        %v1332 = vunpack.c.l.b16 %v1265
        %v1333 = vunpack.c.h.b16 %v1265
        %v1334 = vunpack.c.l.b16 %v1266
        %v1335 = vunpack.c.h.b16 %v1266
        %v1336 = vunpack.c.l.b16 %v1267
        %v1337 = vunpack.c.h.b16 %v1267
        %v1338 = vunpack.c.l.b16 %v1268
        %v1339 = vunpack.c.h.b16 %v1268
        %v1340 = vunpack.c.l.b16 %v1269
        %v1341 = vunpack.c.h.b16 %v1269
        %v1342 = vpack.c.b16 %v1296, %v1294
        %v1343 = vpack.c.b16 %v1297, %v1295
        %v1344 = vpack.c.b16 %v1300, %v1298
        %v1345 = vpack.c.b16 %v1301, %v1299
        %v1346 = vpack.c.b16 %v1304, %v1302
        %v1347 = vpack.c.b16 %v1305, %v1303
        %v1348 = vpack.c.b16 %v1308, %v1306
        %v1349 = vpack.c.b16 %v1309, %v1307
        %v1350 = vpack.c.b16 %v1312, %v1310
        %v1351 = vpack.c.b16 %v1313, %v1311
        %v1352 = vpack.c.b16 %v1316, %v1314
        %v1353 = vpack.c.b16 %v1317, %v1315
        %v1354 = vpack.c.b16 %v1320, %v1318
        %v1355 = vpack.c.b16 %v1321, %v1319
        %v1356 = vpack.c.b16 %v1324, %v1322
        %v1357 = vpack.c.b16 %v1325, %v1323
        %v1358 = vpack.c.b16 %v1328, %v1326
        %v1359 = vpack.c.b16 %v1329, %v1327
        %v1360 = vpack.c.b16 %v1332, %v1330
        %v1361 = vpack.c.b16 %v1333, %v1331
        %v1362 = vpack.c.b16 %v1336, %v1334
        %v1363 = vpack.c.b16 %v1337, %v1335
        %v1364 = vpack.c.b16 %v1340, %v1338
        %v1365 = vpack.c.b16 %v1341, %v1339
        %v1391 = vsel %vm1191, %v1139, 0
        %v1394 = vsel %vm1191, %v1142, 0
        %v1397 = vsel %vm1191, %v1145, 0
        %v1400 = vsel %vm1191, %v1148, 0
        %v1403 = vsel %vm1191, %v1151, 0
        %v1406 = vsel %vm1191, %v1154, 0
        %v1409 = vsel %vm1191, %v1157, 0
        %v1412 = vsel %vm1191, %v1160, 0
        %v1415 = vsel %vm1191, %v1163, 0
        %v1418 = vsel %vm1191, %v1166, 0
        %v1421 = vsel %vm1191, %v1169, 0
        %v1424 = vsel %vm1191, %v1172, 0
        %v1427 = vsel %vm1191, %v1175, 0
        %v1430 = vsel %vm1191, %v1178, 0
        %v1433 = vsel %vm1191, %v1181, 0
        %v1436 = vsel %vm1191, %v1184, 0
        %v1439 = vsel %vm1191, %v1187, 0
        %v1442 = vsel %vm1191, %v1190, 0
        %1444 = vmatprep.subr.bf16.mxu0 %v1357
        %1445 = vmatpush1.bf16.msra.mxu0 %v1356
        %1446 = vmatprep.subr.bf16.mxu0 %v1355
        %1447 = vmatpush1.bf16.msra.mxu0 %v1354
        %1448 = vmatprep.subr.bf16.mxu0 %v1353
        %1449 = vmatpush1.bf16.msra.mxu0 %v1352
        %1450 = vmatprep.subr.bf16.mxu0 %v1351
        %1451 = vmatpush1.bf16.msra.mxu0 %v1350
        %1452 = vmatprep.subr.bf16.mxu0 %v1349
        %1453 = vmatpush1.bf16.msra.mxu0 %v1348
        %1454 = vmatprep.subr.bf16.mxu0 %v1347
        %1455 = vmatpush1.bf16.msra.mxu0 %v1346
        %1456 = vmatprep.subr.bf16.mxu0 %v1345
        %1457 = vmatpush1.bf16.msra.mxu0 %v1344
        %1458 = vmatprep.subr.bf16.mxu0 %v1343
        %1459 = vmatpush1.bf16.msra.mxu0 %v1342
        %1460 = vmatprep.subr.bf16.mxu0 0
        %1461 = vmatpush2.bf16.msra.mxu0 0
        %1462 = vmatprep.subr.bf16.mxu0 0
        %1463 = vmatpush2.bf16.msra.mxu0 0
        %1464 = vmatprep.subr.bf16.mxu0 0
        %1465 = vmatpush2.bf16.msra.mxu0 0
        %1466 = vmatprep.subr.bf16.mxu0 0
        %1467 = vmatpush2.bf16.msra.mxu0 0
        %1468 = vmatprep.subr.bf16.mxu0 %v1365
        %1469 = vmatpush2.bf16.msra.mxu0 %v1364
        %1470 = vmatprep.subr.bf16.mxu0 %v1363
        %1471 = vmatpush2.bf16.msra.mxu0 %v1362
        %1472 = vmatprep.subr.bf16.mxu0 %v1361
        %1473 = vmatpush2.bf16.msra.mxu0 %v1360
        %1474 = vmatprep.subr.bf16.mxu0 %v1359
        %1475 = vmatpush2.bf16.msra.mxu0 %v1358
        %1476 = vmatprep.mubr.bf16.mxu0 %v1391
        %1477 = vmatmul.mubr.bf16.gmra.mxu0 %v1193
        %v1478 = vpop.f32.mrf.mxu0
        %v1479 = vadd.f32 0.0, %v1478
        %v1480 = vpop.f32.mrf.mxu0
        %v1481 = vpop.f32.mrf.mxu0
        %v1482 = vadd.f32 0.0, %v1481
        %v1483 = vpop.f32.mrf.mxu0
        %1484 = vmatprep.mubr.bf16.mxu0 %v1394
        %1485 = vmatmul.mubr.bf16.gmra.mxu0 %v1196
        %v1486 = vpop.f32.mrf.mxu0
        %v1487 = vadd.f32 0.0, %v1486
        %v1488 = vpop.f32.mrf.mxu0
        %v1489 = vpop.f32.mrf.mxu0
        %v1490 = vadd.f32 0.0, %v1489
        %v1491 = vpop.f32.mrf.mxu0
        %1492 = vmatprep.mubr.bf16.mxu0 %v1397
        %1493 = vmatmul.mubr.bf16.gmra.mxu0 %v1199
        %v1494 = vpop.f32.mrf.mxu0
        %v1495 = vadd.f32 0.0, %v1494
        %v1496 = vpop.f32.mrf.mxu0
        %v1497 = vadd.f32 0.0, %v1496
        %v1498 = vpop.f32.mrf.mxu0
        %v1499 = vadd.f32 0.0, %v1498
        %v1500 = vpop.f32.mrf.mxu0
        %v1501 = vadd.f32 0.0, %v1500
        %1502 = vmatprep.mubr.bf16.mxu0 %v1400
        %1503 = vmatmul.mubr.bf16.gmra.mxu0 %v1202
        %v1504 = vpop.f32.mrf.mxu0
        %v1505 = vadd.f32 0.0, %v1504
        %v1506 = vpop.f32.mrf.mxu0
        %v1507 = vadd.f32 0.0, %v1506
        %v1508 = vpop.f32.mrf.mxu0
        %v1509 = vadd.f32 0.0, %v1508
        %v1510 = vpop.f32.mrf.mxu0
        %v1511 = vadd.f32 0.0, %v1510
        %1512 = vmatprep.mubr.bf16.mxu0 %v1403
        %1513 = vmatmul.mubr.bf16.gmra.mxu0 %v1205
        %v1514 = vpop.f32.mrf.mxu0
        %v1515 = vadd.f32 0.0, %v1514
        %v1516 = vpop.f32.mrf.mxu0
        %v1517 = vadd.f32 0.0, %v1516
        %v1518 = vpop.f32.mrf.mxu0
        %v1519 = vadd.f32 0.0, %v1518
        %v1520 = vpop.f32.mrf.mxu0
        %v1521 = vadd.f32 0.0, %v1520
        %1522 = vmatprep.mubr.bf16.mxu0 %v1406
        %1523 = vmatmul.mubr.bf16.gmra.mxu0 %v1208
        %v1524 = vpop.f32.mrf.mxu0
        %v1525 = vadd.f32 0.0, %v1524
        %v1526 = vpop.f32.mrf.mxu0
        %v1527 = vadd.f32 0.0, %v1526
        %v1528 = vpop.f32.mrf.mxu0
        %v1529 = vadd.f32 0.0, %v1528
        %v1530 = vpop.f32.mrf.mxu0
        %v1531 = vadd.f32 0.0, %v1530
        %1532 = vmatprep.mubr.bf16.mxu0 %v1409
        %1533 = vmatmul.mubr.bf16.gmra.mxu0 %v1211
        %v1534 = vpop.f32.mrf.mxu0
        %v1535 = vadd.f32 0.0, %v1534
        %v1536 = vpop.f32.mrf.mxu0
        %v1537 = vadd.f32 0.0, %v1536
        %v1538 = vpop.f32.mrf.mxu0
        %v1539 = vadd.f32 0.0, %v1538
        %v1540 = vpop.f32.mrf.mxu0
        %v1541 = vadd.f32 0.0, %v1540
        %1542 = vmatprep.mubr.bf16.mxu0 %v1412
        %1543 = vmatmul.mubr.bf16.gmra.mxu0 %v1214
        %v1544 = vpop.f32.mrf.mxu0
        %v1545 = vadd.f32 0.0, %v1544
        %v1546 = vpop.f32.mrf.mxu0
        %v1547 = vadd.f32 0.0, %v1546
        %v1548 = vpop.f32.mrf.mxu0
        %v1549 = vadd.f32 0.0, %v1548
        %v1550 = vpop.f32.mrf.mxu0
        %v1551 = vadd.f32 0.0, %v1550
        %1552 = vmatprep.mubr.bf16.mxu0 %v1415
        %1553 = vmatmul.mubr.bf16.gmra.mxu0 %v1217
        %v1554 = vpop.f32.mrf.mxu0
        %v1555 = vadd.f32 0.0, %v1554
        %v1556 = vpop.f32.mrf.mxu0
        %v1557 = vadd.f32 0.0, %v1556
        %v1558 = vpop.f32.mrf.mxu0
        %v1559 = vadd.f32 0.0, %v1558
        %v1560 = vpop.f32.mrf.mxu0
        %v1561 = vadd.f32 0.0, %v1560
        %1562 = vmatprep.mubr.bf16.mxu0 %v1418
        %1563 = vmatmul.mubr.bf16.gmra.mxu0 %v1220
        %v1564 = vpop.f32.mrf.mxu0
        %v1565 = vadd.f32 0.0, %v1564
        %v1566 = vpop.f32.mrf.mxu0
        %v1567 = vadd.f32 0.0, %v1566
        %v1568 = vpop.f32.mrf.mxu0
        %v1569 = vadd.f32 0.0, %v1568
        %v1570 = vpop.f32.mrf.mxu0
        %v1571 = vadd.f32 0.0, %v1570
        %1572 = vmatprep.mubr.bf16.mxu0 %v1421
        %1573 = vmatmul.mubr.bf16.gmra.mxu0 %v1223
        %v1574 = vpop.f32.mrf.mxu0
        %v1575 = vadd.f32 0.0, %v1574
        %v1576 = vpop.f32.mrf.mxu0
        %v1577 = vadd.f32 0.0, %v1576
        %v1578 = vpop.f32.mrf.mxu0
        %v1579 = vadd.f32 0.0, %v1578
        %v1580 = vpop.f32.mrf.mxu0
        %v1581 = vadd.f32 0.0, %v1580
        %1582 = vmatprep.mubr.bf16.mxu0 %v1424
        %1583 = vmatmul.mubr.bf16.gmra.mxu0 %v1226
        %v1584 = vpop.f32.mrf.mxu0
        %v1585 = vadd.f32 0.0, %v1584
        %v1586 = vpop.f32.mrf.mxu0
        %v1587 = vadd.f32 0.0, %v1586
        %v1588 = vpop.f32.mrf.mxu0
        %v1589 = vadd.f32 0.0, %v1588
        %v1590 = vpop.f32.mrf.mxu0
        %v1591 = vadd.f32 0.0, %v1590
        %1592 = vmatprep.mubr.bf16.mxu0 %v1427
        %1593 = vmatmul.mubr.bf16.gmra.mxu0 %v1229
        %v1594 = vpop.f32.mrf.mxu0
        %v1595 = vadd.f32 0.0, %v1594
        %v1596 = vpop.f32.mrf.mxu0
        %v1597 = vadd.f32 0.0, %v1596
        %v1598 = vpop.f32.mrf.mxu0
        %v1599 = vadd.f32 0.0, %v1598
        %v1600 = vpop.f32.mrf.mxu0
        %v1601 = vadd.f32 0.0, %v1600
        %1602 = vmatprep.mubr.bf16.mxu0 %v1430
        %1603 = vmatmul.mubr.bf16.gmra.mxu0 %v1232
        %v1604 = vpop.f32.mrf.mxu0
        %v1605 = vadd.f32 0.0, %v1604
        %v1606 = vpop.f32.mrf.mxu0
        %v1607 = vadd.f32 0.0, %v1606
        %v1608 = vpop.f32.mrf.mxu0
        %v1609 = vadd.f32 0.0, %v1608
        %v1610 = vpop.f32.mrf.mxu0
        %v1611 = vadd.f32 0.0, %v1610
        %1612 = vmatprep.mubr.bf16.mxu0 %v1433
        %1613 = vmatmul.mubr.bf16.gmra.mxu0 %v1235
        %v1614 = vpop.f32.mrf.mxu0
        %v1615 = vadd.f32 0.0, %v1614
        %v1616 = vpop.f32.mrf.mxu0
        %v1617 = vadd.f32 0.0, %v1616
        %v1618 = vpop.f32.mrf.mxu0
        %v1619 = vadd.f32 0.0, %v1618
        %v1620 = vpop.f32.mrf.mxu0
        %v1621 = vadd.f32 0.0, %v1620
        %1622 = vmatprep.mubr.bf16.mxu0 %v1436
        %1623 = vmatmul.mubr.bf16.gmra.mxu0 %v1238
        %v1624 = vpop.f32.mrf.mxu0
        %v1625 = vadd.f32 0.0, %v1624
        %v1626 = vpop.f32.mrf.mxu0
        %v1627 = vadd.f32 0.0, %v1626
        %v1628 = vpop.f32.mrf.mxu0
        %v1629 = vadd.f32 0.0, %v1628
        %v1630 = vpop.f32.mrf.mxu0
        %v1631 = vadd.f32 0.0, %v1630
        %1632 = vmatprep.mubr.bf16.mxu0 %v1439
        %1633 = vmatmul.mubr.bf16.gmra.mxu0 %v1241
        %v1634 = vpop.f32.mrf.mxu0
        %v1635 = vadd.f32 0.0, %v1634
        %v1636 = vpop.f32.mrf.mxu0
        %v1637 = vadd.f32 0.0, %v1636
        %v1638 = vpop.f32.mrf.mxu0
        %v1639 = vadd.f32 0.0, %v1638
        %v1640 = vpop.f32.mrf.mxu0
        %v1641 = vadd.f32 0.0, %v1640
        %1642 = vmatprep.mubr.bf16.mxu0 %v1442
        %1643 = vmatmul.mubr.bf16.gmra.mxu0 %v1244
        %v1644 = vpop.f32.mrf.mxu0
        %v1645 = vpop.f32.mrf.mxu0
        %v1646 = vadd.f32 0.0, %v1645
        %v1647 = vpop.f32.mrf.mxu0
        %v1648 = vpop.f32.mrf.mxu0
        %v1649 = vadd.f32 0.0, %v1648
        %1650 = vdwg.mxu0
        %1683 = vrot.lane.b32.xlu0 %v1487, 64
        %v1684 = vpop.permute.xlu0 %1683
        %1685 = vrot.lane.b32.xlu0 %v1490, 64
        %v1686 = vpop.permute.xlu0 %1685
        %1687 = vrot.lane.b32.xlu0 %v1495, 64
        %v1688 = vpop.permute.xlu0 %1687
        %1689 = vrot.lane.b32.xlu0 %v1499, 64
        %v1690 = vpop.permute.xlu0 %1689
        %1691 = vrot.lane.b32.xlu0 %v1505, 64
        %v1692 = vpop.permute.xlu0 %1691
        %1693 = vrot.lane.b32.xlu0 %v1509, 64
        %v1694 = vpop.permute.xlu0 %1693
        %1695 = vrot.lane.b32.xlu0 %v1515, 64
        %v1696 = vpop.permute.xlu0 %1695
        %1697 = vrot.lane.b32.xlu0 %v1519, 64
        %v1698 = vpop.permute.xlu0 %1697
        %1699 = vrot.lane.b32.xlu0 %v1525, 64
        %v1700 = vpop.permute.xlu0 %1699
        %1701 = vrot.lane.b32.xlu0 %v1529, 64
        %v1702 = vpop.permute.xlu0 %1701
        %1703 = vrot.lane.b32.xlu0 %v1535, 64
        %v1704 = vpop.permute.xlu0 %1703
        %1705 = vrot.lane.b32.xlu0 %v1539, 64
        %v1706 = vpop.permute.xlu0 %1705
        %1707 = vrot.lane.b32.xlu0 %v1545, 64
        %v1708 = vpop.permute.xlu0 %1707
        %1709 = vrot.lane.b32.xlu0 %v1549, 64
        %v1710 = vpop.permute.xlu0 %1709
        %1711 = vrot.lane.b32.xlu0 %v1555, 64
        %v1712 = vpop.permute.xlu0 %1711
        %1713 = vrot.lane.b32.xlu0 %v1559, 64
        %v1714 = vpop.permute.xlu0 %1713
        %1715 = vrot.lane.b32.xlu0 %v1565, 64
        %v1716 = vpop.permute.xlu0 %1715
        %1717 = vrot.lane.b32.xlu0 %v1569, 64
        %v1718 = vpop.permute.xlu0 %1717
        %1719 = vrot.lane.b32.xlu0 %v1575, 64
        %v1720 = vpop.permute.xlu0 %1719
        %1721 = vrot.lane.b32.xlu0 %v1579, 64
        %v1722 = vpop.permute.xlu0 %1721
        %1723 = vrot.lane.b32.xlu0 %v1585, 64
        %v1724 = vpop.permute.xlu0 %1723
        %1725 = vrot.lane.b32.xlu0 %v1589, 64
        %v1726 = vpop.permute.xlu0 %1725
        %1727 = vrot.lane.b32.xlu0 %v1595, 64
        %v1728 = vpop.permute.xlu0 %1727
        %1729 = vrot.lane.b32.xlu0 %v1599, 64
        %v1730 = vpop.permute.xlu0 %1729
        %1731 = vrot.lane.b32.xlu0 %v1605, 64
        %v1732 = vpop.permute.xlu0 %1731
        %1733 = vrot.lane.b32.xlu0 %v1609, 64
        %v1734 = vpop.permute.xlu0 %1733
        %1735 = vrot.lane.b32.xlu0 %v1615, 64
        %v1736 = vpop.permute.xlu0 %1735
        %1737 = vrot.lane.b32.xlu0 %v1619, 64
        %v1738 = vpop.permute.xlu0 %1737
        %1739 = vrot.lane.b32.xlu0 %v1625, 64
        %v1740 = vpop.permute.xlu0 %1739
        %1741 = vrot.lane.b32.xlu0 %v1629, 64
        %v1742 = vpop.permute.xlu0 %1741
        %1743 = vrot.lane.b32.xlu0 %v1635, 64
        %v1744 = vpop.permute.xlu0 %1743
        %1745 = vrot.lane.b32.xlu0 %v1639, 64
        %v1746 = vpop.permute.xlu0 %1745
        %v1779 = vadd.f32 %v1479, %v1684
        %v1780 = vadd.f32 %v1482, %v1686
        %v1781 = vadd.f32 %v1487, %v1688
        %v1782 = vadd.f32 %v1490, %v1690
        %v1783 = vadd.f32 %v1495, %v1692
        %v1784 = vadd.f32 %v1499, %v1694
        %v1785 = vadd.f32 %v1505, %v1696
        %v1786 = vadd.f32 %v1509, %v1698
        %v1787 = vadd.f32 %v1515, %v1700
        %v1788 = vadd.f32 %v1519, %v1702
        %v1789 = vadd.f32 %v1525, %v1704
        %v1790 = vadd.f32 %v1529, %v1706
        %v1791 = vadd.f32 %v1535, %v1708
        %v1792 = vadd.f32 %v1539, %v1710
        %v1793 = vadd.f32 %v1545, %v1712
        %v1794 = vadd.f32 %v1549, %v1714
        %v1795 = vadd.f32 %v1555, %v1716
        %v1796 = vadd.f32 %v1559, %v1718
        %v1797 = vadd.f32 %v1565, %v1720
        %v1798 = vadd.f32 %v1569, %v1722
        %v1799 = vadd.f32 %v1575, %v1724
        %v1800 = vadd.f32 %v1579, %v1726
        %v1801 = vadd.f32 %v1585, %v1728
        %v1802 = vadd.f32 %v1589, %v1730
        %v1803 = vadd.f32 %v1595, %v1732
        %v1804 = vadd.f32 %v1599, %v1734
        %v1805 = vadd.f32 %v1605, %v1736
        %v1806 = vadd.f32 %v1609, %v1738
        %v1807 = vadd.f32 %v1615, %v1740
        %v1808 = vadd.f32 %v1619, %v1742
        %v1809 = vadd.f32 %v1625, %v1744
        %v1810 = vadd.f32 %v1629, %v1746
        %v1811 = vadd.f32 %v1779, %v1497
        %v1812 = vadd.f32 %v1780, %v1501
        %v1813 = vadd.f32 %v1781, %v1507
        %v1814 = vadd.f32 %v1782, %v1511
        %v1815 = vadd.f32 %v1783, %v1517
        %v1816 = vadd.f32 %v1784, %v1521
        %v1817 = vadd.f32 %v1785, %v1527
        %v1818 = vadd.f32 %v1786, %v1531
        %v1819 = vadd.f32 %v1787, %v1537
        %v1820 = vadd.f32 %v1788, %v1541
        %v1821 = vadd.f32 %v1789, %v1547
        %v1822 = vadd.f32 %v1790, %v1551
        %v1823 = vadd.f32 %v1791, %v1557
        %v1824 = vadd.f32 %v1792, %v1561
        %v1825 = vadd.f32 %v1793, %v1567
        %v1826 = vadd.f32 %v1794, %v1571
        %v1827 = vadd.f32 %v1795, %v1577
        %v1828 = vadd.f32 %v1796, %v1581
        %v1829 = vadd.f32 %v1797, %v1587
        %v1830 = vadd.f32 %v1798, %v1591
        %v1831 = vadd.f32 %v1799, %v1597
        %v1832 = vadd.f32 %v1800, %v1601
        %v1833 = vadd.f32 %v1801, %v1607
        %v1834 = vadd.f32 %v1802, %v1611
        %v1835 = vadd.f32 %v1803, %v1617
        %v1836 = vadd.f32 %v1804, %v1621
        %v1837 = vadd.f32 %v1805, %v1627
        %v1838 = vadd.f32 %v1806, %v1631
        %v1839 = vadd.f32 %v1807, %v1637
        %v1840 = vadd.f32 %v1808, %v1641
        %v1841 = vadd.f32 %v1809, %v1646
        %v1842 = vadd.f32 %v1810, %v1649
        %v1843 = vld [vmem:[%s3] sm:$0x1]
        %v1845 = vlaneseq
        %v1846 = vshrl.u32 %v1845, 7
        %v1847 = vsub.s32 0, %v1846
        %v1848 = vrot.slane %v1843, %v1847
        %v1850 = vadd.f32 %v1811, %v1848
        %v1851 = vadd.f32 %v1812, %v1848
        %v1852 = vadd.f32 %v1813, %v1848
        %v1853 = vadd.f32 %v1814, %v1848
        %v1854 = vadd.f32 %v1815, %v1848
        %v1855 = vadd.f32 %v1816, %v1848
        %v1856 = vadd.f32 %v1817, %v1848
        %v1857 = vadd.f32 %v1818, %v1848
        %v1858 = vadd.f32 %v1819, %v1848
        %v1859 = vadd.f32 %v1820, %v1848
        %v1860 = vadd.f32 %v1821, %v1848
        %v1861 = vadd.f32 %v1822, %v1848
        %v1862 = vadd.f32 %v1823, %v1848
        %v1863 = vadd.f32 %v1824, %v1848
        %v1864 = vadd.f32 %v1825, %v1848
        %v1865 = vadd.f32 %v1826, %v1848
        %v1866 = vadd.f32 %v1827, %v1848
        %v1867 = vadd.f32 %v1828, %v1848
        %v1868 = vadd.f32 %v1829, %v1848
        %v1869 = vadd.f32 %v1830, %v1848
        %v1870 = vadd.f32 %v1831, %v1848
        %v1871 = vadd.f32 %v1832, %v1848
        %v1872 = vadd.f32 %v1833, %v1848
        %v1873 = vadd.f32 %v1834, %v1848
        %v1874 = vadd.f32 %v1835, %v1848
        %v1875 = vadd.f32 %v1836, %v1848
        %v1876 = vadd.f32 %v1837, %v1848
        %v1877 = vadd.f32 %v1838, %v1848
        %v1878 = vadd.f32 %v1839, %v1848
        %v1879 = vadd.f32 %v1840, %v1848
        %v1880 = vadd.f32 %v1841, %v1848
        %v1881 = vadd.f32 %v1842, %v1848
        %v1882 = vmax.f32 %v1850, 0.0
        %v1883 = vmax.f32 %v1851, 0.0
        %v1884 = vmax.f32 %v1852, 0.0
        %v1885 = vmax.f32 %v1853, 0.0
        %v1886 = vmax.f32 %v1854, 0.0
        %v1887 = vmax.f32 %v1855, 0.0
        %v1888 = vmax.f32 %v1856, 0.0
        %v1889 = vmax.f32 %v1857, 0.0
        %v1890 = vmax.f32 %v1858, 0.0
        %v1891 = vmax.f32 %v1859, 0.0
        %v1892 = vmax.f32 %v1860, 0.0
        %v1893 = vmax.f32 %v1861, 0.0
        %v1894 = vmax.f32 %v1862, 0.0
        %v1895 = vmax.f32 %v1863, 0.0
        %v1896 = vmax.f32 %v1864, 0.0
        %v1897 = vmax.f32 %v1865, 0.0
        %v1898 = vmax.f32 %v1866, 0.0
        %v1899 = vmax.f32 %v1867, 0.0
        %v1900 = vmax.f32 %v1868, 0.0
        %v1901 = vmax.f32 %v1869, 0.0
        %v1902 = vmax.f32 %v1870, 0.0
        %v1903 = vmax.f32 %v1871, 0.0
        %v1904 = vmax.f32 %v1872, 0.0
        %v1905 = vmax.f32 %v1873, 0.0
        %v1906 = vmax.f32 %v1874, 0.0
        %v1907 = vmax.f32 %v1875, 0.0
        %v1908 = vmax.f32 %v1876, 0.0
        %v1909 = vmax.f32 %v1877, 0.0
        %v1910 = vmax.f32 %v1878, 0.0
        %v1911 = vmax.f32 %v1879, 0.0
        %v1912 = vmax.f32 %v1880, 0.0
        %v1913 = vmax.f32 %v1881, 0.0
        %s1914 = sadd.s32 %s589, 1
        %s1915 = scalar_lea.vmem %s1, %s1914
        %v1916 = vld [vmem:[%s1915] sm:$0xff]
        %v1917 = vld [vmem:[%s1915 + $0x8] sm:$0xff]
        %v1920 = vcombine.high %v1916, %v1916
        %v1922 = vunpack.c.l.s4 1966171168
        %v1923 = vunpack.c.0.s8 %v1922
        %v1924 = vlaneseq
        %v1925 = vshrl.u32 %v1924, 7
        %v1926 = vsub.s32 %v1923, %v1925
        %v1927 = vrot.slane %v1916, %v1926
        %v1929 = vunpack.c.l.s4 1966171168
        %v1930 = vunpack.c.0.s8 %v1929
        %v1931 = vlaneseq
        %v1932 = vshrl.u32 %v1931, 7
        %v1933 = vsub.s32 %v1930, %v1932
        %v1934 = vrot.slane %v1920, %v1933
        %v1935 = vcombine.high %v1927, %v1927
        %v1936 = vcombine.high %v1934, %v1934
        %v1938 = vunpack.c.l.s4 1966171168
        %v1939 = vunpack.c.0.s8 %v1938
        %v1940 = vlaneseq
        %v1941 = vshrl.u32 %v1940, 7
        %v1942 = vsub.s32 %v1939, %v1941
        %v1943 = vrot.slane %v1927, %v1942
        %v1945 = vunpack.c.l.s4 1966171168
        %v1946 = vunpack.c.0.s8 %v1945
        %v1947 = vlaneseq
        %v1948 = vshrl.u32 %v1947, 7
        %v1949 = vsub.s32 %v1946, %v1948
        %v1950 = vrot.slane %v1934, %v1949
        %v1952 = vunpack.c.l.s4 1966171168
        %v1953 = vunpack.c.0.s8 %v1952
        %v1954 = vlaneseq
        %v1955 = vshrl.u32 %v1954, 7
        %v1956 = vsub.s32 %v1953, %v1955
        %v1957 = vrot.slane %v1935, %v1956
        %v1959 = vunpack.c.l.s4 1966171168
        %v1960 = vunpack.c.0.s8 %v1959
        %v1961 = vlaneseq
        %v1962 = vshrl.u32 %v1961, 7
        %v1963 = vsub.s32 %v1960, %v1962
        %v1964 = vrot.slane %v1936, %v1963
        %v1965 = vcombine.high %v1943, %v1943
        %v1966 = vcombine.high %v1950, %v1950
        %v1967 = vcombine.high %v1957, %v1957
        %v1968 = vcombine.high %v1964, %v1964
        %v1969 = vcombine.high %v1917, %v1917
        %v1971 = vunpack.c.l.s4 1966171168
        %v1972 = vunpack.c.0.s8 %v1971
        %v1973 = vlaneseq
        %v1974 = vshrl.u32 %v1973, 7
        %v1975 = vsub.s32 %v1972, %v1974
        %v1976 = vrot.slane %v1917, %v1975
        %v1978 = vunpack.c.l.s4 1966171168
        %v1979 = vunpack.c.0.s8 %v1978
        %v1980 = vlaneseq
        %v1981 = vshrl.u32 %v1980, 7
        %v1982 = vsub.s32 %v1979, %v1981
        %v1983 = vrot.slane %v1969, %v1982
        %v1984 = vcombine.high %v1976, %v1976
        %v1985 = vcombine.high %v1983, %v1983
        %v1987 = vunpack.c.l.s4 1966171168
        %v1988 = vunpack.c.0.s8 %v1987
        %v1989 = vlaneseq
        %v1990 = vshrl.u32 %v1989, 7
        %v1991 = vsub.s32 %v1988, %v1990
        %v1992 = vrot.slane %v1976, %v1991
        %v1994 = vunpack.c.l.s4 1966171168
        %v1995 = vunpack.c.0.s8 %v1994
        %v1996 = vlaneseq
        %v1997 = vshrl.u32 %v1996, 7
        %v1998 = vsub.s32 %v1995, %v1997
        %v1999 = vrot.slane %v1983, %v1998
        %v2001 = vunpack.c.l.s4 1966171168
        %v2002 = vunpack.c.0.s8 %v2001
        %v2003 = vlaneseq
        %v2004 = vshrl.u32 %v2003, 7
        %v2005 = vsub.s32 %v2002, %v2004
        %v2006 = vrot.slane %v1984, %v2005
        %v2008 = vunpack.c.l.s4 1966171168
        %v2009 = vunpack.c.0.s8 %v2008
        %v2010 = vlaneseq
        %v2011 = vshrl.u32 %v2010, 7
        %v2012 = vsub.s32 %v2009, %v2011
        %v2013 = vrot.slane %v1985, %v2012
        %v2014 = vcombine.high %v1992, %v1992
        %v2015 = vcombine.high %v1999, %v1999
        %v2016 = vcombine.high %v2006, %v2006
        %v2017 = vcombine.high %v2013, %v2013
        %v2018 = vlaneseq
        %v2019 = vshrl.u32 %v2018, 7
        %v2020 = vsub.s32 0, %v2019
        %v2021 = vrot.slane %v1943, %v2020
        %v2022 = vlaneseq
        %v2023 = vshrl.u32 %v2022, 7
        %v2024 = vsub.s32 0, %v2023
        %v2025 = vrot.slane %v1957, %v2024
        %v2026 = vlaneseq
        %v2027 = vshrl.u32 %v2026, 7
        %v2028 = vsub.s32 0, %v2027
        %v2029 = vrot.slane %v1965, %v2028
        %v2030 = vlaneseq
        %v2031 = vshrl.u32 %v2030, 7
        %v2032 = vsub.s32 0, %v2031
        %v2033 = vrot.slane %v1967, %v2032
        %v2034 = vlaneseq
        %v2035 = vshrl.u32 %v2034, 7
        %v2036 = vsub.s32 0, %v2035
        %v2037 = vrot.slane %v1950, %v2036
        %v2038 = vlaneseq
        %v2039 = vshrl.u32 %v2038, 7
        %v2040 = vsub.s32 0, %v2039
        %v2041 = vrot.slane %v1964, %v2040
        %v2042 = vlaneseq
        %v2043 = vshrl.u32 %v2042, 7
        %v2044 = vsub.s32 0, %v2043
        %v2045 = vrot.slane %v1966, %v2044
        %v2046 = vlaneseq
        %v2047 = vshrl.u32 %v2046, 7
        %v2048 = vsub.s32 0, %v2047
        %v2049 = vrot.slane %v1968, %v2048
        %v2050 = vlaneseq
        %v2051 = vshrl.u32 %v2050, 7
        %v2052 = vsub.s32 0, %v2051
        %v2053 = vrot.slane %v1992, %v2052
        %v2054 = vlaneseq
        %v2055 = vshrl.u32 %v2054, 7
        %v2056 = vsub.s32 0, %v2055
        %v2057 = vrot.slane %v2006, %v2056
        %v2058 = vlaneseq
        %v2059 = vshrl.u32 %v2058, 7
        %v2060 = vsub.s32 0, %v2059
        %v2061 = vrot.slane %v2014, %v2060
        %v2062 = vlaneseq
        %v2063 = vshrl.u32 %v2062, 7
        %v2064 = vsub.s32 0, %v2063
        %v2065 = vrot.slane %v2016, %v2064
        %v2066 = vlaneseq
        %v2067 = vshrl.u32 %v2066, 7
        %v2068 = vsub.s32 0, %v2067
        %v2069 = vrot.slane %v1999, %v2068
        %v2070 = vlaneseq
        %v2071 = vshrl.u32 %v2070, 7
        %v2072 = vsub.s32 0, %v2071
        %v2073 = vrot.slane %v2013, %v2072
        %v2074 = vlaneseq
        %v2075 = vshrl.u32 %v2074, 7
        %v2076 = vsub.s32 0, %v2075
        %v2077 = vrot.slane %v2015, %v2076
        %v2078 = vlaneseq
        %v2079 = vshrl.u32 %v2078, 7
        %v2080 = vsub.s32 0, %v2079
        %v2081 = vrot.slane %v2017, %v2080
        %2082 = vset.pattern.permute.xlu0 0
        %2083 = vperm.xlu0 %2082, %v2021
        %v2084 = vpop.permute.xlu0 %2083
        %2086 = vset.pattern.permute.xlu0 0
        %2087 = vperm.xlu0 %2086, %v2025
        %v2088 = vpop.permute.xlu0 %2087
        %2090 = vset.pattern.permute.xlu0 0
        %2091 = vperm.xlu0 %2090, %v2029
        %v2092 = vpop.permute.xlu0 %2091
        %2094 = vset.pattern.permute.xlu0 0
        %2095 = vperm.xlu0 %2094, %v2033
        %v2096 = vpop.permute.xlu0 %2095
        %2098 = vset.pattern.permute.xlu0 0
        %2099 = vperm.xlu0 %2098, %v2037
        %v2100 = vpop.permute.xlu0 %2099
        %2102 = vset.pattern.permute.xlu0 0
        %2103 = vperm.xlu0 %2102, %v2041
        %v2104 = vpop.permute.xlu0 %2103
        %2106 = vset.pattern.permute.xlu0 0
        %2107 = vperm.xlu0 %2106, %v2045
        %v2108 = vpop.permute.xlu0 %2107
        %2110 = vset.pattern.permute.xlu0 0
        %2111 = vperm.xlu0 %2110, %v2049
        %v2112 = vpop.permute.xlu0 %2111
        %2114 = vset.pattern.permute.xlu0 0
        %2115 = vperm.xlu0 %2114, %v2053
        %v2116 = vpop.permute.xlu0 %2115
        %2118 = vset.pattern.permute.xlu0 0
        %2119 = vperm.xlu0 %2118, %v2057
        %v2120 = vpop.permute.xlu0 %2119
        %2122 = vset.pattern.permute.xlu0 0
        %2123 = vperm.xlu0 %2122, %v2061
        %v2124 = vpop.permute.xlu0 %2123
        %2126 = vset.pattern.permute.xlu0 0
        %2127 = vperm.xlu0 %2126, %v2065
        %v2128 = vpop.permute.xlu0 %2127
        %2130 = vset.pattern.permute.xlu0 0
        %2131 = vperm.xlu0 %2130, %v2069
        %v2132 = vpop.permute.xlu0 %2131
        %2134 = vset.pattern.permute.xlu0 0
        %2135 = vperm.xlu0 %2134, %v2073
        %v2136 = vpop.permute.xlu0 %2135
        %2138 = vset.pattern.permute.xlu0 0
        %2139 = vperm.xlu0 %2138, %v2077
        %v2140 = vpop.permute.xlu0 %2139
        %2142 = vset.pattern.permute.xlu0 0
        %2143 = vperm.xlu0 %2142, %v2081
        %v2144 = vpop.permute.xlu0 %2143
        %v2146 = vmul.f32 %v1882, %v2084
        %v2147 = vmul.f32 %v1883, %v2084
        %v2148 = vmul.f32 %v1884, %v2088
        %v2149 = vmul.f32 %v1885, %v2088
        %v2150 = vmul.f32 %v1886, %v2092
        %v2151 = vmul.f32 %v1887, %v2092
        %v2152 = vmul.f32 %v1888, %v2096
        %v2153 = vmul.f32 %v1889, %v2096
        %v2154 = vmul.f32 %v1890, %v2100
        %v2155 = vmul.f32 %v1891, %v2100
        %v2156 = vmul.f32 %v1892, %v2104
        %v2157 = vmul.f32 %v1893, %v2104
        %v2158 = vmul.f32 %v1894, %v2108
        %v2159 = vmul.f32 %v1895, %v2108
        %v2160 = vmul.f32 %v1896, %v2112
        %v2161 = vmul.f32 %v1897, %v2112
        %v2162 = vmul.f32 %v1898, %v2116
        %v2163 = vmul.f32 %v1899, %v2116
        %v2164 = vmul.f32 %v1900, %v2120
        %v2165 = vmul.f32 %v1901, %v2120
        %v2166 = vmul.f32 %v1902, %v2124
        %v2167 = vmul.f32 %v1903, %v2124
        %v2168 = vmul.f32 %v1904, %v2128
        %v2169 = vmul.f32 %v1905, %v2128
        %v2170 = vmul.f32 %v1906, %v2132
        %v2171 = vmul.f32 %v1907, %v2132
        %v2172 = vmul.f32 %v1908, %v2136
        %v2173 = vmul.f32 %v1909, %v2136
        %v2174 = vmul.f32 %v1910, %v2140
        %v2175 = vmul.f32 %v1911, %v2140
        %v2176 = vmul.f32 %v1912, %v2144
        %v2177 = vmul.f32 %v1913, %v2144
        %v2178 = vpack.c.bf16 %v2147, %v2146
        %v2179 = vpack.c.bf16 %v2149, %v2148
        %v2180 = vpack.c.bf16 %v2151, %v2150
        %v2181 = vpack.c.bf16 %v2153, %v2152
        %v2182 = vpack.c.bf16 %v2155, %v2154
        %v2183 = vpack.c.bf16 %v2157, %v2156
        %v2184 = vpack.c.bf16 %v2159, %v2158
        %v2185 = vpack.c.bf16 %v2161, %v2160
        %v2186 = vpack.c.bf16 %v2163, %v2162
        %v2187 = vpack.c.bf16 %v2165, %v2164
        %v2188 = vpack.c.bf16 %v2167, %v2166
        %v2189 = vpack.c.bf16 %v2169, %v2168
        %v2190 = vpack.c.bf16 %v2171, %v2170
        %v2191 = vpack.c.bf16 %v2173, %v2172
        %v2192 = vpack.c.bf16 %v2175, %v2174
        %v2193 = vpack.c.bf16 %v2177, %v2176
        %v2195 = vshrl.u32 %v2178, 16
        %v2197 = vrot.slane %v2195, 7
        %v2198 = vshll.u32 %v2178, 16
        %v2200 = vor.u32 %v2197, %v2198
        %v2202 = vshrl.u32 %v2179, 16
        %v2204 = vrot.slane %v2202, 7
        %v2205 = vshll.u32 %v2179, 16
        %v2207 = vor.u32 %v2204, %v2205
        %v2209 = vshrl.u32 %v2180, 16
        %v2211 = vrot.slane %v2209, 7
        %v2212 = vshll.u32 %v2180, 16
        %v2214 = vor.u32 %v2211, %v2212
        %v2216 = vshrl.u32 %v2181, 16
        %v2218 = vrot.slane %v2216, 7
        %v2219 = vshll.u32 %v2181, 16
        %v2221 = vor.u32 %v2218, %v2219
        %v2223 = vshrl.u32 %v2182, 16
        %v2225 = vrot.slane %v2223, 7
        %v2226 = vshll.u32 %v2182, 16
        %v2228 = vor.u32 %v2225, %v2226
        %v2230 = vshrl.u32 %v2183, 16
        %v2232 = vrot.slane %v2230, 7
        %v2233 = vshll.u32 %v2183, 16
        %v2235 = vor.u32 %v2232, %v2233
        %v2237 = vshrl.u32 %v2184, 16
        %v2239 = vrot.slane %v2237, 7
        %v2240 = vshll.u32 %v2184, 16
        %v2242 = vor.u32 %v2239, %v2240
        %v2244 = vshrl.u32 %v2185, 16
        %v2246 = vrot.slane %v2244, 7
        %v2247 = vshll.u32 %v2185, 16
        %v2249 = vor.u32 %v2246, %v2247
        %v2251 = vshrl.u32 %v2186, 16
        %v2253 = vrot.slane %v2251, 7
        %v2254 = vshll.u32 %v2186, 16
        %v2256 = vor.u32 %v2253, %v2254
        %v2258 = vshrl.u32 %v2187, 16
        %v2260 = vrot.slane %v2258, 7
        %v2261 = vshll.u32 %v2187, 16
        %v2263 = vor.u32 %v2260, %v2261
        %v2265 = vshrl.u32 %v2188, 16
        %v2267 = vrot.slane %v2265, 7
        %v2268 = vshll.u32 %v2188, 16
        %v2270 = vor.u32 %v2267, %v2268
        %v2272 = vshrl.u32 %v2189, 16
        %v2274 = vrot.slane %v2272, 7
        %v2275 = vshll.u32 %v2189, 16
        %v2277 = vor.u32 %v2274, %v2275
        %v2279 = vshrl.u32 %v2190, 16
        %v2281 = vrot.slane %v2279, 7
        %v2282 = vshll.u32 %v2190, 16
        %v2284 = vor.u32 %v2281, %v2282
        %v2286 = vshrl.u32 %v2191, 16
        %v2288 = vrot.slane %v2286, 7
        %v2289 = vshll.u32 %v2191, 16
        %v2291 = vor.u32 %v2288, %v2289
        %v2293 = vshrl.u32 %v2192, 16
        %v2295 = vrot.slane %v2293, 7
        %v2296 = vshll.u32 %v2192, 16
        %v2298 = vor.u32 %v2295, %v2296
        %v2300 = vshrl.u32 %v2193, 16
        %v2302 = vrot.slane %v2300, 7
        %v2303 = vshll.u32 %v2193, 16
        %v2305 = vor.u32 %v2302, %v2303
        %v2338 = vsel %vm810, 0, %v2200
        %v2339 = vsel %vm810, 0, %v2207
        %v2340 = vsel %vm810, 0, %v2214
        %v2341 = vsel %vm810, 0, %v2221
        %v2342 = vsel %vm810, 0, %v2228
        %v2343 = vsel %vm810, 0, %v2235
        %v2344 = vsel %vm810, 0, %v2242
        %v2345 = vsel %vm810, 0, %v2249
        %v2346 = vsel %vm810, 0, %v2256
        %v2347 = vsel %vm810, 0, %v2263
        %v2348 = vsel %vm810, 0, %v2270
        %v2349 = vsel %vm810, 0, %v2277
        %v2350 = vsel %vm810, 0, %v2284
        %v2351 = vsel %vm810, 0, %v2291
        %v2352 = vsel %vm810, 0, %v2298
        %v2353 = vsel %vm810, 0, %v2305
        %v2354 = vsel %vm810, %v2197, 0
        %v2355 = vsel %vm810, %v2204, 0
        %v2356 = vsel %vm810, %v2211, 0
        %v2357 = vsel %vm810, %v2218, 0
        %v2358 = vsel %vm810, %v2225, 0
        %v2359 = vsel %vm810, %v2232, 0
        %v2360 = vsel %vm810, %v2239, 0
        %v2361 = vsel %vm810, %v2246, 0
        %v2362 = vsel %vm810, %v2253, 0
        %v2363 = vsel %vm810, %v2260, 0
        %v2364 = vsel %vm810, %v2267, 0
        %v2365 = vsel %vm810, %v2274, 0
        %v2366 = vsel %vm810, %v2281, 0
        %v2367 = vsel %vm810, %v2288, 0
        %v2368 = vsel %vm810, %v2295, 0
        %v2369 = vsel %vm810, %v2302, 0
        %v2371 = vshrl.u32 %v2338, 16
        %v2373 = vshll.u32 %v2338, 16
        %v2375 = vrot.slane %v2373, 1
        %v2376 = vor.u32 %v2371, %v2375
        %v2378 = vshll.u32 %v2354, 16
        %v2380 = vrot.slane %v2378, 1
        %v2381 = vsel %vm847, %v2376, %v2380
        %v2383 = vshrl.u32 %v2339, 16
        %v2385 = vshll.u32 %v2339, 16
        %v2387 = vrot.slane %v2385, 1
        %v2388 = vor.u32 %v2383, %v2387
        %v2390 = vshll.u32 %v2355, 16
        %v2392 = vrot.slane %v2390, 1
        %v2393 = vsel %vm847, %v2388, %v2392
        %v2395 = vshrl.u32 %v2340, 16
        %v2397 = vshll.u32 %v2340, 16
        %v2399 = vrot.slane %v2397, 1
        %v2400 = vor.u32 %v2395, %v2399
        %v2402 = vshll.u32 %v2356, 16
        %v2404 = vrot.slane %v2402, 1
        %v2405 = vsel %vm847, %v2400, %v2404
        %v2407 = vshrl.u32 %v2341, 16
        %v2409 = vshll.u32 %v2341, 16
        %v2411 = vrot.slane %v2409, 1
        %v2412 = vor.u32 %v2407, %v2411
        %v2414 = vshll.u32 %v2357, 16
        %v2416 = vrot.slane %v2414, 1
        %v2417 = vsel %vm847, %v2412, %v2416
        %v2419 = vshrl.u32 %v2342, 16
        %v2421 = vshll.u32 %v2342, 16
        %v2423 = vrot.slane %v2421, 1
        %v2424 = vor.u32 %v2419, %v2423
        %v2426 = vshll.u32 %v2358, 16
        %v2428 = vrot.slane %v2426, 1
        %v2429 = vsel %vm847, %v2424, %v2428
        %v2431 = vshrl.u32 %v2343, 16
        %v2433 = vshll.u32 %v2343, 16
        %v2435 = vrot.slane %v2433, 1
        %v2436 = vor.u32 %v2431, %v2435
        %v2438 = vshll.u32 %v2359, 16
        %v2440 = vrot.slane %v2438, 1
        %v2441 = vsel %vm847, %v2436, %v2440
        %v2443 = vshrl.u32 %v2344, 16
        %v2445 = vshll.u32 %v2344, 16
        %v2447 = vrot.slane %v2445, 1
        %v2448 = vor.u32 %v2443, %v2447
        %v2450 = vshll.u32 %v2360, 16
        %v2452 = vrot.slane %v2450, 1
        %v2453 = vsel %vm847, %v2448, %v2452
        %v2455 = vshrl.u32 %v2345, 16
        %v2457 = vshll.u32 %v2345, 16
        %v2459 = vrot.slane %v2457, 1
        %v2460 = vor.u32 %v2455, %v2459
        %v2462 = vshll.u32 %v2361, 16
        %v2464 = vrot.slane %v2462, 1
        %v2465 = vsel %vm847, %v2460, %v2464
        %v2467 = vshrl.u32 %v2346, 16
        %v2469 = vshll.u32 %v2346, 16
        %v2471 = vrot.slane %v2469, 1
        %v2472 = vor.u32 %v2467, %v2471
        %v2474 = vshll.u32 %v2362, 16
        %v2476 = vrot.slane %v2474, 1
        %v2477 = vsel %vm847, %v2472, %v2476
        %v2479 = vshrl.u32 %v2347, 16
        %v2481 = vshll.u32 %v2347, 16
        %v2483 = vrot.slane %v2481, 1
        %v2484 = vor.u32 %v2479, %v2483
        %v2486 = vshll.u32 %v2363, 16
        %v2488 = vrot.slane %v2486, 1
        %v2489 = vsel %vm847, %v2484, %v2488
        %v2491 = vshrl.u32 %v2348, 16
        %v2493 = vshll.u32 %v2348, 16
        %v2495 = vrot.slane %v2493, 1
        %v2496 = vor.u32 %v2491, %v2495
        %v2498 = vshll.u32 %v2364, 16
        %v2500 = vrot.slane %v2498, 1
        %v2501 = vsel %vm847, %v2496, %v2500
        %v2503 = vshrl.u32 %v2349, 16
        %v2505 = vshll.u32 %v2349, 16
        %v2507 = vrot.slane %v2505, 1
        %v2508 = vor.u32 %v2503, %v2507
        %v2510 = vshll.u32 %v2365, 16
        %v2512 = vrot.slane %v2510, 1
        %v2513 = vsel %vm847, %v2508, %v2512
        %v2515 = vshrl.u32 %v2350, 16
        %v2517 = vshll.u32 %v2350, 16
        %v2519 = vrot.slane %v2517, 1
        %v2520 = vor.u32 %v2515, %v2519
        %v2522 = vshll.u32 %v2366, 16
        %v2524 = vrot.slane %v2522, 1
        %v2525 = vsel %vm847, %v2520, %v2524
        %v2527 = vshrl.u32 %v2351, 16
        %v2529 = vshll.u32 %v2351, 16
        %v2531 = vrot.slane %v2529, 1
        %v2532 = vor.u32 %v2527, %v2531
        %v2534 = vshll.u32 %v2367, 16
        %v2536 = vrot.slane %v2534, 1
        %v2537 = vsel %vm847, %v2532, %v2536
        %v2539 = vshrl.u32 %v2352, 16
        %v2541 = vshll.u32 %v2352, 16
        %v2543 = vrot.slane %v2541, 1
        %v2544 = vor.u32 %v2539, %v2543
        %v2546 = vshll.u32 %v2368, 16
        %v2548 = vrot.slane %v2546, 1
        %v2549 = vsel %vm847, %v2544, %v2548
        %v2551 = vshrl.u32 %v2353, 16
        %v2553 = vshll.u32 %v2353, 16
        %v2555 = vrot.slane %v2553, 1
        %v2556 = vor.u32 %v2551, %v2555
        %v2558 = vshll.u32 %v2369, 16
        %v2560 = vrot.slane %v2558, 1
        %v2561 = vsel %vm847, %v2556, %v2560
        %2562 = vrot.lane.b32.xlu0 %v2381, 64
        %v2563 = vpop.permute.xlu0 %2562
        %2564 = vrot.lane.b32.xlu0 %v2393, 64
        %v2565 = vpop.permute.xlu0 %2564
        %2566 = vrot.lane.b32.xlu0 %v2405, 64
        %v2567 = vpop.permute.xlu0 %2566
        %2568 = vrot.lane.b32.xlu0 %v2417, 64
        %v2569 = vpop.permute.xlu0 %2568
        %2570 = vrot.lane.b32.xlu0 %v2429, 64
        %v2571 = vpop.permute.xlu0 %2570
        %2572 = vrot.lane.b32.xlu0 %v2441, 64
        %v2573 = vpop.permute.xlu0 %2572
        %2574 = vrot.lane.b32.xlu0 %v2453, 64
        %v2575 = vpop.permute.xlu0 %2574
        %2576 = vrot.lane.b32.xlu0 %v2465, 64
        %v2577 = vpop.permute.xlu0 %2576
        %2578 = vrot.lane.b32.xlu0 %v2477, 64
        %v2579 = vpop.permute.xlu0 %2578
        %2580 = vrot.lane.b32.xlu0 %v2489, 64
        %v2581 = vpop.permute.xlu0 %2580
        %2582 = vrot.lane.b32.xlu0 %v2501, 64
        %v2583 = vpop.permute.xlu0 %2582
        %2584 = vrot.lane.b32.xlu0 %v2513, 64
        %v2585 = vpop.permute.xlu0 %2584
        %2586 = vrot.lane.b32.xlu0 %v2525, 64
        %v2587 = vpop.permute.xlu0 %2586
        %2588 = vrot.lane.b32.xlu0 %v2537, 64
        %v2589 = vpop.permute.xlu0 %2588
        %2590 = vrot.lane.b32.xlu0 %v2549, 64
        %v2591 = vpop.permute.xlu0 %2590
        %2592 = vrot.lane.b32.xlu0 %v2561, 64
        %v2593 = vpop.permute.xlu0 %2592
        %v2626 = vrot.slane %v2338, 1
        %v2627 = vrot.slane %v2354, 1
        %v2628 = vsel %vm1136, %v2626, %v2627
        %v2629 = vrot.slane %v2339, 1
        %v2630 = vrot.slane %v2355, 1
        %v2631 = vsel %vm1136, %v2629, %v2630
        %v2632 = vrot.slane %v2340, 1
        %v2633 = vrot.slane %v2356, 1
        %v2634 = vsel %vm1136, %v2632, %v2633
        %v2635 = vrot.slane %v2341, 1
        %v2636 = vrot.slane %v2357, 1
        %v2637 = vsel %vm1136, %v2635, %v2636
        %v2638 = vrot.slane %v2342, 1
        %v2639 = vrot.slane %v2358, 1
        %v2640 = vsel %vm1136, %v2638, %v2639
        %v2641 = vrot.slane %v2343, 1
        %v2642 = vrot.slane %v2359, 1
        %v2643 = vsel %vm1136, %v2641, %v2642
        %v2644 = vrot.slane %v2344, 1
        %v2645 = vrot.slane %v2360, 1
        %v2646 = vsel %vm1136, %v2644, %v2645
        %v2647 = vrot.slane %v2345, 1
        %v2648 = vrot.slane %v2361, 1
        %v2649 = vsel %vm1136, %v2647, %v2648
        %v2650 = vrot.slane %v2346, 1
        %v2651 = vrot.slane %v2362, 1
        %v2652 = vsel %vm1136, %v2650, %v2651
        %v2653 = vrot.slane %v2347, 1
        %v2654 = vrot.slane %v2363, 1
        %v2655 = vsel %vm1136, %v2653, %v2654
        %v2656 = vrot.slane %v2348, 1
        %v2657 = vrot.slane %v2364, 1
        %v2658 = vsel %vm1136, %v2656, %v2657
        %v2659 = vrot.slane %v2349, 1
        %v2660 = vrot.slane %v2365, 1
        %v2661 = vsel %vm1136, %v2659, %v2660
        %v2662 = vrot.slane %v2350, 1
        %v2663 = vrot.slane %v2366, 1
        %v2664 = vsel %vm1136, %v2662, %v2663
        %v2665 = vrot.slane %v2351, 1
        %v2666 = vrot.slane %v2367, 1
        %v2667 = vsel %vm1136, %v2665, %v2666
        %v2668 = vrot.slane %v2352, 1
        %v2669 = vrot.slane %v2368, 1
        %v2670 = vsel %vm1136, %v2668, %v2669
        %v2671 = vrot.slane %v2353, 1
        %v2672 = vrot.slane %v2369, 1
        %v2673 = vsel %vm1136, %v2671, %v2672
        %v2675 = vsel %vm1191, %v2338, %v2563
        %v2678 = vsel %vm1191, %v2339, %v2565
        %v2681 = vsel %vm1191, %v2340, %v2567
        %v2684 = vsel %vm1191, %v2341, %v2569
        %v2687 = vsel %vm1191, %v2342, %v2571
        %v2690 = vsel %vm1191, %v2343, %v2573
        %v2693 = vsel %vm1191, %v2344, %v2575
        %v2696 = vsel %vm1191, %v2345, %v2577
        %v2699 = vsel %vm1191, %v2346, %v2579
        %v2702 = vsel %vm1191, %v2347, %v2581
        %v2705 = vsel %vm1191, %v2348, %v2583
        %v2708 = vsel %vm1191, %v2349, %v2585
        %v2711 = vsel %vm1191, %v2350, %v2587
        %v2714 = vsel %vm1191, %v2351, %v2589
        %v2717 = vsel %vm1191, %v2352, %v2591
        %v2720 = vsel %vm1191, %v2353, %v2593
        %v2722 = vld [vmem:[#allocation7] sm:$0xff]
        %v2723 = vld [vmem:[#allocation7 + $0x8] sm:$0xff]
        %v2724 = vld [vmem:[#allocation7 + $0x10] sm:$0xff]
        %v2725 = vld [vmem:[#allocation7 + $0x18] sm:$0xff]
        %v2726 = vld [vmem:[#allocation7 + $0x20] sm:$0xff]
        %v2727 = vld [vmem:[#allocation7 + $0x28] sm:$0xff]
        %v2728 = vld [vmem:[#allocation7 + $0x30] sm:$0xff]
        %v2729 = vld [vmem:[#allocation7 + $0x38] sm:$0xff]
        %v2730 = vld [vmem:[#allocation7 + $0x40] sm:$0xff]
        %v2731 = vld [vmem:[#allocation7 + $0x48] sm:$0xff]
        %v2732 = vld [vmem:[#allocation7 + $0x50] sm:$0xff]
        %v2733 = vld [vmem:[#allocation7 + $0x58] sm:$0xff]
        %v2734 = vld [vmem:[#allocation7 + $0x60] sm:$0xff]
        %v2735 = vld [vmem:[#allocation7 + $0x68] sm:$0xff]
        %v2736 = vld [vmem:[#allocation7 + $0x70] sm:$0xff]
        %v2737 = vld [vmem:[#allocation7 + $0x78] sm:$0xff]
        %v2738 = vld [vmem:[#allocation7 + $0x80] sm:$0xff]
        %v2739 = vld [vmem:[#allocation7 + $0x88] sm:$0xff]
        %v2740 = vld [vmem:[#allocation7 + $0x90] sm:$0xff]
        %v2741 = vld [vmem:[#allocation7 + $0x98] sm:$0xff]
        %v2742 = vld [vmem:[#allocation7 + $0xa0] sm:$0xff]
        %v2743 = vld [vmem:[#allocation7 + $0xa8] sm:$0xff]
        %v2744 = vld [vmem:[#allocation7 + $0xb0] sm:$0xff]
        %v2745 = vld [vmem:[#allocation7 + $0xb8] sm:$0xff]
        %v2770 = vunpack.c.l.b16 %v2722
        %v2771 = vunpack.c.h.b16 %v2722
        %v2772 = vunpack.c.l.b16 %v2723
        %v2773 = vunpack.c.h.b16 %v2723
        %v2774 = vunpack.c.l.b16 %v2724
        %v2775 = vunpack.c.h.b16 %v2724
        %v2776 = vunpack.c.l.b16 %v2725
        %v2777 = vunpack.c.h.b16 %v2725
        %v2778 = vunpack.c.l.b16 %v2726
        %v2779 = vunpack.c.h.b16 %v2726
        %v2780 = vunpack.c.l.b16 %v2727
        %v2781 = vunpack.c.h.b16 %v2727
        %v2782 = vunpack.c.l.b16 %v2728
        %v2783 = vunpack.c.h.b16 %v2728
        %v2784 = vunpack.c.l.b16 %v2729
        %v2785 = vunpack.c.h.b16 %v2729
        %v2786 = vunpack.c.l.b16 %v2730
        %v2787 = vunpack.c.h.b16 %v2730
        %v2788 = vunpack.c.l.b16 %v2731
        %v2789 = vunpack.c.h.b16 %v2731
        %v2790 = vunpack.c.l.b16 %v2732
        %v2791 = vunpack.c.h.b16 %v2732
        %v2792 = vunpack.c.l.b16 %v2733
        %v2793 = vunpack.c.h.b16 %v2733
        %v2794 = vunpack.c.l.b16 %v2734
        %v2795 = vunpack.c.h.b16 %v2734
        %v2796 = vunpack.c.l.b16 %v2735
        %v2797 = vunpack.c.h.b16 %v2735
        %v2798 = vunpack.c.l.b16 %v2736
        %v2799 = vunpack.c.h.b16 %v2736
        %v2800 = vunpack.c.l.b16 %v2737
        %v2801 = vunpack.c.h.b16 %v2737
        %v2802 = vunpack.c.l.b16 %v2738
        %v2803 = vunpack.c.h.b16 %v2738
        %v2804 = vunpack.c.l.b16 %v2739
        %v2805 = vunpack.c.h.b16 %v2739
        %v2806 = vunpack.c.l.b16 %v2740
        %v2807 = vunpack.c.h.b16 %v2740
        %v2808 = vunpack.c.l.b16 %v2741
        %v2809 = vunpack.c.h.b16 %v2741
        %v2810 = vunpack.c.l.b16 %v2742
        %v2811 = vunpack.c.h.b16 %v2742
        %v2812 = vunpack.c.l.b16 %v2743
        %v2813 = vunpack.c.h.b16 %v2743
        %v2814 = vunpack.c.l.b16 %v2744
        %v2815 = vunpack.c.h.b16 %v2744
        %v2816 = vunpack.c.l.b16 %v2745
        %v2817 = vunpack.c.h.b16 %v2745
        %v2818 = vpack.c.b16 %v2772, %v2770
        %v2819 = vpack.c.b16 %v2773, %v2771
        %v2820 = vpack.c.b16 %v2776, %v2774
        %v2821 = vpack.c.b16 %v2777, %v2775
        %v2822 = vpack.c.b16 %v2780, %v2778
        %v2823 = vpack.c.b16 %v2781, %v2779
        %v2824 = vpack.c.b16 %v2784, %v2782
        %v2825 = vpack.c.b16 %v2785, %v2783
        %v2826 = vpack.c.b16 %v2788, %v2786
        %v2827 = vpack.c.b16 %v2789, %v2787
        %v2828 = vpack.c.b16 %v2792, %v2790
        %v2829 = vpack.c.b16 %v2793, %v2791
        %v2830 = vpack.c.b16 %v2796, %v2794
        %v2831 = vpack.c.b16 %v2797, %v2795
        %v2832 = vpack.c.b16 %v2800, %v2798
        %v2833 = vpack.c.b16 %v2801, %v2799
        %v2834 = vpack.c.b16 %v2804, %v2802
        %v2835 = vpack.c.b16 %v2805, %v2803
        %v2836 = vpack.c.b16 %v2808, %v2806
        %v2837 = vpack.c.b16 %v2809, %v2807
        %v2838 = vpack.c.b16 %v2812, %v2810
        %v2839 = vpack.c.b16 %v2813, %v2811
        %v2840 = vpack.c.b16 %v2816, %v2814
        %v2841 = vpack.c.b16 %v2817, %v2815
        %v2867 = vsel %vm1191, %v2628, 0
        %v2870 = vsel %vm1191, %v2631, 0
        %v2873 = vsel %vm1191, %v2634, 0
        %v2876 = vsel %vm1191, %v2637, 0
        %v2879 = vsel %vm1191, %v2640, 0
        %v2882 = vsel %vm1191, %v2643, 0
        %v2885 = vsel %vm1191, %v2646, 0
        %v2888 = vsel %vm1191, %v2649, 0
        %v2891 = vsel %vm1191, %v2652, 0
        %v2894 = vsel %vm1191, %v2655, 0
        %v2897 = vsel %vm1191, %v2658, 0
        %v2900 = vsel %vm1191, %v2661, 0
        %v2903 = vsel %vm1191, %v2664, 0
        %v2906 = vsel %vm1191, %v2667, 0
        %v2909 = vsel %vm1191, %v2670, 0
        %v2912 = vsel %vm1191, %v2673, 0
        %2914 = vmatprep.subr.bf16.mxu0 %v2833
        %2915 = vmatpush1.bf16.msra.mxu0 %v2832
        %2916 = vmatprep.subr.bf16.mxu0 %v2831
        %2917 = vmatpush1.bf16.msra.mxu0 %v2830
        %2918 = vmatprep.subr.bf16.mxu0 %v2829
        %2919 = vmatpush1.bf16.msra.mxu0 %v2828
        %2920 = vmatprep.subr.bf16.mxu0 %v2827
        %2921 = vmatpush1.bf16.msra.mxu0 %v2826
        %2922 = vmatprep.subr.bf16.mxu0 %v2825
        %2923 = vmatpush1.bf16.msra.mxu0 %v2824
        %2924 = vmatprep.subr.bf16.mxu0 %v2823
        %2925 = vmatpush1.bf16.msra.mxu0 %v2822
        %2926 = vmatprep.subr.bf16.mxu0 %v2821
        %2927 = vmatpush1.bf16.msra.mxu0 %v2820
        %2928 = vmatprep.subr.bf16.mxu0 %v2819
        %2929 = vmatpush1.bf16.msra.mxu0 %v2818
        %2930 = vmatprep.subr.bf16.mxu0 0
        %2931 = vmatpush2.bf16.msra.mxu0 0
        %2932 = vmatprep.subr.bf16.mxu0 0
        %2933 = vmatpush2.bf16.msra.mxu0 0
        %2934 = vmatprep.subr.bf16.mxu0 0
        %2935 = vmatpush2.bf16.msra.mxu0 0
        %2936 = vmatprep.subr.bf16.mxu0 0
        %2937 = vmatpush2.bf16.msra.mxu0 0
        %2938 = vmatprep.subr.bf16.mxu0 %v2841
        %2939 = vmatpush2.bf16.msra.mxu0 %v2840
        %2940 = vmatprep.subr.bf16.mxu0 %v2839
        %2941 = vmatpush2.bf16.msra.mxu0 %v2838
        %2942 = vmatprep.subr.bf16.mxu0 %v2837
        %2943 = vmatpush2.bf16.msra.mxu0 %v2836
        %2944 = vmatprep.subr.bf16.mxu0 %v2835
        %2945 = vmatpush2.bf16.msra.mxu0 %v2834
        %2946 = vmatprep.mubr.bf16.mxu0 %v2867
        %2947 = vmatmul.mubr.bf16.gmra.mxu0 %v2675
        %v2948 = vpop.f32.mrf.mxu0
        %v2949 = vadd.f32 0.0, %v2948
        %v2950 = vpop.f32.mrf.mxu0
        %v2951 = vpop.f32.mrf.mxu0
        %v2952 = vadd.f32 0.0, %v2951
        %v2953 = vpop.f32.mrf.mxu0
        %2954 = vmatprep.mubr.bf16.mxu0 %v2870
        %2955 = vmatmul.mubr.bf16.gmra.mxu0 %v2678
        %v2956 = vpop.f32.mrf.mxu0
        %v2957 = vadd.f32 0.0, %v2956
        %v2958 = vpop.f32.mrf.mxu0
        %v2959 = vpop.f32.mrf.mxu0
        %v2960 = vadd.f32 0.0, %v2959
        %v2961 = vpop.f32.mrf.mxu0
        %2962 = vmatprep.mubr.bf16.mxu0 %v2873
        %2963 = vmatmul.mubr.bf16.gmra.mxu0 %v2681
        %v2964 = vpop.f32.mrf.mxu0
        %v2965 = vadd.f32 0.0, %v2964
        %v2966 = vpop.f32.mrf.mxu0
        %v2967 = vadd.f32 0.0, %v2966
        %v2968 = vpop.f32.mrf.mxu0
        %v2969 = vadd.f32 0.0, %v2968
        %v2970 = vpop.f32.mrf.mxu0
        %v2971 = vadd.f32 0.0, %v2970
        %2972 = vmatprep.mubr.bf16.mxu0 %v2876
        %2973 = vmatmul.mubr.bf16.gmra.mxu0 %v2684
        %v2974 = vpop.f32.mrf.mxu0
        %v2975 = vadd.f32 0.0, %v2974
        %v2976 = vpop.f32.mrf.mxu0
        %v2977 = vadd.f32 0.0, %v2976
        %v2978 = vpop.f32.mrf.mxu0
        %v2979 = vadd.f32 0.0, %v2978
        %v2980 = vpop.f32.mrf.mxu0
        %v2981 = vadd.f32 0.0, %v2980
        %2982 = vmatprep.mubr.bf16.mxu0 %v2879
        %2983 = vmatmul.mubr.bf16.gmra.mxu0 %v2687
        %v2984 = vpop.f32.mrf.mxu0
        %v2985 = vadd.f32 0.0, %v2984
        %v2986 = vpop.f32.mrf.mxu0
        %v2987 = vadd.f32 0.0, %v2986
        %v2988 = vpop.f32.mrf.mxu0
        %v2989 = vadd.f32 0.0, %v2988
        %v2990 = vpop.f32.mrf.mxu0
        %v2991 = vadd.f32 0.0, %v2990
        %2992 = vmatprep.mubr.bf16.mxu0 %v2882
        %2993 = vmatmul.mubr.bf16.gmra.mxu0 %v2690
        %v2994 = vpop.f32.mrf.mxu0
        %v2995 = vadd.f32 0.0, %v2994
        %v2996 = vpop.f32.mrf.mxu0
        %v2997 = vadd.f32 0.0, %v2996
        %v2998 = vpop.f32.mrf.mxu0
        %v2999 = vadd.f32 0.0, %v2998
        %v3000 = vpop.f32.mrf.mxu0
        %v3001 = vadd.f32 0.0, %v3000
        %3002 = vmatprep.mubr.bf16.mxu0 %v2885
        %3003 = vmatmul.mubr.bf16.gmra.mxu0 %v2693
        %v3004 = vpop.f32.mrf.mxu0
        %v3005 = vadd.f32 0.0, %v3004
        %v3006 = vpop.f32.mrf.mxu0
        %v3007 = vadd.f32 0.0, %v3006
        %v3008 = vpop.f32.mrf.mxu0
        %v3009 = vadd.f32 0.0, %v3008
        %v3010 = vpop.f32.mrf.mxu0
        %v3011 = vadd.f32 0.0, %v3010
        %3012 = vmatprep.mubr.bf16.mxu0 %v2888
        %3013 = vmatmul.mubr.bf16.gmra.mxu0 %v2696
        %v3014 = vpop.f32.mrf.mxu0
        %v3015 = vadd.f32 0.0, %v3014
        %v3016 = vpop.f32.mrf.mxu0
        %v3017 = vadd.f32 0.0, %v3016
        %v3018 = vpop.f32.mrf.mxu0
        %v3019 = vadd.f32 0.0, %v3018
        %v3020 = vpop.f32.mrf.mxu0
        %v3021 = vadd.f32 0.0, %v3020
        %3022 = vmatprep.mubr.bf16.mxu0 %v2891
        %3023 = vmatmul.mubr.bf16.gmra.mxu0 %v2699
        %v3024 = vpop.f32.mrf.mxu0
        %v3025 = vadd.f32 0.0, %v3024
        %v3026 = vpop.f32.mrf.mxu0
        %v3027 = vadd.f32 0.0, %v3026
        %v3028 = vpop.f32.mrf.mxu0
        %v3029 = vadd.f32 0.0, %v3028
        %v3030 = vpop.f32.mrf.mxu0
        %v3031 = vadd.f32 0.0, %v3030
        %3032 = vmatprep.mubr.bf16.mxu0 %v2894
        %3033 = vmatmul.mubr.bf16.gmra.mxu0 %v2702
        %v3034 = vpop.f32.mrf.mxu0
        %v3035 = vadd.f32 0.0, %v3034
        %v3036 = vpop.f32.mrf.mxu0
        %v3037 = vadd.f32 0.0, %v3036
        %v3038 = vpop.f32.mrf.mxu0
        %v3039 = vadd.f32 0.0, %v3038
        %v3040 = vpop.f32.mrf.mxu0
        %v3041 = vadd.f32 0.0, %v3040
        %3042 = vmatprep.mubr.bf16.mxu0 %v2897
        %3043 = vmatmul.mubr.bf16.gmra.mxu0 %v2705
        %v3044 = vpop.f32.mrf.mxu0
        %v3045 = vadd.f32 0.0, %v3044
        %v3046 = vpop.f32.mrf.mxu0
        %v3047 = vadd.f32 0.0, %v3046
        %v3048 = vpop.f32.mrf.mxu0
        %v3049 = vadd.f32 0.0, %v3048
        %v3050 = vpop.f32.mrf.mxu0
        %v3051 = vadd.f32 0.0, %v3050
        %3052 = vmatprep.mubr.bf16.mxu0 %v2900
        %3053 = vmatmul.mubr.bf16.gmra.mxu0 %v2708
        %v3054 = vpop.f32.mrf.mxu0
        %v3055 = vadd.f32 0.0, %v3054
        %v3056 = vpop.f32.mrf.mxu0
        %v3057 = vadd.f32 0.0, %v3056
        %v3058 = vpop.f32.mrf.mxu0
        %v3059 = vadd.f32 0.0, %v3058
        %v3060 = vpop.f32.mrf.mxu0
        %v3061 = vadd.f32 0.0, %v3060
        %3062 = vmatprep.mubr.bf16.mxu0 %v2903
        %3063 = vmatmul.mubr.bf16.gmra.mxu0 %v2711
        %v3064 = vpop.f32.mrf.mxu0
        %v3065 = vadd.f32 0.0, %v3064
        %v3066 = vpop.f32.mrf.mxu0
        %v3067 = vadd.f32 0.0, %v3066
        %v3068 = vpop.f32.mrf.mxu0
        %v3069 = vadd.f32 0.0, %v3068
        %v3070 = vpop.f32.mrf.mxu0
        %v3071 = vadd.f32 0.0, %v3070
        %3072 = vmatprep.mubr.bf16.mxu0 %v2906
        %3073 = vmatmul.mubr.bf16.gmra.mxu0 %v2714
        %v3074 = vpop.f32.mrf.mxu0
        %v3075 = vadd.f32 0.0, %v3074
        %v3076 = vpop.f32.mrf.mxu0
        %v3077 = vadd.f32 0.0, %v3076
        %v3078 = vpop.f32.mrf.mxu0
        %v3079 = vadd.f32 0.0, %v3078
        %v3080 = vpop.f32.mrf.mxu0
        %v3081 = vadd.f32 0.0, %v3080
        %3082 = vmatprep.mubr.bf16.mxu0 %v2909
        %3083 = vmatmul.mubr.bf16.gmra.mxu0 %v2717
        %v3084 = vpop.f32.mrf.mxu0
        %v3085 = vadd.f32 0.0, %v3084
        %v3086 = vpop.f32.mrf.mxu0
        %v3087 = vadd.f32 0.0, %v3086
        %v3088 = vpop.f32.mrf.mxu0
        %v3089 = vadd.f32 0.0, %v3088
        %v3090 = vpop.f32.mrf.mxu0
        %v3091 = vadd.f32 0.0, %v3090
        %3092 = vmatprep.mubr.bf16.mxu0 %v2912
        %3093 = vmatmul.mubr.bf16.gmra.mxu0 %v2720
        %v3094 = vpop.f32.mrf.mxu0
        %v3095 = vpop.f32.mrf.mxu0
        %v3096 = vadd.f32 0.0, %v3095
        %v3097 = vpop.f32.mrf.mxu0
        %v3098 = vpop.f32.mrf.mxu0
        %v3099 = vadd.f32 0.0, %v3098
        %3100 = vdwg.mxu0
        %3129 = vrot.lane.b32.xlu0 %v2957, 64
        %v3130 = vpop.permute.xlu0 %3129
        %3131 = vrot.lane.b32.xlu0 %v2960, 64
        %v3132 = vpop.permute.xlu0 %3131
        %3133 = vrot.lane.b32.xlu0 %v2965, 64
        %v3134 = vpop.permute.xlu0 %3133
        %3135 = vrot.lane.b32.xlu0 %v2969, 64
        %v3136 = vpop.permute.xlu0 %3135
        %3137 = vrot.lane.b32.xlu0 %v2975, 64
        %v3138 = vpop.permute.xlu0 %3137
        %3139 = vrot.lane.b32.xlu0 %v2979, 64
        %v3140 = vpop.permute.xlu0 %3139
        %3141 = vrot.lane.b32.xlu0 %v2985, 64
        %v3142 = vpop.permute.xlu0 %3141
        %3143 = vrot.lane.b32.xlu0 %v2989, 64
        %v3144 = vpop.permute.xlu0 %3143
        %3145 = vrot.lane.b32.xlu0 %v2995, 64
        %v3146 = vpop.permute.xlu0 %3145
        %3147 = vrot.lane.b32.xlu0 %v2999, 64
        %v3148 = vpop.permute.xlu0 %3147
        %3149 = vrot.lane.b32.xlu0 %v3005, 64
        %v3150 = vpop.permute.xlu0 %3149
        %3151 = vrot.lane.b32.xlu0 %v3009, 64
        %v3152 = vpop.permute.xlu0 %3151
        %3153 = vrot.lane.b32.xlu0 %v3015, 64
        %v3154 = vpop.permute.xlu0 %3153
        %3155 = vrot.lane.b32.xlu0 %v3019, 64
        %v3156 = vpop.permute.xlu0 %3155
        %3157 = vrot.lane.b32.xlu0 %v3025, 64
        %v3158 = vpop.permute.xlu0 %3157
        %3159 = vrot.lane.b32.xlu0 %v3029, 64
        %v3160 = vpop.permute.xlu0 %3159
        %3161 = vrot.lane.b32.xlu0 %v3035, 64
        %v3162 = vpop.permute.xlu0 %3161
        %3163 = vrot.lane.b32.xlu0 %v3039, 64
        %v3164 = vpop.permute.xlu0 %3163
        %3165 = vrot.lane.b32.xlu0 %v3045, 64
        %v3166 = vpop.permute.xlu0 %3165
        %3167 = vrot.lane.b32.xlu0 %v3049, 64
        %v3168 = vpop.permute.xlu0 %3167
        %3169 = vrot.lane.b32.xlu0 %v3055, 64
        %v3170 = vpop.permute.xlu0 %3169
        %3171 = vrot.lane.b32.xlu0 %v3059, 64
        %v3172 = vpop.permute.xlu0 %3171
        %3173 = vrot.lane.b32.xlu0 %v3065, 64
        %v3174 = vpop.permute.xlu0 %3173
        %3175 = vrot.lane.b32.xlu0 %v3069, 64
        %v3176 = vpop.permute.xlu0 %3175
        %3177 = vrot.lane.b32.xlu0 %v3075, 64
        %v3178 = vpop.permute.xlu0 %3177
        %3179 = vrot.lane.b32.xlu0 %v3079, 64
        %v3180 = vpop.permute.xlu0 %3179
        %3181 = vrot.lane.b32.xlu0 %v3085, 64
        %v3182 = vpop.permute.xlu0 %3181
        %3183 = vrot.lane.b32.xlu0 %v3089, 64
        %v3184 = vpop.permute.xlu0 %3183
        %v3213 = vadd.f32 %v2949, %v3130
        %v3214 = vadd.f32 %v2952, %v3132
        %v3215 = vadd.f32 %v2957, %v3134
        %v3216 = vadd.f32 %v2960, %v3136
        %v3217 = vadd.f32 %v2965, %v3138
        %v3218 = vadd.f32 %v2969, %v3140
        %v3219 = vadd.f32 %v2975, %v3142
        %v3220 = vadd.f32 %v2979, %v3144
        %v3221 = vadd.f32 %v2985, %v3146
        %v3222 = vadd.f32 %v2989, %v3148
        %v3223 = vadd.f32 %v2995, %v3150
        %v3224 = vadd.f32 %v2999, %v3152
        %v3225 = vadd.f32 %v3005, %v3154
        %v3226 = vadd.f32 %v3009, %v3156
        %v3227 = vadd.f32 %v3015, %v3158
        %v3228 = vadd.f32 %v3019, %v3160
        %v3229 = vadd.f32 %v3025, %v3162
        %v3230 = vadd.f32 %v3029, %v3164
        %v3231 = vadd.f32 %v3035, %v3166
        %v3232 = vadd.f32 %v3039, %v3168
        %v3233 = vadd.f32 %v3045, %v3170
        %v3234 = vadd.f32 %v3049, %v3172
        %v3235 = vadd.f32 %v3055, %v3174
        %v3236 = vadd.f32 %v3059, %v3176
        %v3237 = vadd.f32 %v3065, %v3178
        %v3238 = vadd.f32 %v3069, %v3180
        %v3239 = vadd.f32 %v3075, %v3182
        %v3240 = vadd.f32 %v3079, %v3184
        %v3241 = vadd.f32 %v3213, %v2967
        %v3242 = vadd.f32 %v3214, %v2971
        %v3243 = vadd.f32 %v3215, %v2977
        %v3244 = vadd.f32 %v3216, %v2981
        %v3245 = vadd.f32 %v3217, %v2987
        %v3246 = vadd.f32 %v3218, %v2991
        %v3247 = vadd.f32 %v3219, %v2997
        %v3248 = vadd.f32 %v3220, %v3001
        %v3249 = vadd.f32 %v3221, %v3007
        %v3250 = vadd.f32 %v3222, %v3011
        %v3251 = vadd.f32 %v3223, %v3017
        %v3252 = vadd.f32 %v3224, %v3021
        %v3253 = vadd.f32 %v3225, %v3027
        %v3254 = vadd.f32 %v3226, %v3031
        %v3255 = vadd.f32 %v3227, %v3037
        %v3256 = vadd.f32 %v3228, %v3041
        %v3257 = vadd.f32 %v3229, %v3047
        %v3258 = vadd.f32 %v3230, %v3051
        %v3259 = vadd.f32 %v3231, %v3057
        %v3260 = vadd.f32 %v3232, %v3061
        %v3261 = vadd.f32 %v3233, %v3067
        %v3262 = vadd.f32 %v3234, %v3071
        %v3263 = vadd.f32 %v3235, %v3077
        %v3264 = vadd.f32 %v3236, %v3081
        %v3265 = vadd.f32 %v3237, %v3087
        %v3266 = vadd.f32 %v3238, %v3091
        %v3267 = vadd.f32 %v3239, %v3096
        %v3268 = vadd.f32 %v3240, %v3099
        %v3269 = vadd.f32 %v596, %v3241
        %v3270 = vadd.f32 %v597, %v3242
        %v3271 = vadd.f32 %v598, %v3243
        %v3272 = vadd.f32 %v599, %v3244
        %v3273 = vadd.f32 %v600, %v3245
        %v3274 = vadd.f32 %v601, %v3246
        %v3275 = vadd.f32 %v602, %v3247
        %v3276 = vadd.f32 %v603, %v3248
        %v3277 = vadd.f32 %v604, %v3249
        %v3278 = vadd.f32 %v605, %v3250
        %v3279 = vadd.f32 %v606, %v3251
        %v3280 = vadd.f32 %v607, %v3252
        %v3281 = vadd.f32 %v608, %v3253
        %v3282 = vadd.f32 %v609, %v3254
        %v3283 = vadd.f32 %v610, %v3255
        %v3284 = vadd.f32 %v611, %v3256
        %v3285 = vadd.f32 %v612, %v3257
        %v3286 = vadd.f32 %v613, %v3258
        %v3287 = vadd.f32 %v614, %v3259
        %v3288 = vadd.f32 %v615, %v3260
        %v3289 = vadd.f32 %v616, %v3261
        %v3290 = vadd.f32 %v617, %v3262
        %v3291 = vadd.f32 %v618, %v3263
        %v3292 = vadd.f32 %v619, %v3264
        %v3293 = vadd.f32 %v620, %v3265
        %v3294 = vadd.f32 %v621, %v3266
        %v3295 = vadd.f32 %v622, %v3267
        %v3296 = vadd.f32 %v623, %v3268
        %v3297 = vld [vmem:[%s5] sm:$0x1]
        %v3299 = vlaneseq
        %v3300 = vshrl.u32 %v3299, 7
        %v3301 = vsub.s32 0, %v3300
        %v3302 = vrot.slane %v3297, %v3301
        %v3304 = vadd.f32 %v3269, %v3302
        %v3305 = vadd.f32 %v3270, %v3302
        %v3306 = vadd.f32 %v3271, %v3302
        %v3307 = vadd.f32 %v3272, %v3302
        %v3308 = vadd.f32 %v3273, %v3302
        %v3309 = vadd.f32 %v3274, %v3302
        %v3310 = vadd.f32 %v3275, %v3302
        %v3311 = vadd.f32 %v3276, %v3302
        %v3312 = vadd.f32 %v3277, %v3302
        %v3313 = vadd.f32 %v3278, %v3302
        %v3314 = vadd.f32 %v3279, %v3302
        %v3315 = vadd.f32 %v3280, %v3302
        %v3316 = vadd.f32 %v3281, %v3302
        %v3317 = vadd.f32 %v3282, %v3302
        %v3318 = vadd.f32 %v3283, %v3302
        %v3319 = vadd.f32 %v3284, %v3302
        %v3320 = vadd.f32 %v3285, %v3302
        %v3321 = vadd.f32 %v3286, %v3302
        %v3322 = vadd.f32 %v3287, %v3302
        %v3323 = vadd.f32 %v3288, %v3302
        %v3324 = vadd.f32 %v3289, %v3302
        %v3325 = vadd.f32 %v3290, %v3302
        %v3326 = vadd.f32 %v3291, %v3302
        %v3327 = vadd.f32 %v3292, %v3302
        %v3328 = vadd.f32 %v3293, %v3302
        %v3329 = vadd.f32 %v3294, %v3302
        %v3330 = vadd.f32 %v3295, %v3302
        %v3331 = vadd.f32 %v3296, %v3302
        %s3332 = sadd.s32 %s589, 2
        %s3333 = scalar_lea.vmem %s1, %s3332
        %v3334 = vld [vmem:[%s3333] sm:$0xff]
        %v3335 = vld [vmem:[%s3333 + $0x8] sm:$0x3f]
        %v3338 = vcombine.high %v3334, %v3334
        %v3340 = vunpack.c.l.s4 1966171168
        %v3341 = vunpack.c.0.s8 %v3340
        %v3342 = vlaneseq
        %v3343 = vshrl.u32 %v3342, 7
        %v3344 = vsub.s32 %v3341, %v3343
        %v3345 = vrot.slane %v3334, %v3344
        %v3347 = vunpack.c.l.s4 1966171168
        %v3348 = vunpack.c.0.s8 %v3347
        %v3349 = vlaneseq
        %v3350 = vshrl.u32 %v3349, 7
        %v3351 = vsub.s32 %v3348, %v3350
        %v3352 = vrot.slane %v3338, %v3351
        %v3353 = vcombine.high %v3345, %v3345
        %v3354 = vcombine.high %v3352, %v3352
        %v3356 = vunpack.c.l.s4 1966171168
        %v3357 = vunpack.c.0.s8 %v3356
        %v3358 = vlaneseq
        %v3359 = vshrl.u32 %v3358, 7
        %v3360 = vsub.s32 %v3357, %v3359
        %v3361 = vrot.slane %v3345, %v3360
        %v3363 = vunpack.c.l.s4 1966171168
        %v3364 = vunpack.c.0.s8 %v3363
        %v3365 = vlaneseq
        %v3366 = vshrl.u32 %v3365, 7
        %v3367 = vsub.s32 %v3364, %v3366
        %v3368 = vrot.slane %v3352, %v3367
        %v3370 = vunpack.c.l.s4 1966171168
        %v3371 = vunpack.c.0.s8 %v3370
        %v3372 = vlaneseq
        %v3373 = vshrl.u32 %v3372, 7
        %v3374 = vsub.s32 %v3371, %v3373
        %v3375 = vrot.slane %v3353, %v3374
        %v3377 = vunpack.c.l.s4 1966171168
        %v3378 = vunpack.c.0.s8 %v3377
        %v3379 = vlaneseq
        %v3380 = vshrl.u32 %v3379, 7
        %v3381 = vsub.s32 %v3378, %v3380
        %v3382 = vrot.slane %v3354, %v3381
        %v3383 = vcombine.high %v3361, %v3361
        %v3384 = vcombine.high %v3368, %v3368
        %v3385 = vcombine.high %v3375, %v3375
        %v3386 = vcombine.high %v3382, %v3382
        %v3387 = vcombine.high %v3335, %v3335
        %v3389 = vunpack.c.l.s4 1966171168
        %v3390 = vunpack.c.0.s8 %v3389
        %v3391 = vlaneseq
        %v3392 = vshrl.u32 %v3391, 7
        %v3393 = vsub.s32 %v3390, %v3392
        %v3394 = vrot.slane %v3335, %v3393
        %v3396 = vunpack.c.l.s4 1966171168
        %v3397 = vunpack.c.0.s8 %v3396
        %v3398 = vlaneseq
        %v3399 = vshrl.u32 %v3398, 7
        %v3400 = vsub.s32 %v3397, %v3399
        %v3401 = vrot.slane %v3387, %v3400
        %v3402 = vcombine.high %v3394, %v3394
        %v3403 = vcombine.high %v3401, %v3401
        %v3405 = vunpack.c.l.s4 1966171168
        %v3406 = vunpack.c.0.s8 %v3405
        %v3407 = vlaneseq
        %v3408 = vshrl.u32 %v3407, 7
        %v3409 = vsub.s32 %v3406, %v3408
        %v3410 = vrot.slane %v3394, %v3409
        %v3412 = vunpack.c.l.s4 1966171168
        %v3413 = vunpack.c.0.s8 %v3412
        %v3414 = vlaneseq
        %v3415 = vshrl.u32 %v3414, 7
        %v3416 = vsub.s32 %v3413, %v3415
        %v3417 = vrot.slane %v3401, %v3416
        %v3419 = vunpack.c.l.s4 1966171168
        %v3420 = vunpack.c.0.s8 %v3419
        %v3421 = vlaneseq
        %v3422 = vshrl.u32 %v3421, 7
        %v3423 = vsub.s32 %v3420, %v3422
        %v3424 = vrot.slane %v3402, %v3423
        %v3426 = vunpack.c.l.s4 1966171168
        %v3427 = vunpack.c.0.s8 %v3426
        %v3428 = vlaneseq
        %v3429 = vshrl.u32 %v3428, 7
        %v3430 = vsub.s32 %v3427, %v3429
        %v3431 = vrot.slane %v3403, %v3430
        %v3432 = vcombine.high %v3410, %v3410
        %v3433 = vcombine.high %v3424, %v3424
        %v3434 = vlaneseq
        %v3435 = vshrl.u32 %v3434, 7
        %v3436 = vsub.s32 0, %v3435
        %v3437 = vrot.slane %v3361, %v3436
        %v3438 = vlaneseq
        %v3439 = vshrl.u32 %v3438, 7
        %v3440 = vsub.s32 0, %v3439
        %v3441 = vrot.slane %v3375, %v3440
        %v3442 = vlaneseq
        %v3443 = vshrl.u32 %v3442, 7
        %v3444 = vsub.s32 0, %v3443
        %v3445 = vrot.slane %v3383, %v3444
        %v3446 = vlaneseq
        %v3447 = vshrl.u32 %v3446, 7
        %v3448 = vsub.s32 0, %v3447
        %v3449 = vrot.slane %v3385, %v3448
        %v3450 = vlaneseq
        %v3451 = vshrl.u32 %v3450, 7
        %v3452 = vsub.s32 0, %v3451
        %v3453 = vrot.slane %v3368, %v3452
        %v3454 = vlaneseq
        %v3455 = vshrl.u32 %v3454, 7
        %v3456 = vsub.s32 0, %v3455
        %v3457 = vrot.slane %v3382, %v3456
        %v3458 = vlaneseq
        %v3459 = vshrl.u32 %v3458, 7
        %v3460 = vsub.s32 0, %v3459
        %v3461 = vrot.slane %v3384, %v3460
        %v3462 = vlaneseq
        %v3463 = vshrl.u32 %v3462, 7
        %v3464 = vsub.s32 0, %v3463
        %v3465 = vrot.slane %v3386, %v3464
        %v3466 = vlaneseq
        %v3467 = vshrl.u32 %v3466, 7
        %v3468 = vsub.s32 0, %v3467
        %v3469 = vrot.slane %v3410, %v3468
        %v3470 = vlaneseq
        %v3471 = vshrl.u32 %v3470, 7
        %v3472 = vsub.s32 0, %v3471
        %v3473 = vrot.slane %v3424, %v3472
        %v3474 = vlaneseq
        %v3475 = vshrl.u32 %v3474, 7
        %v3476 = vsub.s32 0, %v3475
        %v3477 = vrot.slane %v3432, %v3476
        %v3478 = vlaneseq
        %v3479 = vshrl.u32 %v3478, 7
        %v3480 = vsub.s32 0, %v3479
        %v3481 = vrot.slane %v3433, %v3480
        %v3482 = vlaneseq
        %v3483 = vshrl.u32 %v3482, 7
        %v3484 = vsub.s32 0, %v3483
        %v3485 = vrot.slane %v3417, %v3484
        %v3486 = vlaneseq
        %v3487 = vshrl.u32 %v3486, 7
        %v3488 = vsub.s32 0, %v3487
        %v3489 = vrot.slane %v3431, %v3488
        %3490 = vset.pattern.permute.xlu0 0
        %3491 = vperm.xlu0 %3490, %v3437
        %v3492 = vpop.permute.xlu0 %3491
        %3494 = vset.pattern.permute.xlu0 0
        %3495 = vperm.xlu0 %3494, %v3441
        %v3496 = vpop.permute.xlu0 %3495
        %3498 = vset.pattern.permute.xlu0 0
        %3499 = vperm.xlu0 %3498, %v3445
        %v3500 = vpop.permute.xlu0 %3499
        %3502 = vset.pattern.permute.xlu0 0
        %3503 = vperm.xlu0 %3502, %v3449
        %v3504 = vpop.permute.xlu0 %3503
        %3506 = vset.pattern.permute.xlu0 0
        %3507 = vperm.xlu0 %3506, %v3453
        %v3508 = vpop.permute.xlu0 %3507
        %3510 = vset.pattern.permute.xlu0 0
        %3511 = vperm.xlu0 %3510, %v3457
        %v3512 = vpop.permute.xlu0 %3511
        %3514 = vset.pattern.permute.xlu0 0
        %3515 = vperm.xlu0 %3514, %v3461
        %v3516 = vpop.permute.xlu0 %3515
        %3518 = vset.pattern.permute.xlu0 0
        %3519 = vperm.xlu0 %3518, %v3465
        %v3520 = vpop.permute.xlu0 %3519
        %3522 = vset.pattern.permute.xlu0 0
        %3523 = vperm.xlu0 %3522, %v3469
        %v3524 = vpop.permute.xlu0 %3523
        %3526 = vset.pattern.permute.xlu0 0
        %3527 = vperm.xlu0 %3526, %v3473
        %v3528 = vpop.permute.xlu0 %3527
        %3530 = vset.pattern.permute.xlu0 0
        %3531 = vperm.xlu0 %3530, %v3477
        %v3532 = vpop.permute.xlu0 %3531
        %3534 = vset.pattern.permute.xlu0 0
        %3535 = vperm.xlu0 %3534, %v3481
        %v3536 = vpop.permute.xlu0 %3535
        %3538 = vset.pattern.permute.xlu0 0
        %3539 = vperm.xlu0 %3538, %v3485
        %v3540 = vpop.permute.xlu0 %3539
        %3542 = vset.pattern.permute.xlu0 0
        %3543 = vperm.xlu0 %3542, %v3489
        %v3544 = vpop.permute.xlu0 %3543
        %v3546 = vmul.f32 %v3304, %v3492
        %v3547 = vmul.f32 %v3305, %v3492
        %v3548 = vmul.f32 %v3306, %v3496
        %v3549 = vmul.f32 %v3307, %v3496
        %v3550 = vmul.f32 %v3308, %v3500
        %v3551 = vmul.f32 %v3309, %v3500
        %v3552 = vmul.f32 %v3310, %v3504
        %v3553 = vmul.f32 %v3311, %v3504
        %v3554 = vmul.f32 %v3312, %v3508
        %v3555 = vmul.f32 %v3313, %v3508
        %v3556 = vmul.f32 %v3314, %v3512
        %v3557 = vmul.f32 %v3315, %v3512
        %v3558 = vmul.f32 %v3316, %v3516
        %v3559 = vmul.f32 %v3317, %v3516
        %v3560 = vmul.f32 %v3318, %v3520
        %v3561 = vmul.f32 %v3319, %v3520
        %v3562 = vmul.f32 %v3320, %v3524
        %v3563 = vmul.f32 %v3321, %v3524
        %v3564 = vmul.f32 %v3322, %v3528
        %v3565 = vmul.f32 %v3323, %v3528
        %v3566 = vmul.f32 %v3324, %v3532
        %v3567 = vmul.f32 %v3325, %v3532
        %v3568 = vmul.f32 %v3326, %v3536
        %v3569 = vmul.f32 %v3327, %v3536
        %v3570 = vmul.f32 %v3328, %v3540
        %v3571 = vmul.f32 %v3329, %v3540
        %v3572 = vmul.f32 %v3330, %v3544
        %v3573 = vmul.f32 %v3331, %v3544
        %v3574 = vpack.c.bf16 %v3547, %v3546
        %v3575 = vpack.c.bf16 %v3549, %v3548
        %v3576 = vpack.c.bf16 %v3551, %v3550
        %v3577 = vpack.c.bf16 %v3553, %v3552
        %v3578 = vpack.c.bf16 %v3555, %v3554
        %v3579 = vpack.c.bf16 %v3557, %v3556
        %v3580 = vpack.c.bf16 %v3559, %v3558
        %v3581 = vpack.c.bf16 %v3561, %v3560
        %v3582 = vpack.c.bf16 %v3563, %v3562
        %v3583 = vpack.c.bf16 %v3565, %v3564
        %v3584 = vpack.c.bf16 %v3567, %v3566
        %v3585 = vpack.c.bf16 %v3569, %v3568
        %v3586 = vpack.c.bf16 %v3571, %v3570
        %v3587 = vpack.c.bf16 %v3573, %v3572
        %v3589 = vshrl.u32 %v3574, 16
        %v3591 = vrot.slane %v3589, 7
        %v3592 = vshll.u32 %v3574, 16
        %v3594 = vor.u32 %v3591, %v3592
        %v3596 = vshrl.u32 %v3575, 16
        %v3598 = vrot.slane %v3596, 7
        %v3599 = vshll.u32 %v3575, 16
        %v3601 = vor.u32 %v3598, %v3599
        %v3603 = vshrl.u32 %v3576, 16
        %v3605 = vrot.slane %v3603, 7
        %v3606 = vshll.u32 %v3576, 16
        %v3608 = vor.u32 %v3605, %v3606
        %v3610 = vshrl.u32 %v3577, 16
        %v3612 = vrot.slane %v3610, 7
        %v3613 = vshll.u32 %v3577, 16
        %v3615 = vor.u32 %v3612, %v3613
        %v3617 = vshrl.u32 %v3578, 16
        %v3619 = vrot.slane %v3617, 7
        %v3620 = vshll.u32 %v3578, 16
        %v3622 = vor.u32 %v3619, %v3620
        %v3624 = vshrl.u32 %v3579, 16
        %v3626 = vrot.slane %v3624, 7
        %v3627 = vshll.u32 %v3579, 16
        %v3629 = vor.u32 %v3626, %v3627
        %v3631 = vshrl.u32 %v3580, 16
        %v3633 = vrot.slane %v3631, 7
        %v3634 = vshll.u32 %v3580, 16
        %v3636 = vor.u32 %v3633, %v3634
        %v3638 = vshrl.u32 %v3581, 16
        %v3640 = vrot.slane %v3638, 7
        %v3641 = vshll.u32 %v3581, 16
        %v3643 = vor.u32 %v3640, %v3641
        %v3645 = vshrl.u32 %v3582, 16
        %v3647 = vrot.slane %v3645, 7
        %v3648 = vshll.u32 %v3582, 16
        %v3650 = vor.u32 %v3647, %v3648
        %v3652 = vshrl.u32 %v3583, 16
        %v3654 = vrot.slane %v3652, 7
        %v3655 = vshll.u32 %v3583, 16
        %v3657 = vor.u32 %v3654, %v3655
        %v3659 = vshrl.u32 %v3584, 16
        %v3661 = vrot.slane %v3659, 7
        %v3662 = vshll.u32 %v3584, 16
        %v3664 = vor.u32 %v3661, %v3662
        %v3666 = vshrl.u32 %v3585, 16
        %v3668 = vrot.slane %v3666, 7
        %v3669 = vshll.u32 %v3585, 16
        %v3671 = vor.u32 %v3668, %v3669
        %v3673 = vshrl.u32 %v3586, 16
        %v3675 = vrot.slane %v3673, 7
        %v3676 = vshll.u32 %v3586, 16
        %v3678 = vor.u32 %v3675, %v3676
        %v3680 = vshrl.u32 %v3587, 16
        %v3682 = vrot.slane %v3680, 7
        %v3683 = vshll.u32 %v3587, 16
        %v3685 = vor.u32 %v3682, %v3683
        %v3714 = vsel %vm810, 0, %v3594
        %v3715 = vsel %vm810, 0, %v3601
        %v3716 = vsel %vm810, 0, %v3608
        %v3717 = vsel %vm810, 0, %v3615
        %v3718 = vsel %vm810, 0, %v3622
        %v3719 = vsel %vm810, 0, %v3629
        %v3720 = vsel %vm810, 0, %v3636
        %v3721 = vsel %vm810, 0, %v3643
        %v3722 = vsel %vm810, 0, %v3650
        %v3723 = vsel %vm810, 0, %v3657
        %v3724 = vsel %vm810, 0, %v3664
        %v3725 = vsel %vm810, 0, %v3671
        %v3726 = vsel %vm810, 0, %v3678
        %v3727 = vsel %vm810, 0, %v3685
        %v3728 = vsel %vm810, %v3591, 0
        %v3729 = vsel %vm810, %v3598, 0
        %v3730 = vsel %vm810, %v3605, 0
        %v3731 = vsel %vm810, %v3612, 0
        %v3732 = vsel %vm810, %v3619, 0
        %v3733 = vsel %vm810, %v3626, 0
        %v3734 = vsel %vm810, %v3633, 0
        %v3735 = vsel %vm810, %v3640, 0
        %v3736 = vsel %vm810, %v3647, 0
        %v3737 = vsel %vm810, %v3654, 0
        %v3738 = vsel %vm810, %v3661, 0
        %v3739 = vsel %vm810, %v3668, 0
        %v3740 = vsel %vm810, %v3675, 0
        %v3741 = vsel %vm810, %v3682, 0
        %v3743 = vshrl.u32 %v3714, 16
        %v3745 = vshll.u32 %v3714, 16
        %v3747 = vrot.slane %v3745, 1
        %v3748 = vor.u32 %v3743, %v3747
        %v3750 = vshll.u32 %v3728, 16
        %v3752 = vrot.slane %v3750, 1
        %v3753 = vsel %vm847, %v3748, %v3752
        %v3755 = vshrl.u32 %v3715, 16
        %v3757 = vshll.u32 %v3715, 16
        %v3759 = vrot.slane %v3757, 1
        %v3760 = vor.u32 %v3755, %v3759
        %v3762 = vshll.u32 %v3729, 16
        %v3764 = vrot.slane %v3762, 1
        %v3765 = vsel %vm847, %v3760, %v3764
        %v3767 = vshrl.u32 %v3716, 16
        %v3769 = vshll.u32 %v3716, 16
        %v3771 = vrot.slane %v3769, 1
        %v3772 = vor.u32 %v3767, %v3771
        %v3774 = vshll.u32 %v3730, 16
        %v3776 = vrot.slane %v3774, 1
        %v3777 = vsel %vm847, %v3772, %v3776
        %v3779 = vshrl.u32 %v3717, 16
        %v3781 = vshll.u32 %v3717, 16
        %v3783 = vrot.slane %v3781, 1
        %v3784 = vor.u32 %v3779, %v3783
        %v3786 = vshll.u32 %v3731, 16
        %v3788 = vrot.slane %v3786, 1
        %v3789 = vsel %vm847, %v3784, %v3788
        %v3791 = vshrl.u32 %v3718, 16
        %v3793 = vshll.u32 %v3718, 16
        %v3795 = vrot.slane %v3793, 1
        %v3796 = vor.u32 %v3791, %v3795
        %v3798 = vshll.u32 %v3732, 16
        %v3800 = vrot.slane %v3798, 1
        %v3801 = vsel %vm847, %v3796, %v3800
        %v3803 = vshrl.u32 %v3719, 16
        %v3805 = vshll.u32 %v3719, 16
        %v3807 = vrot.slane %v3805, 1
        %v3808 = vor.u32 %v3803, %v3807
        %v3810 = vshll.u32 %v3733, 16
        %v3812 = vrot.slane %v3810, 1
        %v3813 = vsel %vm847, %v3808, %v3812
        %v3815 = vshrl.u32 %v3720, 16
        %v3817 = vshll.u32 %v3720, 16
        %v3819 = vrot.slane %v3817, 1
        %v3820 = vor.u32 %v3815, %v3819
        %v3822 = vshll.u32 %v3734, 16
        %v3824 = vrot.slane %v3822, 1
        %v3825 = vsel %vm847, %v3820, %v3824
        %v3827 = vshrl.u32 %v3721, 16
        %v3829 = vshll.u32 %v3721, 16
        %v3831 = vrot.slane %v3829, 1
        %v3832 = vor.u32 %v3827, %v3831
        %v3834 = vshll.u32 %v3735, 16
        %v3836 = vrot.slane %v3834, 1
        %v3837 = vsel %vm847, %v3832, %v3836
        %v3839 = vshrl.u32 %v3722, 16
        %v3841 = vshll.u32 %v3722, 16
        %v3843 = vrot.slane %v3841, 1
        %v3844 = vor.u32 %v3839, %v3843
        %v3846 = vshll.u32 %v3736, 16
        %v3848 = vrot.slane %v3846, 1
        %v3849 = vsel %vm847, %v3844, %v3848
        %v3851 = vshrl.u32 %v3723, 16
        %v3853 = vshll.u32 %v3723, 16
        %v3855 = vrot.slane %v3853, 1
        %v3856 = vor.u32 %v3851, %v3855
        %v3858 = vshll.u32 %v3737, 16
        %v3860 = vrot.slane %v3858, 1
        %v3861 = vsel %vm847, %v3856, %v3860
        %v3863 = vshrl.u32 %v3724, 16
        %v3865 = vshll.u32 %v3724, 16
        %v3867 = vrot.slane %v3865, 1
        %v3868 = vor.u32 %v3863, %v3867
        %v3870 = vshll.u32 %v3738, 16
        %v3872 = vrot.slane %v3870, 1
        %v3873 = vsel %vm847, %v3868, %v3872
        %v3875 = vshrl.u32 %v3725, 16
        %v3877 = vshll.u32 %v3725, 16
        %v3879 = vrot.slane %v3877, 1
        %v3880 = vor.u32 %v3875, %v3879
        %v3882 = vshll.u32 %v3739, 16
        %v3884 = vrot.slane %v3882, 1
        %v3885 = vsel %vm847, %v3880, %v3884
        %v3887 = vshrl.u32 %v3726, 16
        %v3889 = vshll.u32 %v3726, 16
        %v3891 = vrot.slane %v3889, 1
        %v3892 = vor.u32 %v3887, %v3891
        %v3894 = vshll.u32 %v3740, 16
        %v3896 = vrot.slane %v3894, 1
        %v3897 = vsel %vm847, %v3892, %v3896
        %v3899 = vshrl.u32 %v3727, 16
        %v3901 = vshll.u32 %v3727, 16
        %v3903 = vrot.slane %v3901, 1
        %v3904 = vor.u32 %v3899, %v3903
        %v3906 = vshll.u32 %v3741, 16
        %v3908 = vrot.slane %v3906, 1
        %v3909 = vsel %vm847, %v3904, %v3908
        %3910 = vrot.lane.b32.xlu0 %v3753, 64
        %v3911 = vpop.permute.xlu0 %3910
        %3912 = vrot.lane.b32.xlu0 %v3765, 64
        %v3913 = vpop.permute.xlu0 %3912
        %3914 = vrot.lane.b32.xlu0 %v3777, 64
        %v3915 = vpop.permute.xlu0 %3914
        %3916 = vrot.lane.b32.xlu0 %v3789, 64
        %v3917 = vpop.permute.xlu0 %3916
        %3918 = vrot.lane.b32.xlu0 %v3801, 64
        %v3919 = vpop.permute.xlu0 %3918
        %3920 = vrot.lane.b32.xlu0 %v3813, 64
        %v3921 = vpop.permute.xlu0 %3920
        %3922 = vrot.lane.b32.xlu0 %v3825, 64
        %v3923 = vpop.permute.xlu0 %3922
        %3924 = vrot.lane.b32.xlu0 %v3837, 64
        %v3925 = vpop.permute.xlu0 %3924
        %3926 = vrot.lane.b32.xlu0 %v3849, 64
        %v3927 = vpop.permute.xlu0 %3926
        %3928 = vrot.lane.b32.xlu0 %v3861, 64
        %v3929 = vpop.permute.xlu0 %3928
        %3930 = vrot.lane.b32.xlu0 %v3873, 64
        %v3931 = vpop.permute.xlu0 %3930
        %3932 = vrot.lane.b32.xlu0 %v3885, 64
        %v3933 = vpop.permute.xlu0 %3932
        %3934 = vrot.lane.b32.xlu0 %v3897, 64
        %v3935 = vpop.permute.xlu0 %3934
        %3936 = vrot.lane.b32.xlu0 %v3909, 64
        %v3937 = vpop.permute.xlu0 %3936
        %v3966 = vrot.slane %v3714, 1
        %v3967 = vrot.slane %v3728, 1
        %v3968 = vsel %vm1136, %v3966, %v3967
        %v3969 = vrot.slane %v3715, 1
        %v3970 = vrot.slane %v3729, 1
        %v3971 = vsel %vm1136, %v3969, %v3970
        %v3972 = vrot.slane %v3716, 1
        %v3973 = vrot.slane %v3730, 1
        %v3974 = vsel %vm1136, %v3972, %v3973
        %v3975 = vrot.slane %v3717, 1
        %v3976 = vrot.slane %v3731, 1
        %v3977 = vsel %vm1136, %v3975, %v3976
        %v3978 = vrot.slane %v3718, 1
        %v3979 = vrot.slane %v3732, 1
        %v3980 = vsel %vm1136, %v3978, %v3979
        %v3981 = vrot.slane %v3719, 1
        %v3982 = vrot.slane %v3733, 1
        %v3983 = vsel %vm1136, %v3981, %v3982
        %v3984 = vrot.slane %v3720, 1
        %v3985 = vrot.slane %v3734, 1
        %v3986 = vsel %vm1136, %v3984, %v3985
        %v3987 = vrot.slane %v3721, 1
        %v3988 = vrot.slane %v3735, 1
        %v3989 = vsel %vm1136, %v3987, %v3988
        %v3990 = vrot.slane %v3722, 1
        %v3991 = vrot.slane %v3736, 1
        %v3992 = vsel %vm1136, %v3990, %v3991
        %v3993 = vrot.slane %v3723, 1
        %v3994 = vrot.slane %v3737, 1
        %v3995 = vsel %vm1136, %v3993, %v3994
        %v3996 = vrot.slane %v3724, 1
        %v3997 = vrot.slane %v3738, 1
        %v3998 = vsel %vm1136, %v3996, %v3997
        %v3999 = vrot.slane %v3725, 1
        %v4000 = vrot.slane %v3739, 1
        %v4001 = vsel %vm1136, %v3999, %v4000
        %v4002 = vrot.slane %v3726, 1
        %v4003 = vrot.slane %v3740, 1
        %v4004 = vsel %vm1136, %v4002, %v4003
        %v4005 = vrot.slane %v3727, 1
        %v4006 = vrot.slane %v3741, 1
        %v4007 = vsel %vm1136, %v4005, %v4006
        %v4009 = vsel %vm1191, %v3714, %v3911
        %v4012 = vsel %vm1191, %v3715, %v3913
        %v4015 = vsel %vm1191, %v3716, %v3915
        %v4018 = vsel %vm1191, %v3717, %v3917
        %v4021 = vsel %vm1191, %v3718, %v3919
        %v4024 = vsel %vm1191, %v3719, %v3921
        %v4027 = vsel %vm1191, %v3720, %v3923
        %v4030 = vsel %vm1191, %v3721, %v3925
        %v4033 = vsel %vm1191, %v3722, %v3927
        %v4036 = vsel %vm1191, %v3723, %v3929
        %v4039 = vsel %vm1191, %v3724, %v3931
        %v4042 = vsel %vm1191, %v3725, %v3933
        %v4045 = vsel %vm1191, %v3726, %v3935
        %v4048 = vsel %vm1191, %v3727, %v3937
        %v4050 = vld [vmem:[#allocation8] sm:$0xff]
        %v4051 = vld [vmem:[#allocation8 + $0x8] sm:$0xff]
        %v4052 = vld [vmem:[#allocation8 + $0x10] sm:$0xff]
        %v4053 = vld [vmem:[#allocation8 + $0x18] sm:$0xff]
        %v4054 = vld [vmem:[#allocation8 + $0x20] sm:$0xff]
        %v4055 = vld [vmem:[#allocation8 + $0x28] sm:$0xff]
        %v4056 = vld [vmem:[#allocation8 + $0x30] sm:$0xff]
        %v4057 = vld [vmem:[#allocation8 + $0x38] sm:$0xff]
        %v4058 = vld [vmem:[#allocation8 + $0x40] sm:$0xff]
        %v4059 = vld [vmem:[#allocation8 + $0x48] sm:$0xff]
        %v4060 = vld [vmem:[#allocation8 + $0x50] sm:$0xff]
        %v4061 = vld [vmem:[#allocation8 + $0x58] sm:$0xff]
        %v4062 = vld [vmem:[#allocation8 + $0x60] sm:$0xff]
        %v4063 = vld [vmem:[#allocation8 + $0x68] sm:$0xff]
        %v4064 = vld [vmem:[#allocation8 + $0x70] sm:$0xff]
        %v4065 = vld [vmem:[#allocation8 + $0x78] sm:$0xff]
        %v4066 = vld [vmem:[#allocation8 + $0x80] sm:$0xff]
        %v4067 = vld [vmem:[#allocation8 + $0x88] sm:$0xff]
        %v4068 = vld [vmem:[#allocation8 + $0x90] sm:$0xff]
        %v4069 = vld [vmem:[#allocation8 + $0x98] sm:$0xff]
        %v4070 = vld [vmem:[#allocation8 + $0xa0] sm:$0xff]
        %v4071 = vld [vmem:[#allocation8 + $0xa8] sm:$0xff]
        %v4072 = vld [vmem:[#allocation8 + $0xb0] sm:$0xff]
        %v4073 = vld [vmem:[#allocation8 + $0xb8] sm:$0xff]
        %v4098 = vunpack.c.l.b16 %v4050
        %v4099 = vunpack.c.h.b16 %v4050
        %v4100 = vunpack.c.l.b16 %v4051
        %v4101 = vunpack.c.h.b16 %v4051
        %v4102 = vunpack.c.l.b16 %v4052
        %v4103 = vunpack.c.h.b16 %v4052
        %v4104 = vunpack.c.l.b16 %v4053
        %v4105 = vunpack.c.h.b16 %v4053
        %v4106 = vunpack.c.l.b16 %v4054
        %v4107 = vunpack.c.h.b16 %v4054
        %v4108 = vunpack.c.l.b16 %v4055
        %v4109 = vunpack.c.h.b16 %v4055
        %v4110 = vunpack.c.l.b16 %v4056
        %v4111 = vunpack.c.h.b16 %v4056
        %v4112 = vunpack.c.l.b16 %v4057
        %v4113 = vunpack.c.h.b16 %v4057
        %v4114 = vunpack.c.l.b16 %v4058
        %v4115 = vunpack.c.h.b16 %v4058
        %v4116 = vunpack.c.l.b16 %v4059
        %v4117 = vunpack.c.h.b16 %v4059
        %v4118 = vunpack.c.l.b16 %v4060
        %v4119 = vunpack.c.h.b16 %v4060
        %v4120 = vunpack.c.l.b16 %v4061
        %v4121 = vunpack.c.h.b16 %v4061
        %v4122 = vunpack.c.l.b16 %v4062
        %v4123 = vunpack.c.h.b16 %v4062
        %v4124 = vunpack.c.l.b16 %v4063
        %v4125 = vunpack.c.h.b16 %v4063
        %v4126 = vunpack.c.l.b16 %v4064
        %v4127 = vunpack.c.h.b16 %v4064
        %v4128 = vunpack.c.l.b16 %v4065
        %v4129 = vunpack.c.h.b16 %v4065
        %v4130 = vunpack.c.l.b16 %v4066
        %v4131 = vunpack.c.h.b16 %v4066
        %v4132 = vunpack.c.l.b16 %v4067
        %v4133 = vunpack.c.h.b16 %v4067
        %v4134 = vunpack.c.l.b16 %v4068
        %v4135 = vunpack.c.h.b16 %v4068
        %v4136 = vunpack.c.l.b16 %v4069
        %v4137 = vunpack.c.h.b16 %v4069
        %v4138 = vunpack.c.l.b16 %v4070
        %v4139 = vunpack.c.h.b16 %v4070
        %v4140 = vunpack.c.l.b16 %v4071
        %v4141 = vunpack.c.h.b16 %v4071
        %v4142 = vunpack.c.l.b16 %v4072
        %v4143 = vunpack.c.h.b16 %v4072
        %v4144 = vunpack.c.l.b16 %v4073
        %v4145 = vunpack.c.h.b16 %v4073
        %v4146 = vpack.c.b16 %v4100, %v4098
        %v4147 = vpack.c.b16 %v4101, %v4099
        %v4148 = vpack.c.b16 %v4104, %v4102
        %v4149 = vpack.c.b16 %v4105, %v4103
        %v4150 = vpack.c.b16 %v4108, %v4106
        %v4151 = vpack.c.b16 %v4109, %v4107
        %v4152 = vpack.c.b16 %v4112, %v4110
        %v4153 = vpack.c.b16 %v4113, %v4111
        %v4154 = vpack.c.b16 %v4116, %v4114
        %v4155 = vpack.c.b16 %v4117, %v4115
        %v4156 = vpack.c.b16 %v4120, %v4118
        %v4157 = vpack.c.b16 %v4121, %v4119
        %v4158 = vpack.c.b16 %v4124, %v4122
        %v4159 = vpack.c.b16 %v4125, %v4123
        %v4160 = vpack.c.b16 %v4128, %v4126
        %v4161 = vpack.c.b16 %v4129, %v4127
        %v4162 = vpack.c.b16 %v4132, %v4130
        %v4163 = vpack.c.b16 %v4133, %v4131
        %v4164 = vpack.c.b16 %v4136, %v4134
        %v4165 = vpack.c.b16 %v4137, %v4135
        %v4166 = vpack.c.b16 %v4140, %v4138
        %v4167 = vpack.c.b16 %v4141, %v4139
        %v4168 = vpack.c.b16 %v4144, %v4142
        %v4169 = vpack.c.b16 %v4145, %v4143
        %v4195 = vsel %vm1191, %v3968, 0
        %v4198 = vsel %vm1191, %v3971, 0
        %v4201 = vsel %vm1191, %v3974, 0
        %v4204 = vsel %vm1191, %v3977, 0
        %v4207 = vsel %vm1191, %v3980, 0
        %v4210 = vsel %vm1191, %v3983, 0
        %v4213 = vsel %vm1191, %v3986, 0
        %v4216 = vsel %vm1191, %v3989, 0
        %v4219 = vsel %vm1191, %v3992, 0
        %v4222 = vsel %vm1191, %v3995, 0
        %v4225 = vsel %vm1191, %v3998, 0
        %v4228 = vsel %vm1191, %v4001, 0
        %v4231 = vsel %vm1191, %v4004, 0
        %v4234 = vsel %vm1191, %v4007, 0
        %4236 = vmatprep.subr.bf16.mxu0 %v4161
        %4237 = vmatpush1.bf16.msra.mxu0 %v4160
        %4238 = vmatprep.subr.bf16.mxu0 %v4159
        %4239 = vmatpush1.bf16.msra.mxu0 %v4158
        %4240 = vmatprep.subr.bf16.mxu0 %v4157
        %4241 = vmatpush1.bf16.msra.mxu0 %v4156
        %4242 = vmatprep.subr.bf16.mxu0 %v4155
        %4243 = vmatpush1.bf16.msra.mxu0 %v4154
        %4244 = vmatprep.subr.bf16.mxu0 %v4153
        %4245 = vmatpush1.bf16.msra.mxu0 %v4152
        %4246 = vmatprep.subr.bf16.mxu0 %v4151
        %4247 = vmatpush1.bf16.msra.mxu0 %v4150
        %4248 = vmatprep.subr.bf16.mxu0 %v4149
        %4249 = vmatpush1.bf16.msra.mxu0 %v4148
        %4250 = vmatprep.subr.bf16.mxu0 %v4147
        %4251 = vmatpush1.bf16.msra.mxu0 %v4146
        %4252 = vmatprep.subr.bf16.mxu0 0
        %4253 = vmatpush2.bf16.msra.mxu0 0
        %4254 = vmatprep.subr.bf16.mxu0 0
        %4255 = vmatpush2.bf16.msra.mxu0 0
        %4256 = vmatprep.subr.bf16.mxu0 0
        %4257 = vmatpush2.bf16.msra.mxu0 0
        %4258 = vmatprep.subr.bf16.mxu0 0
        %4259 = vmatpush2.bf16.msra.mxu0 0
        %4260 = vmatprep.subr.bf16.mxu0 %v4169
        %4261 = vmatpush2.bf16.msra.mxu0 %v4168
        %4262 = vmatprep.subr.bf16.mxu0 %v4167
        %4263 = vmatpush2.bf16.msra.mxu0 %v4166
        %4264 = vmatprep.subr.bf16.mxu0 %v4165
        %4265 = vmatpush2.bf16.msra.mxu0 %v4164
        %4266 = vmatprep.subr.bf16.mxu0 %v4163
        %4267 = vmatpush2.bf16.msra.mxu0 %v4162
        %4268 = vmatprep.mubr.bf16.mxu0 %v4195
        %4269 = vmatmul.mubr.bf16.gmra.mxu0 %v4009
        %v4270 = vpop.f32.mrf.mxu0
        %v4271 = vadd.f32 0.0, %v4270
        %v4272 = vpop.f32.mrf.mxu0
        %v4273 = vpop.f32.mrf.mxu0
        %v4274 = vadd.f32 0.0, %v4273
        %v4275 = vpop.f32.mrf.mxu0
        %4276 = vmatprep.mubr.bf16.mxu0 %v4198
        %4277 = vmatmul.mubr.bf16.gmra.mxu0 %v4012
        %v4278 = vpop.f32.mrf.mxu0
        %v4279 = vadd.f32 0.0, %v4278
        %v4280 = vpop.f32.mrf.mxu0
        %v4281 = vpop.f32.mrf.mxu0
        %v4282 = vadd.f32 0.0, %v4281
        %v4283 = vpop.f32.mrf.mxu0
        %4284 = vmatprep.mubr.bf16.mxu0 %v4201
        %4285 = vmatmul.mubr.bf16.gmra.mxu0 %v4015
        %v4286 = vpop.f32.mrf.mxu0
        %v4287 = vadd.f32 0.0, %v4286
        %v4288 = vpop.f32.mrf.mxu0
        %v4289 = vadd.f32 0.0, %v4288
        %v4290 = vpop.f32.mrf.mxu0
        %v4291 = vadd.f32 0.0, %v4290
        %v4292 = vpop.f32.mrf.mxu0
        %v4293 = vadd.f32 0.0, %v4292
        %4294 = vmatprep.mubr.bf16.mxu0 %v4204
        %4295 = vmatmul.mubr.bf16.gmra.mxu0 %v4018
        %v4296 = vpop.f32.mrf.mxu0
        %v4297 = vadd.f32 0.0, %v4296
        %v4298 = vpop.f32.mrf.mxu0
        %v4299 = vadd.f32 0.0, %v4298
        %v4300 = vpop.f32.mrf.mxu0
        %v4301 = vadd.f32 0.0, %v4300
        %v4302 = vpop.f32.mrf.mxu0
        %v4303 = vadd.f32 0.0, %v4302
        %4304 = vmatprep.mubr.bf16.mxu0 %v4207
        %4305 = vmatmul.mubr.bf16.gmra.mxu0 %v4021
        %v4306 = vpop.f32.mrf.mxu0
        %v4307 = vadd.f32 0.0, %v4306
        %v4308 = vpop.f32.mrf.mxu0
        %v4309 = vadd.f32 0.0, %v4308
        %v4310 = vpop.f32.mrf.mxu0
        %v4311 = vadd.f32 0.0, %v4310
        %v4312 = vpop.f32.mrf.mxu0
        %v4313 = vadd.f32 0.0, %v4312
        %4314 = vmatprep.mubr.bf16.mxu0 %v4210
        %4315 = vmatmul.mubr.bf16.gmra.mxu0 %v4024
        %v4316 = vpop.f32.mrf.mxu0
        %v4317 = vadd.f32 0.0, %v4316
        %v4318 = vpop.f32.mrf.mxu0
        %v4319 = vadd.f32 0.0, %v4318
        %v4320 = vpop.f32.mrf.mxu0
        %v4321 = vadd.f32 0.0, %v4320
        %v4322 = vpop.f32.mrf.mxu0
        %v4323 = vadd.f32 0.0, %v4322
        %4324 = vmatprep.mubr.bf16.mxu0 %v4213
        %4325 = vmatmul.mubr.bf16.gmra.mxu0 %v4027
        %v4326 = vpop.f32.mrf.mxu0
        %v4327 = vadd.f32 0.0, %v4326
        %v4328 = vpop.f32.mrf.mxu0
        %v4329 = vadd.f32 0.0, %v4328
        %v4330 = vpop.f32.mrf.mxu0
        %v4331 = vadd.f32 0.0, %v4330
        %v4332 = vpop.f32.mrf.mxu0
        %v4333 = vadd.f32 0.0, %v4332
        %4334 = vmatprep.mubr.bf16.mxu0 %v4216
        %4335 = vmatmul.mubr.bf16.gmra.mxu0 %v4030
        %v4336 = vpop.f32.mrf.mxu0
        %v4337 = vadd.f32 0.0, %v4336
        %v4338 = vpop.f32.mrf.mxu0
        %v4339 = vadd.f32 0.0, %v4338
        %v4340 = vpop.f32.mrf.mxu0
        %v4341 = vadd.f32 0.0, %v4340
        %v4342 = vpop.f32.mrf.mxu0
        %v4343 = vadd.f32 0.0, %v4342
        %4344 = vmatprep.mubr.bf16.mxu0 %v4219
        %4345 = vmatmul.mubr.bf16.gmra.mxu0 %v4033
        %v4346 = vpop.f32.mrf.mxu0
        %v4347 = vadd.f32 0.0, %v4346
        %v4348 = vpop.f32.mrf.mxu0
        %v4349 = vadd.f32 0.0, %v4348
        %v4350 = vpop.f32.mrf.mxu0
        %v4351 = vadd.f32 0.0, %v4350
        %v4352 = vpop.f32.mrf.mxu0
        %v4353 = vadd.f32 0.0, %v4352
        %4354 = vmatprep.mubr.bf16.mxu0 %v4222
        %4355 = vmatmul.mubr.bf16.gmra.mxu0 %v4036
        %v4356 = vpop.f32.mrf.mxu0
        %v4357 = vadd.f32 0.0, %v4356
        %v4358 = vpop.f32.mrf.mxu0
        %v4359 = vadd.f32 0.0, %v4358
        %v4360 = vpop.f32.mrf.mxu0
        %v4361 = vadd.f32 0.0, %v4360
        %v4362 = vpop.f32.mrf.mxu0
        %v4363 = vadd.f32 0.0, %v4362
        %4364 = vmatprep.mubr.bf16.mxu0 %v4225
        %4365 = vmatmul.mubr.bf16.gmra.mxu0 %v4039
        %v4366 = vpop.f32.mrf.mxu0
        %v4367 = vadd.f32 0.0, %v4366
        %v4368 = vpop.f32.mrf.mxu0
        %v4369 = vadd.f32 0.0, %v4368
        %v4370 = vpop.f32.mrf.mxu0
        %v4371 = vadd.f32 0.0, %v4370
        %v4372 = vpop.f32.mrf.mxu0
        %v4373 = vadd.f32 0.0, %v4372
        %4374 = vmatprep.mubr.bf16.mxu0 %v4228
        %4375 = vmatmul.mubr.bf16.gmra.mxu0 %v4042
        %v4376 = vpop.f32.mrf.mxu0
        %v4377 = vadd.f32 0.0, %v4376
        %v4378 = vpop.f32.mrf.mxu0
        %v4379 = vadd.f32 0.0, %v4378
        %v4380 = vpop.f32.mrf.mxu0
        %v4381 = vadd.f32 0.0, %v4380
        %v4382 = vpop.f32.mrf.mxu0
        %v4383 = vadd.f32 0.0, %v4382
        %4384 = vmatprep.mubr.bf16.mxu0 %v4231
        %4385 = vmatmul.mubr.bf16.gmra.mxu0 %v4045
        %v4386 = vpop.f32.mrf.mxu0
        %v4387 = vadd.f32 0.0, %v4386
        %v4388 = vpop.f32.mrf.mxu0
        %v4389 = vadd.f32 0.0, %v4388
        %v4390 = vpop.f32.mrf.mxu0
        %v4391 = vadd.f32 0.0, %v4390
        %v4392 = vpop.f32.mrf.mxu0
        %v4393 = vadd.f32 0.0, %v4392
        %4394 = vmatprep.mubr.bf16.mxu0 %v4234
        %4395 = vmatmul.mubr.bf16.gmra.mxu0 %v4048
        %v4396 = vpop.f32.mrf.mxu0
        %v4397 = vpop.f32.mrf.mxu0
        %v4398 = vadd.f32 0.0, %v4397
        %v4399 = vpop.f32.mrf.mxu0
        %v4400 = vpop.f32.mrf.mxu0
        %v4401 = vadd.f32 0.0, %v4400
        %4402 = vdwg.mxu0
        %4427 = vrot.lane.b32.xlu0 %v4279, 64
        %v4428 = vpop.permute.xlu0 %4427
        %4429 = vrot.lane.b32.xlu0 %v4282, 64
        %v4430 = vpop.permute.xlu0 %4429
        %4431 = vrot.lane.b32.xlu0 %v4287, 64
        %v4432 = vpop.permute.xlu0 %4431
        %4433 = vrot.lane.b32.xlu0 %v4291, 64
        %v4434 = vpop.permute.xlu0 %4433
        %4435 = vrot.lane.b32.xlu0 %v4297, 64
        %v4436 = vpop.permute.xlu0 %4435
        %4437 = vrot.lane.b32.xlu0 %v4301, 64
        %v4438 = vpop.permute.xlu0 %4437
        %4439 = vrot.lane.b32.xlu0 %v4307, 64
        %v4440 = vpop.permute.xlu0 %4439
        %4441 = vrot.lane.b32.xlu0 %v4311, 64
        %v4442 = vpop.permute.xlu0 %4441
        %4443 = vrot.lane.b32.xlu0 %v4317, 64
        %v4444 = vpop.permute.xlu0 %4443
        %4445 = vrot.lane.b32.xlu0 %v4321, 64
        %v4446 = vpop.permute.xlu0 %4445
        %4447 = vrot.lane.b32.xlu0 %v4327, 64
        %v4448 = vpop.permute.xlu0 %4447
        %4449 = vrot.lane.b32.xlu0 %v4331, 64
        %v4450 = vpop.permute.xlu0 %4449
        %4451 = vrot.lane.b32.xlu0 %v4337, 64
        %v4452 = vpop.permute.xlu0 %4451
        %4453 = vrot.lane.b32.xlu0 %v4341, 64
        %v4454 = vpop.permute.xlu0 %4453
        %4455 = vrot.lane.b32.xlu0 %v4347, 64
        %v4456 = vpop.permute.xlu0 %4455
        %4457 = vrot.lane.b32.xlu0 %v4351, 64
        %v4458 = vpop.permute.xlu0 %4457
        %4459 = vrot.lane.b32.xlu0 %v4357, 64
        %v4460 = vpop.permute.xlu0 %4459
        %4461 = vrot.lane.b32.xlu0 %v4361, 64
        %v4462 = vpop.permute.xlu0 %4461
        %4463 = vrot.lane.b32.xlu0 %v4367, 64
        %v4464 = vpop.permute.xlu0 %4463
        %4465 = vrot.lane.b32.xlu0 %v4371, 64
        %v4466 = vpop.permute.xlu0 %4465
        %4467 = vrot.lane.b32.xlu0 %v4377, 64
        %v4468 = vpop.permute.xlu0 %4467
        %4469 = vrot.lane.b32.xlu0 %v4381, 64
        %v4470 = vpop.permute.xlu0 %4469
        %4471 = vrot.lane.b32.xlu0 %v4387, 64
        %v4472 = vpop.permute.xlu0 %4471
        %4473 = vrot.lane.b32.xlu0 %v4391, 64
        %v4474 = vpop.permute.xlu0 %4473
        %v4499 = vadd.f32 %v4271, %v4428
        %v4500 = vadd.f32 %v4274, %v4430
        %v4501 = vadd.f32 %v4279, %v4432
        %v4502 = vadd.f32 %v4282, %v4434
        %v4503 = vadd.f32 %v4287, %v4436
        %v4504 = vadd.f32 %v4291, %v4438
        %v4505 = vadd.f32 %v4297, %v4440
        %v4506 = vadd.f32 %v4301, %v4442
        %v4507 = vadd.f32 %v4307, %v4444
        %v4508 = vadd.f32 %v4311, %v4446
        %v4509 = vadd.f32 %v4317, %v4448
        %v4510 = vadd.f32 %v4321, %v4450
        %v4511 = vadd.f32 %v4327, %v4452
        %v4512 = vadd.f32 %v4331, %v4454
        %v4513 = vadd.f32 %v4337, %v4456
        %v4514 = vadd.f32 %v4341, %v4458
        %v4515 = vadd.f32 %v4347, %v4460
        %v4516 = vadd.f32 %v4351, %v4462
        %v4517 = vadd.f32 %v4357, %v4464
        %v4518 = vadd.f32 %v4361, %v4466
        %v4519 = vadd.f32 %v4367, %v4468
        %v4520 = vadd.f32 %v4371, %v4470
        %v4521 = vadd.f32 %v4377, %v4472
        %v4522 = vadd.f32 %v4381, %v4474
        %v4523 = vadd.f32 %v4499, %v4289
        %v4524 = vadd.f32 %v4500, %v4293
        %v4525 = vadd.f32 %v4501, %v4299
        %v4526 = vadd.f32 %v4502, %v4303
        %v4527 = vadd.f32 %v4503, %v4309
        %v4528 = vadd.f32 %v4504, %v4313
        %v4529 = vadd.f32 %v4505, %v4319
        %v4530 = vadd.f32 %v4506, %v4323
        %v4531 = vadd.f32 %v4507, %v4329
        %v4532 = vadd.f32 %v4508, %v4333
        %v4533 = vadd.f32 %v4509, %v4339
        %v4534 = vadd.f32 %v4510, %v4343
        %v4535 = vadd.f32 %v4511, %v4349
        %v4536 = vadd.f32 %v4512, %v4353
        %v4537 = vadd.f32 %v4513, %v4359
        %v4538 = vadd.f32 %v4514, %v4363
        %v4539 = vadd.f32 %v4515, %v4369
        %v4540 = vadd.f32 %v4516, %v4373
        %v4541 = vadd.f32 %v4517, %v4379
        %v4542 = vadd.f32 %v4518, %v4383
        %v4543 = vadd.f32 %v4519, %v4389
        %v4544 = vadd.f32 %v4520, %v4393
        %v4545 = vadd.f32 %v4521, %v4398
        %v4546 = vadd.f32 %v4522, %v4401
        %v4547 = vld [vmem:[%s7] sm:$0x1]
        %v4549 = vlaneseq
        %v4550 = vshrl.u32 %v4549, 7
        %v4551 = vsub.s32 0, %v4550
        %v4552 = vrot.slane %v4547, %v4551
        %v4554 = vadd.f32 %v4523, %v4552
        %v4555 = vadd.f32 %v4524, %v4552
        %v4556 = vadd.f32 %v4525, %v4552
        %v4557 = vadd.f32 %v4526, %v4552
        %v4558 = vadd.f32 %v4527, %v4552
        %v4559 = vadd.f32 %v4528, %v4552
        %v4560 = vadd.f32 %v4529, %v4552
        %v4561 = vadd.f32 %v4530, %v4552
        %v4562 = vadd.f32 %v4531, %v4552
        %v4563 = vadd.f32 %v4532, %v4552
        %v4564 = vadd.f32 %v4533, %v4552
        %v4565 = vadd.f32 %v4534, %v4552
        %v4566 = vadd.f32 %v4535, %v4552
        %v4567 = vadd.f32 %v4536, %v4552
        %v4568 = vadd.f32 %v4537, %v4552
        %v4569 = vadd.f32 %v4538, %v4552
        %v4570 = vadd.f32 %v4539, %v4552
        %v4571 = vadd.f32 %v4540, %v4552
        %v4572 = vadd.f32 %v4541, %v4552
        %v4573 = vadd.f32 %v4542, %v4552
        %v4574 = vadd.f32 %v4543, %v4552
        %v4575 = vadd.f32 %v4544, %v4552
        %v4576 = vadd.f32 %v4545, %v4552
        %v4577 = vadd.f32 %v4546, %v4552
        %v4578 = vmax.f32 %v4554, 0.0
        %v4579 = vmax.f32 %v4555, 0.0
        %v4580 = vmax.f32 %v4556, 0.0
        %v4581 = vmax.f32 %v4557, 0.0
        %v4582 = vmax.f32 %v4558, 0.0
        %v4583 = vmax.f32 %v4559, 0.0
        %v4584 = vmax.f32 %v4560, 0.0
        %v4585 = vmax.f32 %v4561, 0.0
        %v4586 = vmax.f32 %v4562, 0.0
        %v4587 = vmax.f32 %v4563, 0.0
        %v4588 = vmax.f32 %v4564, 0.0
        %v4589 = vmax.f32 %v4565, 0.0
        %v4590 = vmax.f32 %v4566, 0.0
        %v4591 = vmax.f32 %v4567, 0.0
        %v4592 = vmax.f32 %v4568, 0.0
        %v4593 = vmax.f32 %v4569, 0.0
        %v4594 = vmax.f32 %v4570, 0.0
        %v4595 = vmax.f32 %v4571, 0.0
        %v4596 = vmax.f32 %v4572, 0.0
        %v4597 = vmax.f32 %v4573, 0.0
        %v4598 = vmax.f32 %v4574, 0.0
        %v4599 = vmax.f32 %v4575, 0.0
        %v4600 = vmax.f32 %v4576, 0.0
        %v4601 = vmax.f32 %v4577, 0.0
        %s4602 = sadd.s32 %s589, 3
        %s4603 = scalar_lea.vmem %s1, %s4602
        %v4604 = vld [vmem:[%s4603] sm:$0xff]
        %v4605 = vld [vmem:[%s4603 + $0x8] sm:$0xf]
        %v4608 = vcombine.high %v4604, %v4604
        %v4610 = vunpack.c.l.s4 1966171168
        %v4611 = vunpack.c.0.s8 %v4610
        %v4612 = vlaneseq
        %v4613 = vshrl.u32 %v4612, 7
        %v4614 = vsub.s32 %v4611, %v4613
        %v4615 = vrot.slane %v4604, %v4614
        %v4617 = vunpack.c.l.s4 1966171168
        %v4618 = vunpack.c.0.s8 %v4617
        %v4619 = vlaneseq
        %v4620 = vshrl.u32 %v4619, 7
        %v4621 = vsub.s32 %v4618, %v4620
        %v4622 = vrot.slane %v4608, %v4621
        %v4623 = vcombine.high %v4615, %v4615
        %v4624 = vcombine.high %v4622, %v4622
        %v4626 = vunpack.c.l.s4 1966171168
        %v4627 = vunpack.c.0.s8 %v4626
        %v4628 = vlaneseq
        %v4629 = vshrl.u32 %v4628, 7
        %v4630 = vsub.s32 %v4627, %v4629
        %v4631 = vrot.slane %v4615, %v4630
        %v4633 = vunpack.c.l.s4 1966171168
        %v4634 = vunpack.c.0.s8 %v4633
        %v4635 = vlaneseq
        %v4636 = vshrl.u32 %v4635, 7
        %v4637 = vsub.s32 %v4634, %v4636
        %v4638 = vrot.slane %v4622, %v4637
        %v4640 = vunpack.c.l.s4 1966171168
        %v4641 = vunpack.c.0.s8 %v4640
        %v4642 = vlaneseq
        %v4643 = vshrl.u32 %v4642, 7
        %v4644 = vsub.s32 %v4641, %v4643
        %v4645 = vrot.slane %v4623, %v4644
        %v4647 = vunpack.c.l.s4 1966171168
        %v4648 = vunpack.c.0.s8 %v4647
        %v4649 = vlaneseq
        %v4650 = vshrl.u32 %v4649, 7
        %v4651 = vsub.s32 %v4648, %v4650
        %v4652 = vrot.slane %v4624, %v4651
        %v4653 = vcombine.high %v4631, %v4631
        %v4654 = vcombine.high %v4638, %v4638
        %v4655 = vcombine.high %v4645, %v4645
        %v4656 = vcombine.high %v4652, %v4652
        %v4658 = vunpack.c.l.s4 1966171168
        %v4659 = vunpack.c.0.s8 %v4658
        %v4660 = vlaneseq
        %v4661 = vshrl.u32 %v4660, 7
        %v4662 = vsub.s32 %v4659, %v4661
        %v4663 = vrot.slane %v4605, %v4662
        %v4664 = vcombine.high %v4663, %v4663
        %v4666 = vunpack.c.l.s4 1966171168
        %v4667 = vunpack.c.0.s8 %v4666
        %v4668 = vlaneseq
        %v4669 = vshrl.u32 %v4668, 7
        %v4670 = vsub.s32 %v4667, %v4669
        %v4671 = vrot.slane %v4663, %v4670
        %v4673 = vunpack.c.l.s4 1966171168
        %v4674 = vunpack.c.0.s8 %v4673
        %v4675 = vlaneseq
        %v4676 = vshrl.u32 %v4675, 7
        %v4677 = vsub.s32 %v4674, %v4676
        %v4678 = vrot.slane %v4664, %v4677
        %v4679 = vcombine.high %v4671, %v4671
        %v4680 = vcombine.high %v4678, %v4678
        %v4681 = vlaneseq
        %v4682 = vshrl.u32 %v4681, 7
        %v4683 = vsub.s32 0, %v4682
        %v4684 = vrot.slane %v4631, %v4683
        %v4685 = vlaneseq
        %v4686 = vshrl.u32 %v4685, 7
        %v4687 = vsub.s32 0, %v4686
        %v4688 = vrot.slane %v4645, %v4687
        %v4689 = vlaneseq
        %v4690 = vshrl.u32 %v4689, 7
        %v4691 = vsub.s32 0, %v4690
        %v4692 = vrot.slane %v4653, %v4691
        %v4693 = vlaneseq
        %v4694 = vshrl.u32 %v4693, 7
        %v4695 = vsub.s32 0, %v4694
        %v4696 = vrot.slane %v4655, %v4695
        %v4697 = vlaneseq
        %v4698 = vshrl.u32 %v4697, 7
        %v4699 = vsub.s32 0, %v4698
        %v4700 = vrot.slane %v4638, %v4699
        %v4701 = vlaneseq
        %v4702 = vshrl.u32 %v4701, 7
        %v4703 = vsub.s32 0, %v4702
        %v4704 = vrot.slane %v4652, %v4703
        %v4705 = vlaneseq
        %v4706 = vshrl.u32 %v4705, 7
        %v4707 = vsub.s32 0, %v4706
        %v4708 = vrot.slane %v4654, %v4707
        %v4709 = vlaneseq
        %v4710 = vshrl.u32 %v4709, 7
        %v4711 = vsub.s32 0, %v4710
        %v4712 = vrot.slane %v4656, %v4711
        %v4713 = vlaneseq
        %v4714 = vshrl.u32 %v4713, 7
        %v4715 = vsub.s32 0, %v4714
        %v4716 = vrot.slane %v4671, %v4715
        %v4717 = vlaneseq
        %v4718 = vshrl.u32 %v4717, 7
        %v4719 = vsub.s32 0, %v4718
        %v4720 = vrot.slane %v4678, %v4719
        %v4721 = vlaneseq
        %v4722 = vshrl.u32 %v4721, 7
        %v4723 = vsub.s32 0, %v4722
        %v4724 = vrot.slane %v4679, %v4723
        %v4725 = vlaneseq
        %v4726 = vshrl.u32 %v4725, 7
        %v4727 = vsub.s32 0, %v4726
        %v4728 = vrot.slane %v4680, %v4727
        %4729 = vset.pattern.permute.xlu0 0
        %4730 = vperm.xlu0 %4729, %v4684
        %v4731 = vpop.permute.xlu0 %4730
        %4733 = vset.pattern.permute.xlu0 0
        %4734 = vperm.xlu0 %4733, %v4688
        %v4735 = vpop.permute.xlu0 %4734
        %4737 = vset.pattern.permute.xlu0 0
        %4738 = vperm.xlu0 %4737, %v4692
        %v4739 = vpop.permute.xlu0 %4738
        %4741 = vset.pattern.permute.xlu0 0
        %4742 = vperm.xlu0 %4741, %v4696
        %v4743 = vpop.permute.xlu0 %4742
        %4745 = vset.pattern.permute.xlu0 0
        %4746 = vperm.xlu0 %4745, %v4700
        %v4747 = vpop.permute.xlu0 %4746
        %4749 = vset.pattern.permute.xlu0 0
        %4750 = vperm.xlu0 %4749, %v4704
        %v4751 = vpop.permute.xlu0 %4750
        %4753 = vset.pattern.permute.xlu0 0
        %4754 = vperm.xlu0 %4753, %v4708
        %v4755 = vpop.permute.xlu0 %4754
        %4757 = vset.pattern.permute.xlu0 0
        %4758 = vperm.xlu0 %4757, %v4712
        %v4759 = vpop.permute.xlu0 %4758
        %4761 = vset.pattern.permute.xlu0 0
        %4762 = vperm.xlu0 %4761, %v4716
        %v4763 = vpop.permute.xlu0 %4762
        %4765 = vset.pattern.permute.xlu0 0
        %4766 = vperm.xlu0 %4765, %v4720
        %v4767 = vpop.permute.xlu0 %4766
        %4769 = vset.pattern.permute.xlu0 0
        %4770 = vperm.xlu0 %4769, %v4724
        %v4771 = vpop.permute.xlu0 %4770
        %4773 = vset.pattern.permute.xlu0 0
        %4774 = vperm.xlu0 %4773, %v4728
        %v4775 = vpop.permute.xlu0 %4774
        %v4777 = vmul.f32 %v4578, %v4731
        %v4778 = vmul.f32 %v4579, %v4731
        %v4779 = vmul.f32 %v4580, %v4735
        %v4780 = vmul.f32 %v4581, %v4735
        %v4781 = vmul.f32 %v4582, %v4739
        %v4782 = vmul.f32 %v4583, %v4739
        %v4783 = vmul.f32 %v4584, %v4743
        %v4784 = vmul.f32 %v4585, %v4743
        %v4785 = vmul.f32 %v4586, %v4747
        %v4786 = vmul.f32 %v4587, %v4747
        %v4787 = vmul.f32 %v4588, %v4751
        %v4788 = vmul.f32 %v4589, %v4751
        %v4789 = vmul.f32 %v4590, %v4755
        %v4790 = vmul.f32 %v4591, %v4755
        %v4791 = vmul.f32 %v4592, %v4759
        %v4792 = vmul.f32 %v4593, %v4759
        %v4793 = vmul.f32 %v4594, %v4763
        %v4794 = vmul.f32 %v4595, %v4763
        %v4795 = vmul.f32 %v4596, %v4767
        %v4796 = vmul.f32 %v4597, %v4767
        %v4797 = vmul.f32 %v4598, %v4771
        %v4798 = vmul.f32 %v4599, %v4771
        %v4799 = vmul.f32 %v4600, %v4775
        %v4800 = vmul.f32 %v4601, %v4775
        %v4801 = vpack.c.bf16 %v4778, %v4777
        %v4802 = vpack.c.bf16 %v4780, %v4779
        %v4803 = vpack.c.bf16 %v4782, %v4781
        %v4804 = vpack.c.bf16 %v4784, %v4783
        %v4805 = vpack.c.bf16 %v4786, %v4785
        %v4806 = vpack.c.bf16 %v4788, %v4787
        %v4807 = vpack.c.bf16 %v4790, %v4789
        %v4808 = vpack.c.bf16 %v4792, %v4791
        %v4809 = vpack.c.bf16 %v4794, %v4793
        %v4810 = vpack.c.bf16 %v4796, %v4795
        %v4811 = vpack.c.bf16 %v4798, %v4797
        %v4812 = vpack.c.bf16 %v4800, %v4799
        %v4814 = vshrl.u32 %v4801, 16
        %v4816 = vrot.slane %v4814, 7
        %v4817 = vshll.u32 %v4801, 16
        %v4819 = vor.u32 %v4816, %v4817
        %v4821 = vshrl.u32 %v4802, 16
        %v4823 = vrot.slane %v4821, 7
        %v4824 = vshll.u32 %v4802, 16
        %v4826 = vor.u32 %v4823, %v4824
        %v4828 = vshrl.u32 %v4803, 16
        %v4830 = vrot.slane %v4828, 7
        %v4831 = vshll.u32 %v4803, 16
        %v4833 = vor.u32 %v4830, %v4831
        %v4835 = vshrl.u32 %v4804, 16
        %v4837 = vrot.slane %v4835, 7
        %v4838 = vshll.u32 %v4804, 16
        %v4840 = vor.u32 %v4837, %v4838
        %v4842 = vshrl.u32 %v4805, 16
        %v4844 = vrot.slane %v4842, 7
        %v4845 = vshll.u32 %v4805, 16
        %v4847 = vor.u32 %v4844, %v4845
        %v4849 = vshrl.u32 %v4806, 16
        %v4851 = vrot.slane %v4849, 7
        %v4852 = vshll.u32 %v4806, 16
        %v4854 = vor.u32 %v4851, %v4852
        %v4856 = vshrl.u32 %v4807, 16
        %v4858 = vrot.slane %v4856, 7
        %v4859 = vshll.u32 %v4807, 16
        %v4861 = vor.u32 %v4858, %v4859
        %v4863 = vshrl.u32 %v4808, 16
        %v4865 = vrot.slane %v4863, 7
        %v4866 = vshll.u32 %v4808, 16
        %v4868 = vor.u32 %v4865, %v4866
        %v4870 = vshrl.u32 %v4809, 16
        %v4872 = vrot.slane %v4870, 7
        %v4873 = vshll.u32 %v4809, 16
        %v4875 = vor.u32 %v4872, %v4873
        %v4877 = vshrl.u32 %v4810, 16
        %v4879 = vrot.slane %v4877, 7
        %v4880 = vshll.u32 %v4810, 16
        %v4882 = vor.u32 %v4879, %v4880
        %v4884 = vshrl.u32 %v4811, 16
        %v4886 = vrot.slane %v4884, 7
        %v4887 = vshll.u32 %v4811, 16
        %v4889 = vor.u32 %v4886, %v4887
        %v4891 = vshrl.u32 %v4812, 16
        %v4893 = vrot.slane %v4891, 7
        %v4894 = vshll.u32 %v4812, 16
        %v4896 = vor.u32 %v4893, %v4894
        %v4921 = vsel %vm810, 0, %v4819
        %v4922 = vsel %vm810, 0, %v4826
        %v4923 = vsel %vm810, 0, %v4833
        %v4924 = vsel %vm810, 0, %v4840
        %v4925 = vsel %vm810, 0, %v4847
        %v4926 = vsel %vm810, 0, %v4854
        %v4927 = vsel %vm810, 0, %v4861
        %v4928 = vsel %vm810, 0, %v4868
        %v4929 = vsel %vm810, 0, %v4875
        %v4930 = vsel %vm810, 0, %v4882
        %v4931 = vsel %vm810, 0, %v4889
        %v4932 = vsel %vm810, 0, %v4896
        %v4933 = vsel %vm810, %v4816, 0
        %v4934 = vsel %vm810, %v4823, 0
        %v4935 = vsel %vm810, %v4830, 0
        %v4936 = vsel %vm810, %v4837, 0
        %v4937 = vsel %vm810, %v4844, 0
        %v4938 = vsel %vm810, %v4851, 0
        %v4939 = vsel %vm810, %v4858, 0
        %v4940 = vsel %vm810, %v4865, 0
        %v4941 = vsel %vm810, %v4872, 0
        %v4942 = vsel %vm810, %v4879, 0
        %v4943 = vsel %vm810, %v4886, 0
        %v4944 = vsel %vm810, %v4893, 0
        %v4946 = vshrl.u32 %v4921, 16
        %v4948 = vshll.u32 %v4921, 16
        %v4950 = vrot.slane %v4948, 1
        %v4951 = vor.u32 %v4946, %v4950
        %v4953 = vshll.u32 %v4933, 16
        %v4955 = vrot.slane %v4953, 1
        %v4956 = vsel %vm847, %v4951, %v4955
        %v4958 = vshrl.u32 %v4922, 16
        %v4960 = vshll.u32 %v4922, 16
        %v4962 = vrot.slane %v4960, 1
        %v4963 = vor.u32 %v4958, %v4962
        %v4965 = vshll.u32 %v4934, 16
        %v4967 = vrot.slane %v4965, 1
        %v4968 = vsel %vm847, %v4963, %v4967
        %v4970 = vshrl.u32 %v4923, 16
        %v4972 = vshll.u32 %v4923, 16
        %v4974 = vrot.slane %v4972, 1
        %v4975 = vor.u32 %v4970, %v4974
        %v4977 = vshll.u32 %v4935, 16
        %v4979 = vrot.slane %v4977, 1
        %v4980 = vsel %vm847, %v4975, %v4979
        %v4982 = vshrl.u32 %v4924, 16
        %v4984 = vshll.u32 %v4924, 16
        %v4986 = vrot.slane %v4984, 1
        %v4987 = vor.u32 %v4982, %v4986
        %v4989 = vshll.u32 %v4936, 16
        %v4991 = vrot.slane %v4989, 1
        %v4992 = vsel %vm847, %v4987, %v4991
        %v4994 = vshrl.u32 %v4925, 16
        %v4996 = vshll.u32 %v4925, 16
        %v4998 = vrot.slane %v4996, 1
        %v4999 = vor.u32 %v4994, %v4998
        %v5001 = vshll.u32 %v4937, 16
        %v5003 = vrot.slane %v5001, 1
        %v5004 = vsel %vm847, %v4999, %v5003
        %v5006 = vshrl.u32 %v4926, 16
        %v5008 = vshll.u32 %v4926, 16
        %v5010 = vrot.slane %v5008, 1
        %v5011 = vor.u32 %v5006, %v5010
        %v5013 = vshll.u32 %v4938, 16
        %v5015 = vrot.slane %v5013, 1
        %v5016 = vsel %vm847, %v5011, %v5015
        %v5018 = vshrl.u32 %v4927, 16
        %v5020 = vshll.u32 %v4927, 16
        %v5022 = vrot.slane %v5020, 1
        %v5023 = vor.u32 %v5018, %v5022
        %v5025 = vshll.u32 %v4939, 16
        %v5027 = vrot.slane %v5025, 1
        %v5028 = vsel %vm847, %v5023, %v5027
        %v5030 = vshrl.u32 %v4928, 16
        %v5032 = vshll.u32 %v4928, 16
        %v5034 = vrot.slane %v5032, 1
        %v5035 = vor.u32 %v5030, %v5034
        %v5037 = vshll.u32 %v4940, 16
        %v5039 = vrot.slane %v5037, 1
        %v5040 = vsel %vm847, %v5035, %v5039
        %v5042 = vshrl.u32 %v4929, 16
        %v5044 = vshll.u32 %v4929, 16
        %v5046 = vrot.slane %v5044, 1
        %v5047 = vor.u32 %v5042, %v5046
        %v5049 = vshll.u32 %v4941, 16
        %v5051 = vrot.slane %v5049, 1
        %v5052 = vsel %vm847, %v5047, %v5051
        %v5054 = vshrl.u32 %v4930, 16
        %v5056 = vshll.u32 %v4930, 16
        %v5058 = vrot.slane %v5056, 1
        %v5059 = vor.u32 %v5054, %v5058
        %v5061 = vshll.u32 %v4942, 16
        %v5063 = vrot.slane %v5061, 1
        %v5064 = vsel %vm847, %v5059, %v5063
        %v5066 = vshrl.u32 %v4931, 16
        %v5068 = vshll.u32 %v4931, 16
        %v5070 = vrot.slane %v5068, 1
        %v5071 = vor.u32 %v5066, %v5070
        %v5073 = vshll.u32 %v4943, 16
        %v5075 = vrot.slane %v5073, 1
        %v5076 = vsel %vm847, %v5071, %v5075
        %v5078 = vshrl.u32 %v4932, 16
        %v5080 = vshll.u32 %v4932, 16
        %v5082 = vrot.slane %v5080, 1
        %v5083 = vor.u32 %v5078, %v5082
        %v5085 = vshll.u32 %v4944, 16
        %v5087 = vrot.slane %v5085, 1
        %v5088 = vsel %vm847, %v5083, %v5087
        %5089 = vrot.lane.b32.xlu0 %v4956, 64
        %v5090 = vpop.permute.xlu0 %5089
        %5091 = vrot.lane.b32.xlu0 %v4968, 64
        %v5092 = vpop.permute.xlu0 %5091
        %5093 = vrot.lane.b32.xlu0 %v4980, 64
        %v5094 = vpop.permute.xlu0 %5093
        %5095 = vrot.lane.b32.xlu0 %v4992, 64
        %v5096 = vpop.permute.xlu0 %5095
        %5097 = vrot.lane.b32.xlu0 %v5004, 64
        %v5098 = vpop.permute.xlu0 %5097
        %5099 = vrot.lane.b32.xlu0 %v5016, 64
        %v5100 = vpop.permute.xlu0 %5099
        %5101 = vrot.lane.b32.xlu0 %v5028, 64
        %v5102 = vpop.permute.xlu0 %5101
        %5103 = vrot.lane.b32.xlu0 %v5040, 64
        %v5104 = vpop.permute.xlu0 %5103
        %5105 = vrot.lane.b32.xlu0 %v5052, 64
        %v5106 = vpop.permute.xlu0 %5105
        %5107 = vrot.lane.b32.xlu0 %v5064, 64
        %v5108 = vpop.permute.xlu0 %5107
        %5109 = vrot.lane.b32.xlu0 %v5076, 64
        %v5110 = vpop.permute.xlu0 %5109
        %5111 = vrot.lane.b32.xlu0 %v5088, 64
        %v5112 = vpop.permute.xlu0 %5111
        %v5137 = vrot.slane %v4921, 1
        %v5138 = vrot.slane %v4933, 1
        %v5139 = vsel %vm1136, %v5137, %v5138
        %v5140 = vrot.slane %v4922, 1
        %v5141 = vrot.slane %v4934, 1
        %v5142 = vsel %vm1136, %v5140, %v5141
        %v5143 = vrot.slane %v4923, 1
        %v5144 = vrot.slane %v4935, 1
        %v5145 = vsel %vm1136, %v5143, %v5144
        %v5146 = vrot.slane %v4924, 1
        %v5147 = vrot.slane %v4936, 1
        %v5148 = vsel %vm1136, %v5146, %v5147
        %v5149 = vrot.slane %v4925, 1
        %v5150 = vrot.slane %v4937, 1
        %v5151 = vsel %vm1136, %v5149, %v5150
        %v5152 = vrot.slane %v4926, 1
        %v5153 = vrot.slane %v4938, 1
        %v5154 = vsel %vm1136, %v5152, %v5153
        %v5155 = vrot.slane %v4927, 1
        %v5156 = vrot.slane %v4939, 1
        %v5157 = vsel %vm1136, %v5155, %v5156
        %v5158 = vrot.slane %v4928, 1
        %v5159 = vrot.slane %v4940, 1
        %v5160 = vsel %vm1136, %v5158, %v5159
        %v5161 = vrot.slane %v4929, 1
        %v5162 = vrot.slane %v4941, 1
        %v5163 = vsel %vm1136, %v5161, %v5162
        %v5164 = vrot.slane %v4930, 1
        %v5165 = vrot.slane %v4942, 1
        %v5166 = vsel %vm1136, %v5164, %v5165
        %v5167 = vrot.slane %v4931, 1
        %v5168 = vrot.slane %v4943, 1
        %v5169 = vsel %vm1136, %v5167, %v5168
        %v5170 = vrot.slane %v4932, 1
        %v5171 = vrot.slane %v4944, 1
        %v5172 = vsel %vm1136, %v5170, %v5171
        %v5174 = vsel %vm1191, %v4921, %v5090
        %v5177 = vsel %vm1191, %v4922, %v5092
        %v5180 = vsel %vm1191, %v4923, %v5094
        %v5183 = vsel %vm1191, %v4924, %v5096
        %v5186 = vsel %vm1191, %v4925, %v5098
        %v5189 = vsel %vm1191, %v4926, %v5100
        %v5192 = vsel %vm1191, %v4927, %v5102
        %v5195 = vsel %vm1191, %v4928, %v5104
        %v5198 = vsel %vm1191, %v4929, %v5106
        %v5201 = vsel %vm1191, %v4930, %v5108
        %v5204 = vsel %vm1191, %v4931, %v5110
        %v5207 = vsel %vm1191, %v4932, %v5112
        %v5209 = vld [vmem:[#allocation10] sm:$0xff]
        %v5210 = vld [vmem:[#allocation10 + $0x8] sm:$0xff]
        %v5211 = vld [vmem:[#allocation10 + $0x10] sm:$0xff]
        %v5212 = vld [vmem:[#allocation10 + $0x18] sm:$0xff]
        %v5213 = vld [vmem:[#allocation10 + $0x20] sm:$0xff]
        %v5214 = vld [vmem:[#allocation10 + $0x28] sm:$0xff]
        %v5215 = vld [vmem:[#allocation10 + $0x30] sm:$0xff]
        %v5216 = vld [vmem:[#allocation10 + $0x38] sm:$0xff]
        %v5217 = vld [vmem:[#allocation10 + $0x40] sm:$0xff]
        %v5218 = vld [vmem:[#allocation10 + $0x48] sm:$0xff]
        %v5219 = vld [vmem:[#allocation10 + $0x50] sm:$0xff]
        %v5220 = vld [vmem:[#allocation10 + $0x58] sm:$0xff]
        %v5221 = vld [vmem:[#allocation10 + $0x60] sm:$0xff]
        %v5222 = vld [vmem:[#allocation10 + $0x68] sm:$0xff]
        %v5223 = vld [vmem:[#allocation10 + $0x70] sm:$0xff]
        %v5224 = vld [vmem:[#allocation10 + $0x78] sm:$0xff]
        %v5225 = vld [vmem:[#allocation10 + $0x80] sm:$0xff]
        %v5226 = vld [vmem:[#allocation10 + $0x88] sm:$0xff]
        %v5227 = vld [vmem:[#allocation10 + $0x90] sm:$0xff]
        %v5228 = vld [vmem:[#allocation10 + $0x98] sm:$0xff]
        %v5229 = vld [vmem:[#allocation10 + $0xa0] sm:$0xff]
        %v5230 = vld [vmem:[#allocation10 + $0xa8] sm:$0xff]
        %v5231 = vld [vmem:[#allocation10 + $0xb0] sm:$0xff]
        %v5232 = vld [vmem:[#allocation10 + $0xb8] sm:$0xff]
        %v5257 = vunpack.c.l.b16 %v5209
        %v5258 = vunpack.c.h.b16 %v5209
        %v5259 = vunpack.c.l.b16 %v5210
        %v5260 = vunpack.c.h.b16 %v5210
        %v5261 = vunpack.c.l.b16 %v5211
        %v5262 = vunpack.c.h.b16 %v5211
        %v5263 = vunpack.c.l.b16 %v5212
        %v5264 = vunpack.c.h.b16 %v5212
        %v5265 = vunpack.c.l.b16 %v5213
        %v5266 = vunpack.c.h.b16 %v5213
        %v5267 = vunpack.c.l.b16 %v5214
        %v5268 = vunpack.c.h.b16 %v5214
        %v5269 = vunpack.c.l.b16 %v5215
        %v5270 = vunpack.c.h.b16 %v5215
        %v5271 = vunpack.c.l.b16 %v5216
        %v5272 = vunpack.c.h.b16 %v5216
        %v5273 = vunpack.c.l.b16 %v5217
        %v5274 = vunpack.c.h.b16 %v5217
        %v5275 = vunpack.c.l.b16 %v5218
        %v5276 = vunpack.c.h.b16 %v5218
        %v5277 = vunpack.c.l.b16 %v5219
        %v5278 = vunpack.c.h.b16 %v5219
        %v5279 = vunpack.c.l.b16 %v5220
        %v5280 = vunpack.c.h.b16 %v5220
        %v5281 = vunpack.c.l.b16 %v5221
        %v5282 = vunpack.c.h.b16 %v5221
        %v5283 = vunpack.c.l.b16 %v5222
        %v5284 = vunpack.c.h.b16 %v5222
        %v5285 = vunpack.c.l.b16 %v5223
        %v5286 = vunpack.c.h.b16 %v5223
        %v5287 = vunpack.c.l.b16 %v5224
        %v5288 = vunpack.c.h.b16 %v5224
        %v5289 = vunpack.c.l.b16 %v5225
        %v5290 = vunpack.c.h.b16 %v5225
        %v5291 = vunpack.c.l.b16 %v5226
        %v5292 = vunpack.c.h.b16 %v5226
        %v5293 = vunpack.c.l.b16 %v5227
        %v5294 = vunpack.c.h.b16 %v5227
        %v5295 = vunpack.c.l.b16 %v5228
        %v5296 = vunpack.c.h.b16 %v5228
        %v5297 = vunpack.c.l.b16 %v5229
        %v5298 = vunpack.c.h.b16 %v5229
        %v5299 = vunpack.c.l.b16 %v5230
        %v5300 = vunpack.c.h.b16 %v5230
        %v5301 = vunpack.c.l.b16 %v5231
        %v5302 = vunpack.c.h.b16 %v5231
        %v5303 = vunpack.c.l.b16 %v5232
        %v5304 = vunpack.c.h.b16 %v5232
        %v5305 = vpack.c.b16 %v5259, %v5257
        %v5306 = vpack.c.b16 %v5260, %v5258
        %v5307 = vpack.c.b16 %v5263, %v5261
        %v5308 = vpack.c.b16 %v5264, %v5262
        %v5309 = vpack.c.b16 %v5267, %v5265
        %v5310 = vpack.c.b16 %v5268, %v5266
        %v5311 = vpack.c.b16 %v5271, %v5269
        %v5312 = vpack.c.b16 %v5272, %v5270
        %v5313 = vpack.c.b16 %v5275, %v5273
        %v5314 = vpack.c.b16 %v5276, %v5274
        %v5315 = vpack.c.b16 %v5279, %v5277
        %v5316 = vpack.c.b16 %v5280, %v5278
        %v5317 = vpack.c.b16 %v5283, %v5281
        %v5318 = vpack.c.b16 %v5284, %v5282
        %v5319 = vpack.c.b16 %v5287, %v5285
        %v5320 = vpack.c.b16 %v5288, %v5286
        %v5321 = vpack.c.b16 %v5291, %v5289
        %v5322 = vpack.c.b16 %v5292, %v5290
        %v5323 = vpack.c.b16 %v5295, %v5293
        %v5324 = vpack.c.b16 %v5296, %v5294
        %v5325 = vpack.c.b16 %v5299, %v5297
        %v5326 = vpack.c.b16 %v5300, %v5298
        %v5327 = vpack.c.b16 %v5303, %v5301
        %v5328 = vpack.c.b16 %v5304, %v5302
        %v5354 = vsel %vm1191, %v5139, 0
        %v5357 = vsel %vm1191, %v5142, 0
        %v5360 = vsel %vm1191, %v5145, 0
        %v5363 = vsel %vm1191, %v5148, 0
        %v5366 = vsel %vm1191, %v5151, 0
        %v5369 = vsel %vm1191, %v5154, 0
        %v5372 = vsel %vm1191, %v5157, 0
        %v5375 = vsel %vm1191, %v5160, 0
        %v5378 = vsel %vm1191, %v5163, 0
        %v5381 = vsel %vm1191, %v5166, 0
        %v5384 = vsel %vm1191, %v5169, 0
        %v5387 = vsel %vm1191, %v5172, 0
        %5389 = vmatprep.subr.bf16.mxu0 %v5320
        %5390 = vmatpush1.bf16.msra.mxu0 %v5319
        %5391 = vmatprep.subr.bf16.mxu0 %v5318
        %5392 = vmatpush1.bf16.msra.mxu0 %v5317
        %5393 = vmatprep.subr.bf16.mxu0 %v5316
        %5394 = vmatpush1.bf16.msra.mxu0 %v5315
        %5395 = vmatprep.subr.bf16.mxu0 %v5314
        %5396 = vmatpush1.bf16.msra.mxu0 %v5313
        %5397 = vmatprep.subr.bf16.mxu0 %v5312
        %5398 = vmatpush1.bf16.msra.mxu0 %v5311
        %5399 = vmatprep.subr.bf16.mxu0 %v5310
        %5400 = vmatpush1.bf16.msra.mxu0 %v5309
        %5401 = vmatprep.subr.bf16.mxu0 %v5308
        %5402 = vmatpush1.bf16.msra.mxu0 %v5307
        %5403 = vmatprep.subr.bf16.mxu0 %v5306
        %5404 = vmatpush1.bf16.msra.mxu0 %v5305
        %5405 = vmatprep.subr.bf16.mxu0 0
        %5406 = vmatpush2.bf16.msra.mxu0 0
        %5407 = vmatprep.subr.bf16.mxu0 0
        %5408 = vmatpush2.bf16.msra.mxu0 0
        %5409 = vmatprep.subr.bf16.mxu0 0
        %5410 = vmatpush2.bf16.msra.mxu0 0
        %5411 = vmatprep.subr.bf16.mxu0 0
        %5412 = vmatpush2.bf16.msra.mxu0 0
        %5413 = vmatprep.subr.bf16.mxu0 %v5328
        %5414 = vmatpush2.bf16.msra.mxu0 %v5327
        %5415 = vmatprep.subr.bf16.mxu0 %v5326
        %5416 = vmatpush2.bf16.msra.mxu0 %v5325
        %5417 = vmatprep.subr.bf16.mxu0 %v5324
        %5418 = vmatpush2.bf16.msra.mxu0 %v5323
        %5419 = vmatprep.subr.bf16.mxu0 %v5322
        %5420 = vmatpush2.bf16.msra.mxu0 %v5321
        %5421 = vmatprep.mubr.bf16.mxu0 %v5354
        %5422 = vmatmul.mubr.bf16.gmra.mxu0 %v5174
        %v5423 = vpop.f32.mrf.mxu0
        %v5424 = vadd.f32 0.0, %v5423
        %v5425 = vpop.f32.mrf.mxu0
        %v5426 = vpop.f32.mrf.mxu0
        %v5427 = vadd.f32 0.0, %v5426
        %v5428 = vpop.f32.mrf.mxu0
        %5429 = vmatprep.mubr.bf16.mxu0 %v5357
        %5430 = vmatmul.mubr.bf16.gmra.mxu0 %v5177
        %v5431 = vpop.f32.mrf.mxu0
        %v5432 = vadd.f32 0.0, %v5431
        %v5433 = vpop.f32.mrf.mxu0
        %v5434 = vpop.f32.mrf.mxu0
        %v5435 = vadd.f32 0.0, %v5434
        %v5436 = vpop.f32.mrf.mxu0
        %5437 = vmatprep.mubr.bf16.mxu0 %v5360
        %5438 = vmatmul.mubr.bf16.gmra.mxu0 %v5180
        %v5439 = vpop.f32.mrf.mxu0
        %v5440 = vadd.f32 0.0, %v5439
        %v5441 = vpop.f32.mrf.mxu0
        %v5442 = vadd.f32 0.0, %v5441
        %v5443 = vpop.f32.mrf.mxu0
        %v5444 = vadd.f32 0.0, %v5443
        %v5445 = vpop.f32.mrf.mxu0
        %v5446 = vadd.f32 0.0, %v5445
        %5447 = vmatprep.mubr.bf16.mxu0 %v5363
        %5448 = vmatmul.mubr.bf16.gmra.mxu0 %v5183
        %v5449 = vpop.f32.mrf.mxu0
        %v5450 = vadd.f32 0.0, %v5449
        %v5451 = vpop.f32.mrf.mxu0
        %v5452 = vadd.f32 0.0, %v5451
        %v5453 = vpop.f32.mrf.mxu0
        %v5454 = vadd.f32 0.0, %v5453
        %v5455 = vpop.f32.mrf.mxu0
        %v5456 = vadd.f32 0.0, %v5455
        %5457 = vmatprep.mubr.bf16.mxu0 %v5366
        %5458 = vmatmul.mubr.bf16.gmra.mxu0 %v5186
        %v5459 = vpop.f32.mrf.mxu0
        %v5460 = vadd.f32 0.0, %v5459
        %v5461 = vpop.f32.mrf.mxu0
        %v5462 = vadd.f32 0.0, %v5461
        %v5463 = vpop.f32.mrf.mxu0
        %v5464 = vadd.f32 0.0, %v5463
        %v5465 = vpop.f32.mrf.mxu0
        %v5466 = vadd.f32 0.0, %v5465
        %5467 = vmatprep.mubr.bf16.mxu0 %v5369
        %5468 = vmatmul.mubr.bf16.gmra.mxu0 %v5189
        %v5469 = vpop.f32.mrf.mxu0
        %v5470 = vadd.f32 0.0, %v5469
        %v5471 = vpop.f32.mrf.mxu0
        %v5472 = vadd.f32 0.0, %v5471
        %v5473 = vpop.f32.mrf.mxu0
        %v5474 = vadd.f32 0.0, %v5473
        %v5475 = vpop.f32.mrf.mxu0
        %v5476 = vadd.f32 0.0, %v5475
        %5477 = vmatprep.mubr.bf16.mxu0 %v5372
        %5478 = vmatmul.mubr.bf16.gmra.mxu0 %v5192
        %v5479 = vpop.f32.mrf.mxu0
        %v5480 = vadd.f32 0.0, %v5479
        %v5481 = vpop.f32.mrf.mxu0
        %v5482 = vadd.f32 0.0, %v5481
        %v5483 = vpop.f32.mrf.mxu0
        %v5484 = vadd.f32 0.0, %v5483
        %v5485 = vpop.f32.mrf.mxu0
        %v5486 = vadd.f32 0.0, %v5485
        %5487 = vmatprep.mubr.bf16.mxu0 %v5375
        %5488 = vmatmul.mubr.bf16.gmra.mxu0 %v5195
        %v5489 = vpop.f32.mrf.mxu0
        %v5490 = vadd.f32 0.0, %v5489
        %v5491 = vpop.f32.mrf.mxu0
        %v5492 = vadd.f32 0.0, %v5491
        %v5493 = vpop.f32.mrf.mxu0
        %v5494 = vadd.f32 0.0, %v5493
        %v5495 = vpop.f32.mrf.mxu0
        %v5496 = vadd.f32 0.0, %v5495
        %5497 = vmatprep.mubr.bf16.mxu0 %v5378
        %5498 = vmatmul.mubr.bf16.gmra.mxu0 %v5198
        %v5499 = vpop.f32.mrf.mxu0
        %v5500 = vadd.f32 0.0, %v5499
        %v5501 = vpop.f32.mrf.mxu0
        %v5502 = vadd.f32 0.0, %v5501
        %v5503 = vpop.f32.mrf.mxu0
        %v5504 = vadd.f32 0.0, %v5503
        %v5505 = vpop.f32.mrf.mxu0
        %v5506 = vadd.f32 0.0, %v5505
        %5507 = vmatprep.mubr.bf16.mxu0 %v5381
        %5508 = vmatmul.mubr.bf16.gmra.mxu0 %v5201
        %v5509 = vpop.f32.mrf.mxu0
        %v5510 = vadd.f32 0.0, %v5509
        %v5511 = vpop.f32.mrf.mxu0
        %v5512 = vadd.f32 0.0, %v5511
        %v5513 = vpop.f32.mrf.mxu0
        %v5514 = vadd.f32 0.0, %v5513
        %v5515 = vpop.f32.mrf.mxu0
        %v5516 = vadd.f32 0.0, %v5515
        %5517 = vmatprep.mubr.bf16.mxu0 %v5384
        %5518 = vmatmul.mubr.bf16.gmra.mxu0 %v5204
        %v5519 = vpop.f32.mrf.mxu0
        %v5520 = vadd.f32 0.0, %v5519
        %v5521 = vpop.f32.mrf.mxu0
        %v5522 = vadd.f32 0.0, %v5521
        %v5523 = vpop.f32.mrf.mxu0
        %v5524 = vadd.f32 0.0, %v5523
        %v5525 = vpop.f32.mrf.mxu0
        %v5526 = vadd.f32 0.0, %v5525
        %5527 = vmatprep.mubr.bf16.mxu0 %v5387
        %5528 = vmatmul.mubr.bf16.gmra.mxu0 %v5207
        %v5529 = vpop.f32.mrf.mxu0
        %v5530 = vpop.f32.mrf.mxu0
        %v5531 = vadd.f32 0.0, %v5530
        %v5532 = vpop.f32.mrf.mxu0
        %v5533 = vpop.f32.mrf.mxu0
        %v5534 = vadd.f32 0.0, %v5533
        %5535 = vdwg.mxu0
        %5556 = vrot.lane.b32.xlu0 %v5432, 64
        %v5557 = vpop.permute.xlu0 %5556
        %5558 = vrot.lane.b32.xlu0 %v5435, 64
        %v5559 = vpop.permute.xlu0 %5558
        %5560 = vrot.lane.b32.xlu0 %v5440, 64
        %v5561 = vpop.permute.xlu0 %5560
        %5562 = vrot.lane.b32.xlu0 %v5444, 64
        %v5563 = vpop.permute.xlu0 %5562
        %5564 = vrot.lane.b32.xlu0 %v5450, 64
        %v5565 = vpop.permute.xlu0 %5564
        %5566 = vrot.lane.b32.xlu0 %v5454, 64
        %v5567 = vpop.permute.xlu0 %5566
        %5568 = vrot.lane.b32.xlu0 %v5460, 64
        %v5569 = vpop.permute.xlu0 %5568
        %5570 = vrot.lane.b32.xlu0 %v5464, 64
        %v5571 = vpop.permute.xlu0 %5570
        %5572 = vrot.lane.b32.xlu0 %v5470, 64
        %v5573 = vpop.permute.xlu0 %5572
        %5574 = vrot.lane.b32.xlu0 %v5474, 64
        %v5575 = vpop.permute.xlu0 %5574
        %5576 = vrot.lane.b32.xlu0 %v5480, 64
        %v5577 = vpop.permute.xlu0 %5576
        %5578 = vrot.lane.b32.xlu0 %v5484, 64
        %v5579 = vpop.permute.xlu0 %5578
        %5580 = vrot.lane.b32.xlu0 %v5490, 64
        %v5581 = vpop.permute.xlu0 %5580
        %5582 = vrot.lane.b32.xlu0 %v5494, 64
        %v5583 = vpop.permute.xlu0 %5582
        %5584 = vrot.lane.b32.xlu0 %v5500, 64
        %v5585 = vpop.permute.xlu0 %5584
        %5586 = vrot.lane.b32.xlu0 %v5504, 64
        %v5587 = vpop.permute.xlu0 %5586
        %5588 = vrot.lane.b32.xlu0 %v5510, 64
        %v5589 = vpop.permute.xlu0 %5588
        %5590 = vrot.lane.b32.xlu0 %v5514, 64
        %v5591 = vpop.permute.xlu0 %5590
        %5592 = vrot.lane.b32.xlu0 %v5520, 64
        %v5593 = vpop.permute.xlu0 %5592
        %5594 = vrot.lane.b32.xlu0 %v5524, 64
        %v5595 = vpop.permute.xlu0 %5594
        %v5616 = vadd.f32 %v5424, %v5557
        %v5617 = vadd.f32 %v5427, %v5559
        %v5618 = vadd.f32 %v5432, %v5561
        %v5619 = vadd.f32 %v5435, %v5563
        %v5620 = vadd.f32 %v5440, %v5565
        %v5621 = vadd.f32 %v5444, %v5567
        %v5622 = vadd.f32 %v5450, %v5569
        %v5623 = vadd.f32 %v5454, %v5571
        %v5624 = vadd.f32 %v5460, %v5573
        %v5625 = vadd.f32 %v5464, %v5575
        %v5626 = vadd.f32 %v5470, %v5577
        %v5627 = vadd.f32 %v5474, %v5579
        %v5628 = vadd.f32 %v5480, %v5581
        %v5629 = vadd.f32 %v5484, %v5583
        %v5630 = vadd.f32 %v5490, %v5585
        %v5631 = vadd.f32 %v5494, %v5587
        %v5632 = vadd.f32 %v5500, %v5589
        %v5633 = vadd.f32 %v5504, %v5591
        %v5634 = vadd.f32 %v5510, %v5593
        %v5635 = vadd.f32 %v5514, %v5595
        %v5636 = vadd.f32 %v5616, %v5442
        %v5637 = vadd.f32 %v5617, %v5446
        %v5638 = vadd.f32 %v5618, %v5452
        %v5639 = vadd.f32 %v5619, %v5456
        %v5640 = vadd.f32 %v5620, %v5462
        %v5641 = vadd.f32 %v5621, %v5466
        %v5642 = vadd.f32 %v5622, %v5472
        %v5643 = vadd.f32 %v5623, %v5476
        %v5644 = vadd.f32 %v5624, %v5482
        %v5645 = vadd.f32 %v5625, %v5486
        %v5646 = vadd.f32 %v5626, %v5492
        %v5647 = vadd.f32 %v5627, %v5496
        %v5648 = vadd.f32 %v5628, %v5502
        %v5649 = vadd.f32 %v5629, %v5506
        %v5650 = vadd.f32 %v5630, %v5512
        %v5651 = vadd.f32 %v5631, %v5516
        %v5652 = vadd.f32 %v5632, %v5522
        %v5653 = vadd.f32 %v5633, %v5526
        %v5654 = vadd.f32 %v5634, %v5531
        %v5655 = vadd.f32 %v5635, %v5534
        %v5656 = vadd.f32 %v3550, %v5636
        %v5657 = vadd.f32 %v3551, %v5637
        %v5658 = vadd.f32 %v3552, %v5638
        %v5659 = vadd.f32 %v3553, %v5639
        %v5660 = vadd.f32 %v3554, %v5640
        %v5661 = vadd.f32 %v3555, %v5641
        %v5662 = vadd.f32 %v3556, %v5642
        %v5663 = vadd.f32 %v3557, %v5643
        %v5664 = vadd.f32 %v3558, %v5644
        %v5665 = vadd.f32 %v3559, %v5645
        %v5666 = vadd.f32 %v3560, %v5646
        %v5667 = vadd.f32 %v3561, %v5647
        %v5668 = vadd.f32 %v3562, %v5648
        %v5669 = vadd.f32 %v3563, %v5649
        %v5670 = vadd.f32 %v3564, %v5650
        %v5671 = vadd.f32 %v3565, %v5651
        %v5672 = vadd.f32 %v3566, %v5652
        %v5673 = vadd.f32 %v3567, %v5653
        %v5674 = vadd.f32 %v3568, %v5654
        %v5675 = vadd.f32 %v3569, %v5655
        %v5676 = vld [vmem:[%s9] sm:$0x1]
        %v5678 = vlaneseq
        %v5679 = vshrl.u32 %v5678, 7
        %v5680 = vsub.s32 0, %v5679
        %v5681 = vrot.slane %v5676, %v5680
        %v5683 = vadd.f32 %v5656, %v5681
        %v5684 = vadd.f32 %v5657, %v5681
        %v5685 = vadd.f32 %v5658, %v5681
        %v5686 = vadd.f32 %v5659, %v5681
        %v5687 = vadd.f32 %v5660, %v5681
        %v5688 = vadd.f32 %v5661, %v5681
        %v5689 = vadd.f32 %v5662, %v5681
        %v5690 = vadd.f32 %v5663, %v5681
        %v5691 = vadd.f32 %v5664, %v5681
        %v5692 = vadd.f32 %v5665, %v5681
        %v5693 = vadd.f32 %v5666, %v5681
        %v5694 = vadd.f32 %v5667, %v5681
        %v5695 = vadd.f32 %v5668, %v5681
        %v5696 = vadd.f32 %v5669, %v5681
        %v5697 = vadd.f32 %v5670, %v5681
        %v5698 = vadd.f32 %v5671, %v5681
        %v5699 = vadd.f32 %v5672, %v5681
        %v5700 = vadd.f32 %v5673, %v5681
        %v5701 = vadd.f32 %v5674, %v5681
        %v5702 = vadd.f32 %v5675, %v5681
        %s5703 = sadd.s32 %s589, 4
        %s5704 = scalar_lea.vmem %s1, %s5703
        %v5705 = vld [vmem:[%s5704] sm:$0xff]
        %v5706 = vld [vmem:[%s5704 + $0x8] sm:$0x3]
        %v5709 = vcombine.high %v5705, %v5705
        %v5711 = vunpack.c.l.s4 1966171168
        %v5712 = vunpack.c.0.s8 %v5711
        %v5713 = vlaneseq
        %v5714 = vshrl.u32 %v5713, 7
        %v5715 = vsub.s32 %v5712, %v5714
        %v5716 = vrot.slane %v5705, %v5715
        %v5718 = vunpack.c.l.s4 1966171168
        %v5719 = vunpack.c.0.s8 %v5718
        %v5720 = vlaneseq
        %v5721 = vshrl.u32 %v5720, 7
        %v5722 = vsub.s32 %v5719, %v5721
        %v5723 = vrot.slane %v5709, %v5722
        %v5724 = vcombine.high %v5716, %v5716
        %v5725 = vcombine.high %v5723, %v5723
        %v5727 = vunpack.c.l.s4 1966171168
        %v5728 = vunpack.c.0.s8 %v5727
        %v5729 = vlaneseq
        %v5730 = vshrl.u32 %v5729, 7
        %v5731 = vsub.s32 %v5728, %v5730
        %v5732 = vrot.slane %v5716, %v5731
        %v5734 = vunpack.c.l.s4 1966171168
        %v5735 = vunpack.c.0.s8 %v5734
        %v5736 = vlaneseq
        %v5737 = vshrl.u32 %v5736, 7
        %v5738 = vsub.s32 %v5735, %v5737
        %v5739 = vrot.slane %v5723, %v5738
        %v5741 = vunpack.c.l.s4 1966171168
        %v5742 = vunpack.c.0.s8 %v5741
        %v5743 = vlaneseq
        %v5744 = vshrl.u32 %v5743, 7
        %v5745 = vsub.s32 %v5742, %v5744
        %v5746 = vrot.slane %v5724, %v5745
        %v5748 = vunpack.c.l.s4 1966171168
        %v5749 = vunpack.c.0.s8 %v5748
        %v5750 = vlaneseq
        %v5751 = vshrl.u32 %v5750, 7
        %v5752 = vsub.s32 %v5749, %v5751
        %v5753 = vrot.slane %v5725, %v5752
        %v5754 = vcombine.high %v5732, %v5732
        %v5755 = vcombine.high %v5739, %v5739
        %v5756 = vcombine.high %v5746, %v5746
        %v5757 = vcombine.high %v5753, %v5753
        %v5759 = vunpack.c.l.s4 1966171168
        %v5760 = vunpack.c.0.s8 %v5759
        %v5761 = vlaneseq
        %v5762 = vshrl.u32 %v5761, 7
        %v5763 = vsub.s32 %v5760, %v5762
        %v5764 = vrot.slane %v5706, %v5763
        %v5765 = vcombine.high %v5764, %v5764
        %v5767 = vunpack.c.l.s4 1966171168
        %v5768 = vunpack.c.0.s8 %v5767
        %v5769 = vlaneseq
        %v5770 = vshrl.u32 %v5769, 7
        %v5771 = vsub.s32 %v5768, %v5770
        %v5772 = vrot.slane %v5764, %v5771
        %v5774 = vunpack.c.l.s4 1966171168
        %v5775 = vunpack.c.0.s8 %v5774
        %v5776 = vlaneseq
        %v5777 = vshrl.u32 %v5776, 7
        %v5778 = vsub.s32 %v5775, %v5777
        %v5779 = vrot.slane %v5765, %v5778
        %v5780 = vlaneseq
        %v5781 = vshrl.u32 %v5780, 7
        %v5782 = vsub.s32 0, %v5781
        %v5783 = vrot.slane %v5732, %v5782
        %v5784 = vlaneseq
        %v5785 = vshrl.u32 %v5784, 7
        %v5786 = vsub.s32 0, %v5785
        %v5787 = vrot.slane %v5746, %v5786
        %v5788 = vlaneseq
        %v5789 = vshrl.u32 %v5788, 7
        %v5790 = vsub.s32 0, %v5789
        %v5791 = vrot.slane %v5754, %v5790
        %v5792 = vlaneseq
        %v5793 = vshrl.u32 %v5792, 7
        %v5794 = vsub.s32 0, %v5793
        %v5795 = vrot.slane %v5756, %v5794
        %v5796 = vlaneseq
        %v5797 = vshrl.u32 %v5796, 7
        %v5798 = vsub.s32 0, %v5797
        %v5799 = vrot.slane %v5739, %v5798
        %v5800 = vlaneseq
        %v5801 = vshrl.u32 %v5800, 7
        %v5802 = vsub.s32 0, %v5801
        %v5803 = vrot.slane %v5753, %v5802
        %v5804 = vlaneseq
        %v5805 = vshrl.u32 %v5804, 7
        %v5806 = vsub.s32 0, %v5805
        %v5807 = vrot.slane %v5755, %v5806
        %v5808 = vlaneseq
        %v5809 = vshrl.u32 %v5808, 7
        %v5810 = vsub.s32 0, %v5809
        %v5811 = vrot.slane %v5757, %v5810
        %v5812 = vlaneseq
        %v5813 = vshrl.u32 %v5812, 7
        %v5814 = vsub.s32 0, %v5813
        %v5815 = vrot.slane %v5772, %v5814
        %v5816 = vlaneseq
        %v5817 = vshrl.u32 %v5816, 7
        %v5818 = vsub.s32 0, %v5817
        %v5819 = vrot.slane %v5779, %v5818
        %5820 = vset.pattern.permute.xlu0 0
        %5821 = vperm.xlu0 %5820, %v5783
        %v5822 = vpop.permute.xlu0 %5821
        %5824 = vset.pattern.permute.xlu0 0
        %5825 = vperm.xlu0 %5824, %v5787
        %v5826 = vpop.permute.xlu0 %5825
        %5828 = vset.pattern.permute.xlu0 0
        %5829 = vperm.xlu0 %5828, %v5791
        %v5830 = vpop.permute.xlu0 %5829
        %5832 = vset.pattern.permute.xlu0 0
        %5833 = vperm.xlu0 %5832, %v5795
        %v5834 = vpop.permute.xlu0 %5833
        %5836 = vset.pattern.permute.xlu0 0
        %5837 = vperm.xlu0 %5836, %v5799
        %v5838 = vpop.permute.xlu0 %5837
        %5840 = vset.pattern.permute.xlu0 0
        %5841 = vperm.xlu0 %5840, %v5803
        %v5842 = vpop.permute.xlu0 %5841
        %5844 = vset.pattern.permute.xlu0 0
        %5845 = vperm.xlu0 %5844, %v5807
        %v5846 = vpop.permute.xlu0 %5845
        %5848 = vset.pattern.permute.xlu0 0
        %5849 = vperm.xlu0 %5848, %v5811
        %v5850 = vpop.permute.xlu0 %5849
        %5852 = vset.pattern.permute.xlu0 0
        %5853 = vperm.xlu0 %5852, %v5815
        %v5854 = vpop.permute.xlu0 %5853
        %5856 = vset.pattern.permute.xlu0 0
        %5857 = vperm.xlu0 %5856, %v5819
        %v5858 = vpop.permute.xlu0 %5857
        %v5860 = vmul.f32 %v5683, %v5822
        %v5861 = vmul.f32 %v5684, %v5822
        %v5862 = vmul.f32 %v5685, %v5826
        %v5863 = vmul.f32 %v5686, %v5826
        %v5864 = vmul.f32 %v5687, %v5830
        %v5865 = vmul.f32 %v5688, %v5830
        %v5866 = vmul.f32 %v5689, %v5834
        %v5867 = vmul.f32 %v5690, %v5834
        %v5868 = vmul.f32 %v5691, %v5838
        %v5869 = vmul.f32 %v5692, %v5838
        %v5870 = vmul.f32 %v5693, %v5842
        %v5871 = vmul.f32 %v5694, %v5842
        %v5872 = vmul.f32 %v5695, %v5846
        %v5873 = vmul.f32 %v5696, %v5846
        %v5874 = vmul.f32 %v5697, %v5850
        %v5875 = vmul.f32 %v5698, %v5850
        %v5876 = vmul.f32 %v5699, %v5854
        %v5877 = vmul.f32 %v5700, %v5854
        %v5878 = vmul.f32 %v5701, %v5858
        %v5879 = vmul.f32 %v5702, %v5858
        %v5880 = vld [vmem:[#allocation11] sm:$0xff]
        %v5881 = vld [vmem:[#allocation11 + $0x8] sm:$0xff]
        %v5882 = vld [vmem:[#allocation11 + $0x10] sm:$0xff]
        %v5883 = vld [vmem:[#allocation11 + $0x18] sm:$0xff]
        %v5884 = vld [vmem:[#allocation11 + $0x20] sm:$0xff]
        %v5885 = vld [vmem:[#allocation11 + $0x28] sm:$0xff]
        %v5886 = vld [vmem:[#allocation11 + $0x30] sm:$0xff]
        %v5887 = vld [vmem:[#allocation11 + $0x38] sm:$0xff]
        %v5888 = vld [vmem:[#allocation11 + $0x40] sm:$0xff]
        %v5889 = vld [vmem:[#allocation11 + $0x48] sm:$0xff]
        %v5890 = vld [vmem:[#allocation11 + $0x50] sm:$0xff]
        %v5891 = vld [vmem:[#allocation11 + $0x58] sm:$0xff]
        %v5892 = vld [vmem:[#allocation11 + $0x60] sm:$0xff]
        %v5893 = vld [vmem:[#allocation11 + $0x68] sm:$0xff]
        %v5894 = vld [vmem:[#allocation11 + $0x70] sm:$0xff]
        %v5895 = vld [vmem:[#allocation11 + $0x78] sm:$0xff]
        %v5896 = vld [vmem:[#allocation11 + $0x80] sm:$0xff]
        %v5897 = vld [vmem:[#allocation11 + $0x88] sm:$0xff]
        %v5898 = vld [vmem:[#allocation11 + $0x90] sm:$0xff]
        %v5899 = vld [vmem:[#allocation11 + $0x98] sm:$0xff]
        %v5900 = vld [vmem:[#allocation11 + $0xa0] sm:$0xff]
        %v5901 = vld [vmem:[#allocation11 + $0xa8] sm:$0xff]
        %v5902 = vld [vmem:[#allocation11 + $0xb0] sm:$0xff]
        %v5903 = vld [vmem:[#allocation11 + $0xb8] sm:$0xff]
        %v5928 = vunpack.c.l.b16 %v5880
        %v5929 = vunpack.c.h.b16 %v5880
        %v5930 = vunpack.c.l.b16 %v5881
        %v5931 = vunpack.c.h.b16 %v5881
        %v5932 = vunpack.c.l.b16 %v5882
        %v5933 = vunpack.c.h.b16 %v5882
        %v5934 = vunpack.c.l.b16 %v5883
        %v5935 = vunpack.c.h.b16 %v5883
        %v5936 = vunpack.c.l.b16 %v5884
        %v5937 = vunpack.c.h.b16 %v5884
        %v5938 = vunpack.c.l.b16 %v5885
        %v5939 = vunpack.c.h.b16 %v5885
        %v5940 = vunpack.c.l.b16 %v5886
        %v5941 = vunpack.c.h.b16 %v5886
        %v5942 = vunpack.c.l.b16 %v5887
        %v5943 = vunpack.c.h.b16 %v5887
        %v5944 = vunpack.c.l.b16 %v5888
        %v5945 = vunpack.c.h.b16 %v5888
        %v5946 = vunpack.c.l.b16 %v5889
        %v5947 = vunpack.c.h.b16 %v5889
        %v5948 = vunpack.c.l.b16 %v5890
        %v5949 = vunpack.c.h.b16 %v5890
        %v5950 = vunpack.c.l.b16 %v5891
        %v5951 = vunpack.c.h.b16 %v5891
        %v5952 = vunpack.c.l.b16 %v5892
        %v5953 = vunpack.c.h.b16 %v5892
        %v5954 = vunpack.c.l.b16 %v5893
        %v5955 = vunpack.c.h.b16 %v5893
        %v5956 = vunpack.c.l.b16 %v5894
        %v5957 = vunpack.c.h.b16 %v5894
        %v5958 = vunpack.c.l.b16 %v5895
        %v5959 = vunpack.c.h.b16 %v5895
        %v5960 = vunpack.c.l.b16 %v5896
        %v5961 = vunpack.c.h.b16 %v5896
        %v5962 = vunpack.c.l.b16 %v5897
        %v5963 = vunpack.c.h.b16 %v5897
        %v5964 = vunpack.c.l.b16 %v5898
        %v5965 = vunpack.c.h.b16 %v5898
        %v5966 = vunpack.c.l.b16 %v5899
        %v5967 = vunpack.c.h.b16 %v5899
        %v5968 = vunpack.c.l.b16 %v5900
        %v5969 = vunpack.c.h.b16 %v5900
        %v5970 = vunpack.c.l.b16 %v5901
        %v5971 = vunpack.c.h.b16 %v5901
        %v5972 = vunpack.c.l.b16 %v5902
        %v5973 = vunpack.c.h.b16 %v5902
        %v5974 = vunpack.c.l.b16 %v5903
        %v5975 = vunpack.c.h.b16 %v5903
        %v5976 = vpack.c.b16 %v5930, %v5928
        %v5977 = vpack.c.b16 %v5931, %v5929
        %v5978 = vpack.c.b16 %v5934, %v5932
        %v5979 = vpack.c.b16 %v5935, %v5933
        %v5980 = vpack.c.b16 %v5938, %v5936
        %v5981 = vpack.c.b16 %v5939, %v5937
        %v5982 = vpack.c.b16 %v5942, %v5940
        %v5983 = vpack.c.b16 %v5943, %v5941
        %v5984 = vpack.c.b16 %v5946, %v5944
        %v5985 = vpack.c.b16 %v5947, %v5945
        %v5986 = vpack.c.b16 %v5950, %v5948
        %v5987 = vpack.c.b16 %v5951, %v5949
        %v5988 = vpack.c.b16 %v5954, %v5952
        %v5989 = vpack.c.b16 %v5955, %v5953
        %v5990 = vpack.c.b16 %v5958, %v5956
        %v5991 = vpack.c.b16 %v5959, %v5957
        %v5992 = vpack.c.b16 %v5962, %v5960
        %v5993 = vpack.c.b16 %v5963, %v5961
        %v5994 = vpack.c.b16 %v5966, %v5964
        %v5995 = vpack.c.b16 %v5967, %v5965
        %v5996 = vpack.c.b16 %v5970, %v5968
        %v5997 = vpack.c.b16 %v5971, %v5969
        %v5998 = vpack.c.b16 %v5974, %v5972
        %v5999 = vpack.c.b16 %v5975, %v5973
        %6024 = vmatprep.subr.bf16.mxu0 %v5991
        %6025 = vmatpush1.bf16.msra.mxu0 %v5990
        %6026 = vmatprep.subr.bf16.mxu0 %v5989
        %6027 = vmatpush1.bf16.msra.mxu0 %v5988
        %6028 = vmatprep.subr.bf16.mxu0 %v5987
        %6029 = vmatpush1.bf16.msra.mxu0 %v5986
        %6030 = vmatprep.subr.bf16.mxu0 %v5985
        %6031 = vmatpush1.bf16.msra.mxu0 %v5984
        %6032 = vmatprep.subr.bf16.mxu0 %v5983
        %6033 = vmatpush1.bf16.msra.mxu0 %v5982
        %6034 = vmatprep.subr.bf16.mxu0 %v5981
        %6035 = vmatpush1.bf16.msra.mxu0 %v5980
        %6036 = vmatprep.subr.bf16.mxu0 %v5979
        %6037 = vmatpush1.bf16.msra.mxu0 %v5978
        %6038 = vmatprep.subr.bf16.mxu0 %v5977
        %6039 = vmatpush1.bf16.msra.mxu0 %v5976
        %6040 = vmatprep.subr.bf16.mxu0 0
        %6041 = vmatpush2.bf16.msra.mxu0 0
        %6042 = vmatprep.subr.bf16.mxu0 0
        %6043 = vmatpush2.bf16.msra.mxu0 0
        %6044 = vmatprep.subr.bf16.mxu0 0
        %6045 = vmatpush2.bf16.msra.mxu0 0
        %6046 = vmatprep.subr.bf16.mxu0 0
        %6047 = vmatpush2.bf16.msra.mxu0 0
        %6048 = vmatprep.subr.bf16.mxu0 %v5999
        %6049 = vmatpush2.bf16.msra.mxu0 %v5998
        %6050 = vmatprep.subr.bf16.mxu0 %v5997
        %6051 = vmatpush2.bf16.msra.mxu0 %v5996
        %6052 = vmatprep.subr.bf16.mxu0 %v5995
        %6053 = vmatpush2.bf16.msra.mxu0 %v5994
        %6054 = vmatprep.subr.bf16.mxu0 %v5993
        %6055 = vmatpush2.bf16.msra.mxu0 %v5992
        %6056 = vmatprep.mubr.bf16.mxu0 %v4201
        %6057 = vmatmul.mubr.bf16.gmra.mxu0 %v4015
        %v6058 = vpop.f32.mrf.mxu0
        %v6059 = vadd.f32 0.0, %v6058
        %v6060 = vpop.f32.mrf.mxu0
        %v6061 = vpop.f32.mrf.mxu0
        %v6062 = vadd.f32 0.0, %v6061
        %v6063 = vpop.f32.mrf.mxu0
        %6064 = vmatprep.mubr.bf16.mxu0 %v4204
        %6065 = vmatmul.mubr.bf16.gmra.mxu0 %v4018
        %v6066 = vpop.f32.mrf.mxu0
        %v6067 = vadd.f32 0.0, %v6066
        %v6068 = vpop.f32.mrf.mxu0
        %v6069 = vpop.f32.mrf.mxu0
        %v6070 = vadd.f32 0.0, %v6069
        %v6071 = vpop.f32.mrf.mxu0
        %6072 = vmatprep.mubr.bf16.mxu0 %v4207
        %6073 = vmatmul.mubr.bf16.gmra.mxu0 %v4021
        %v6074 = vpop.f32.mrf.mxu0
        %v6075 = vadd.f32 0.0, %v6074
        %v6076 = vpop.f32.mrf.mxu0
        %v6077 = vadd.f32 0.0, %v6076
        %v6078 = vpop.f32.mrf.mxu0
        %v6079 = vadd.f32 0.0, %v6078
        %v6080 = vpop.f32.mrf.mxu0
        %v6081 = vadd.f32 0.0, %v6080
        %6082 = vmatprep.mubr.bf16.mxu0 %v4210
        %6083 = vmatmul.mubr.bf16.gmra.mxu0 %v4024
        %v6084 = vpop.f32.mrf.mxu0
        %v6085 = vadd.f32 0.0, %v6084
        %v6086 = vpop.f32.mrf.mxu0
        %v6087 = vadd.f32 0.0, %v6086
        %v6088 = vpop.f32.mrf.mxu0
        %v6089 = vadd.f32 0.0, %v6088
        %v6090 = vpop.f32.mrf.mxu0
        %v6091 = vadd.f32 0.0, %v6090
        %6092 = vmatprep.mubr.bf16.mxu0 %v4213
        %6093 = vmatmul.mubr.bf16.gmra.mxu0 %v4027
        %v6094 = vpop.f32.mrf.mxu0
        %v6095 = vadd.f32 0.0, %v6094
        %v6096 = vpop.f32.mrf.mxu0
        %v6097 = vadd.f32 0.0, %v6096
        %v6098 = vpop.f32.mrf.mxu0
        %v6099 = vadd.f32 0.0, %v6098
        %v6100 = vpop.f32.mrf.mxu0
        %v6101 = vadd.f32 0.0, %v6100
        %6102 = vmatprep.mubr.bf16.mxu0 %v4216
        %6103 = vmatmul.mubr.bf16.gmra.mxu0 %v4030
        %v6104 = vpop.f32.mrf.mxu0
        %v6105 = vadd.f32 0.0, %v6104
        %v6106 = vpop.f32.mrf.mxu0
        %v6107 = vadd.f32 0.0, %v6106
        %v6108 = vpop.f32.mrf.mxu0
        %v6109 = vadd.f32 0.0, %v6108
        %v6110 = vpop.f32.mrf.mxu0
        %v6111 = vadd.f32 0.0, %v6110
        %6112 = vmatprep.mubr.bf16.mxu0 %v4219
        %6113 = vmatmul.mubr.bf16.gmra.mxu0 %v4033
        %v6114 = vpop.f32.mrf.mxu0
        %v6115 = vadd.f32 0.0, %v6114
        %v6116 = vpop.f32.mrf.mxu0
        %v6117 = vadd.f32 0.0, %v6116
        %v6118 = vpop.f32.mrf.mxu0
        %v6119 = vadd.f32 0.0, %v6118
        %v6120 = vpop.f32.mrf.mxu0
        %v6121 = vadd.f32 0.0, %v6120
        %6122 = vmatprep.mubr.bf16.mxu0 %v4222
        %6123 = vmatmul.mubr.bf16.gmra.mxu0 %v4036
        %v6124 = vpop.f32.mrf.mxu0
        %v6125 = vadd.f32 0.0, %v6124
        %v6126 = vpop.f32.mrf.mxu0
        %v6127 = vadd.f32 0.0, %v6126
        %v6128 = vpop.f32.mrf.mxu0
        %v6129 = vadd.f32 0.0, %v6128
        %v6130 = vpop.f32.mrf.mxu0
        %v6131 = vadd.f32 0.0, %v6130
        %6132 = vmatprep.mubr.bf16.mxu0 %v4225
        %6133 = vmatmul.mubr.bf16.gmra.mxu0 %v4039
        %v6134 = vpop.f32.mrf.mxu0
        %v6135 = vadd.f32 0.0, %v6134
        %v6136 = vpop.f32.mrf.mxu0
        %v6137 = vadd.f32 0.0, %v6136
        %v6138 = vpop.f32.mrf.mxu0
        %v6139 = vadd.f32 0.0, %v6138
        %v6140 = vpop.f32.mrf.mxu0
        %v6141 = vadd.f32 0.0, %v6140
        %6142 = vmatprep.mubr.bf16.mxu0 %v4228
        %6143 = vmatmul.mubr.bf16.gmra.mxu0 %v4042
        %v6144 = vpop.f32.mrf.mxu0
        %v6145 = vpop.f32.mrf.mxu0
        %v6146 = vadd.f32 0.0, %v6145
        %v6147 = vpop.f32.mrf.mxu0
        %v6148 = vpop.f32.mrf.mxu0
        %v6149 = vadd.f32 0.0, %v6148
        %6150 = vdwg.mxu0
        %v6151 = vpack.c.bf16 %v5861, %v5860
        %v6152 = vpack.c.bf16 %v5863, %v5862
        %v6153 = vpack.c.bf16 %v5865, %v5864
        %v6154 = vpack.c.bf16 %v5867, %v5866
        %v6155 = vpack.c.bf16 %v5869, %v5868
        %v6156 = vpack.c.bf16 %v5871, %v5870
        %v6157 = vpack.c.bf16 %v5873, %v5872
        %v6158 = vpack.c.bf16 %v5875, %v5874
        %v6159 = vpack.c.bf16 %v5877, %v5876
        %v6160 = vpack.c.bf16 %v5879, %v5878
        %v6162 = vshrl.u32 %v6151, 16
        %v6164 = vrot.slane %v6162, 7
        %v6165 = vshll.u32 %v6151, 16
        %v6167 = vor.u32 %v6164, %v6165
        %v6169 = vshrl.u32 %v6152, 16
        %v6171 = vrot.slane %v6169, 7
        %v6172 = vshll.u32 %v6152, 16
        %v6174 = vor.u32 %v6171, %v6172
        %v6176 = vshrl.u32 %v6153, 16
        %v6178 = vrot.slane %v6176, 7
        %v6179 = vshll.u32 %v6153, 16
        %v6181 = vor.u32 %v6178, %v6179
        %v6183 = vshrl.u32 %v6154, 16
        %v6185 = vrot.slane %v6183, 7
        %v6186 = vshll.u32 %v6154, 16
        %v6188 = vor.u32 %v6185, %v6186
        %v6190 = vshrl.u32 %v6155, 16
        %v6192 = vrot.slane %v6190, 7
        %v6193 = vshll.u32 %v6155, 16
        %v6195 = vor.u32 %v6192, %v6193
        %v6197 = vshrl.u32 %v6156, 16
        %v6199 = vrot.slane %v6197, 7
        %v6200 = vshll.u32 %v6156, 16
        %v6202 = vor.u32 %v6199, %v6200
        %v6204 = vshrl.u32 %v6157, 16
        %v6206 = vrot.slane %v6204, 7
        %v6207 = vshll.u32 %v6157, 16
        %v6209 = vor.u32 %v6206, %v6207
        %v6211 = vshrl.u32 %v6158, 16
        %v6213 = vrot.slane %v6211, 7
        %v6214 = vshll.u32 %v6158, 16
        %v6216 = vor.u32 %v6213, %v6214
        %v6218 = vshrl.u32 %v6159, 16
        %v6220 = vrot.slane %v6218, 7
        %v6221 = vshll.u32 %v6159, 16
        %v6223 = vor.u32 %v6220, %v6221
        %v6225 = vshrl.u32 %v6160, 16
        %v6227 = vrot.slane %v6225, 7
        %v6228 = vshll.u32 %v6160, 16
        %v6230 = vor.u32 %v6227, %v6228
        %v6251 = vsel %vm810, 0, %v6167
        %v6252 = vsel %vm810, 0, %v6174
        %v6253 = vsel %vm810, 0, %v6181
        %v6254 = vsel %vm810, 0, %v6188
        %v6255 = vsel %vm810, 0, %v6195
        %v6256 = vsel %vm810, 0, %v6202
        %v6257 = vsel %vm810, 0, %v6209
        %v6258 = vsel %vm810, 0, %v6216
        %v6259 = vsel %vm810, 0, %v6223
        %v6260 = vsel %vm810, 0, %v6230
        %v6261 = vsel %vm810, %v6164, 0
        %v6262 = vsel %vm810, %v6171, 0
        %v6263 = vsel %vm810, %v6178, 0
        %v6264 = vsel %vm810, %v6185, 0
        %v6265 = vsel %vm810, %v6192, 0
        %v6266 = vsel %vm810, %v6199, 0
        %v6267 = vsel %vm810, %v6206, 0
        %v6268 = vsel %vm810, %v6213, 0
        %v6269 = vsel %vm810, %v6220, 0
        %v6270 = vsel %vm810, %v6227, 0
        %v6272 = vshrl.u32 %v6251, 16
        %v6274 = vshll.u32 %v6251, 16
        %v6276 = vrot.slane %v6274, 1
        %v6277 = vor.u32 %v6272, %v6276
        %v6279 = vshll.u32 %v6261, 16
        %v6281 = vrot.slane %v6279, 1
        %v6282 = vsel %vm847, %v6277, %v6281
        %v6284 = vshrl.u32 %v6252, 16
        %v6286 = vshll.u32 %v6252, 16
        %v6288 = vrot.slane %v6286, 1
        %v6289 = vor.u32 %v6284, %v6288
        %v6291 = vshll.u32 %v6262, 16
        %v6293 = vrot.slane %v6291, 1
        %v6294 = vsel %vm847, %v6289, %v6293
        %v6296 = vshrl.u32 %v6253, 16
        %v6298 = vshll.u32 %v6253, 16
        %v6300 = vrot.slane %v6298, 1
        %v6301 = vor.u32 %v6296, %v6300
        %v6303 = vshll.u32 %v6263, 16
        %v6305 = vrot.slane %v6303, 1
        %v6306 = vsel %vm847, %v6301, %v6305
        %v6308 = vshrl.u32 %v6254, 16
        %v6310 = vshll.u32 %v6254, 16
        %v6312 = vrot.slane %v6310, 1
        %v6313 = vor.u32 %v6308, %v6312
        %v6315 = vshll.u32 %v6264, 16
        %v6317 = vrot.slane %v6315, 1
        %v6318 = vsel %vm847, %v6313, %v6317
        %v6320 = vshrl.u32 %v6255, 16
        %v6322 = vshll.u32 %v6255, 16
        %v6324 = vrot.slane %v6322, 1
        %v6325 = vor.u32 %v6320, %v6324
        %v6327 = vshll.u32 %v6265, 16
        %v6329 = vrot.slane %v6327, 1
        %v6330 = vsel %vm847, %v6325, %v6329
        %v6332 = vshrl.u32 %v6256, 16
        %v6334 = vshll.u32 %v6256, 16
        %v6336 = vrot.slane %v6334, 1
        %v6337 = vor.u32 %v6332, %v6336
        %v6339 = vshll.u32 %v6266, 16
        %v6341 = vrot.slane %v6339, 1
        %v6342 = vsel %vm847, %v6337, %v6341
        %v6344 = vshrl.u32 %v6257, 16
        %v6346 = vshll.u32 %v6257, 16
        %v6348 = vrot.slane %v6346, 1
        %v6349 = vor.u32 %v6344, %v6348
        %v6351 = vshll.u32 %v6267, 16
        %v6353 = vrot.slane %v6351, 1
        %v6354 = vsel %vm847, %v6349, %v6353
        %v6356 = vshrl.u32 %v6258, 16
        %v6358 = vshll.u32 %v6258, 16
        %v6360 = vrot.slane %v6358, 1
        %v6361 = vor.u32 %v6356, %v6360
        %v6363 = vshll.u32 %v6268, 16
        %v6365 = vrot.slane %v6363, 1
        %v6366 = vsel %vm847, %v6361, %v6365
        %v6368 = vshrl.u32 %v6259, 16
        %v6370 = vshll.u32 %v6259, 16
        %v6372 = vrot.slane %v6370, 1
        %v6373 = vor.u32 %v6368, %v6372
        %v6375 = vshll.u32 %v6269, 16
        %v6377 = vrot.slane %v6375, 1
        %v6378 = vsel %vm847, %v6373, %v6377
        %v6380 = vshrl.u32 %v6260, 16
        %v6382 = vshll.u32 %v6260, 16
        %v6384 = vrot.slane %v6382, 1
        %v6385 = vor.u32 %v6380, %v6384
        %v6387 = vshll.u32 %v6270, 16
        %v6389 = vrot.slane %v6387, 1
        %v6390 = vsel %vm847, %v6385, %v6389
        %6391 = vrot.lane.b32.xlu0 %v6282, 64
        %v6392 = vpop.permute.xlu0 %6391
        %6393 = vrot.lane.b32.xlu0 %v6294, 64
        %v6394 = vpop.permute.xlu0 %6393
        %6395 = vrot.lane.b32.xlu0 %v6306, 64
        %v6396 = vpop.permute.xlu0 %6395
        %6397 = vrot.lane.b32.xlu0 %v6318, 64
        %v6398 = vpop.permute.xlu0 %6397
        %6399 = vrot.lane.b32.xlu0 %v6330, 64
        %v6400 = vpop.permute.xlu0 %6399
        %6401 = vrot.lane.b32.xlu0 %v6342, 64
        %v6402 = vpop.permute.xlu0 %6401
        %6403 = vrot.lane.b32.xlu0 %v6354, 64
        %v6404 = vpop.permute.xlu0 %6403
        %6405 = vrot.lane.b32.xlu0 %v6366, 64
        %v6406 = vpop.permute.xlu0 %6405
        %6407 = vrot.lane.b32.xlu0 %v6378, 64
        %v6408 = vpop.permute.xlu0 %6407
        %6409 = vrot.lane.b32.xlu0 %v6390, 64
        %v6410 = vpop.permute.xlu0 %6409
        %v6431 = vrot.slane %v6251, 1
        %v6432 = vrot.slane %v6261, 1
        %v6433 = vsel %vm1136, %v6431, %v6432
        %v6434 = vrot.slane %v6252, 1
        %v6435 = vrot.slane %v6262, 1
        %v6436 = vsel %vm1136, %v6434, %v6435
        %v6437 = vrot.slane %v6253, 1
        %v6438 = vrot.slane %v6263, 1
        %v6439 = vsel %vm1136, %v6437, %v6438
        %v6440 = vrot.slane %v6254, 1
        %v6441 = vrot.slane %v6264, 1
        %v6442 = vsel %vm1136, %v6440, %v6441
        %v6443 = vrot.slane %v6255, 1
        %v6444 = vrot.slane %v6265, 1
        %v6445 = vsel %vm1136, %v6443, %v6444
        %v6446 = vrot.slane %v6256, 1
        %v6447 = vrot.slane %v6266, 1
        %v6448 = vsel %vm1136, %v6446, %v6447
        %v6449 = vrot.slane %v6257, 1
        %v6450 = vrot.slane %v6267, 1
        %v6451 = vsel %vm1136, %v6449, %v6450
        %v6452 = vrot.slane %v6258, 1
        %v6453 = vrot.slane %v6268, 1
        %v6454 = vsel %vm1136, %v6452, %v6453
        %v6455 = vrot.slane %v6259, 1
        %v6456 = vrot.slane %v6269, 1
        %v6457 = vsel %vm1136, %v6455, %v6456
        %v6458 = vrot.slane %v6260, 1
        %v6459 = vrot.slane %v6270, 1
        %v6460 = vsel %vm1136, %v6458, %v6459
        %v6462 = vsel %vm1191, %v6251, %v6392
        %v6465 = vsel %vm1191, %v6252, %v6394
        %v6468 = vsel %vm1191, %v6253, %v6396
        %v6471 = vsel %vm1191, %v6254, %v6398
        %v6474 = vsel %vm1191, %v6255, %v6400
        %v6477 = vsel %vm1191, %v6256, %v6402
        %v6480 = vsel %vm1191, %v6257, %v6404
        %v6483 = vsel %vm1191, %v6258, %v6406
        %v6486 = vsel %vm1191, %v6259, %v6408
        %v6489 = vsel %vm1191, %v6260, %v6410
        %v6491 = vld [vmem:[#allocation13] sm:$0xff]
        %v6492 = vld [vmem:[#allocation13 + $0x8] sm:$0xff]
        %v6493 = vld [vmem:[#allocation13 + $0x10] sm:$0xff]
        %v6494 = vld [vmem:[#allocation13 + $0x18] sm:$0xff]
        %v6495 = vld [vmem:[#allocation13 + $0x20] sm:$0xff]
        %v6496 = vld [vmem:[#allocation13 + $0x28] sm:$0xff]
        %v6497 = vld [vmem:[#allocation13 + $0x30] sm:$0xff]
        %v6498 = vld [vmem:[#allocation13 + $0x38] sm:$0xff]
        %v6499 = vld [vmem:[#allocation13 + $0x40] sm:$0xff]
        %v6500 = vld [vmem:[#allocation13 + $0x48] sm:$0xff]
        %v6501 = vld [vmem:[#allocation13 + $0x50] sm:$0xff]
        %v6502 = vld [vmem:[#allocation13 + $0x58] sm:$0xff]
        %v6503 = vld [vmem:[#allocation13 + $0x60] sm:$0xff]
        %v6504 = vld [vmem:[#allocation13 + $0x68] sm:$0xff]
        %v6505 = vld [vmem:[#allocation13 + $0x70] sm:$0xff]
        %v6506 = vld [vmem:[#allocation13 + $0x78] sm:$0xff]
        %v6507 = vld [vmem:[#allocation13 + $0x80] sm:$0xff]
        %v6508 = vld [vmem:[#allocation13 + $0x88] sm:$0xff]
        %v6509 = vld [vmem:[#allocation13 + $0x90] sm:$0xff]
        %v6510 = vld [vmem:[#allocation13 + $0x98] sm:$0xff]
        %v6511 = vld [vmem:[#allocation13 + $0xa0] sm:$0xff]
        %v6512 = vld [vmem:[#allocation13 + $0xa8] sm:$0xff]
        %v6513 = vld [vmem:[#allocation13 + $0xb0] sm:$0xff]
        %v6514 = vld [vmem:[#allocation13 + $0xb8] sm:$0xff]
        %v6539 = vunpack.c.l.b16 %v6491
        %v6540 = vunpack.c.h.b16 %v6491
        %v6541 = vunpack.c.l.b16 %v6492
        %v6542 = vunpack.c.h.b16 %v6492
        %v6543 = vunpack.c.l.b16 %v6493
        %v6544 = vunpack.c.h.b16 %v6493
        %v6545 = vunpack.c.l.b16 %v6494
        %v6546 = vunpack.c.h.b16 %v6494
        %v6547 = vunpack.c.l.b16 %v6495
        %v6548 = vunpack.c.h.b16 %v6495
        %v6549 = vunpack.c.l.b16 %v6496
        %v6550 = vunpack.c.h.b16 %v6496
        %v6551 = vunpack.c.l.b16 %v6497
        %v6552 = vunpack.c.h.b16 %v6497
        %v6553 = vunpack.c.l.b16 %v6498
        %v6554 = vunpack.c.h.b16 %v6498
        %v6555 = vunpack.c.l.b16 %v6499
        %v6556 = vunpack.c.h.b16 %v6499
        %v6557 = vunpack.c.l.b16 %v6500
        %v6558 = vunpack.c.h.b16 %v6500
        %v6559 = vunpack.c.l.b16 %v6501
        %v6560 = vunpack.c.h.b16 %v6501
        %v6561 = vunpack.c.l.b16 %v6502
        %v6562 = vunpack.c.h.b16 %v6502
        %v6563 = vunpack.c.l.b16 %v6503
        %v6564 = vunpack.c.h.b16 %v6503
        %v6565 = vunpack.c.l.b16 %v6504
        %v6566 = vunpack.c.h.b16 %v6504
        %v6567 = vunpack.c.l.b16 %v6505
        %v6568 = vunpack.c.h.b16 %v6505
        %v6569 = vunpack.c.l.b16 %v6506
        %v6570 = vunpack.c.h.b16 %v6506
        %v6571 = vunpack.c.l.b16 %v6507
        %v6572 = vunpack.c.h.b16 %v6507
        %v6573 = vunpack.c.l.b16 %v6508
        %v6574 = vunpack.c.h.b16 %v6508
        %v6575 = vunpack.c.l.b16 %v6509
        %v6576 = vunpack.c.h.b16 %v6509
        %v6577 = vunpack.c.l.b16 %v6510
        %v6578 = vunpack.c.h.b16 %v6510
        %v6579 = vunpack.c.l.b16 %v6511
        %v6580 = vunpack.c.h.b16 %v6511
        %v6581 = vunpack.c.l.b16 %v6512
        %v6582 = vunpack.c.h.b16 %v6512
        %v6583 = vunpack.c.l.b16 %v6513
        %v6584 = vunpack.c.h.b16 %v6513
        %v6585 = vunpack.c.l.b16 %v6514
        %v6586 = vunpack.c.h.b16 %v6514
        %v6587 = vpack.c.b16 %v6541, %v6539
        %v6588 = vpack.c.b16 %v6542, %v6540
        %v6589 = vpack.c.b16 %v6545, %v6543
        %v6590 = vpack.c.b16 %v6546, %v6544
        %v6591 = vpack.c.b16 %v6549, %v6547
        %v6592 = vpack.c.b16 %v6550, %v6548
        %v6593 = vpack.c.b16 %v6553, %v6551
        %v6594 = vpack.c.b16 %v6554, %v6552
        %v6595 = vpack.c.b16 %v6557, %v6555
        %v6596 = vpack.c.b16 %v6558, %v6556
        %v6597 = vpack.c.b16 %v6561, %v6559
        %v6598 = vpack.c.b16 %v6562, %v6560
        %v6599 = vpack.c.b16 %v6565, %v6563
        %v6600 = vpack.c.b16 %v6566, %v6564
        %v6601 = vpack.c.b16 %v6569, %v6567
        %v6602 = vpack.c.b16 %v6570, %v6568
        %v6603 = vpack.c.b16 %v6573, %v6571
        %v6604 = vpack.c.b16 %v6574, %v6572
        %v6605 = vpack.c.b16 %v6577, %v6575
        %v6606 = vpack.c.b16 %v6578, %v6576
        %v6607 = vpack.c.b16 %v6581, %v6579
        %v6608 = vpack.c.b16 %v6582, %v6580
        %v6609 = vpack.c.b16 %v6585, %v6583
        %v6610 = vpack.c.b16 %v6586, %v6584
        %v6636 = vsel %vm1191, %v6433, 0
        %v6639 = vsel %vm1191, %v6436, 0
        %v6642 = vsel %vm1191, %v6439, 0
        %v6645 = vsel %vm1191, %v6442, 0
        %v6648 = vsel %vm1191, %v6445, 0
        %v6651 = vsel %vm1191, %v6448, 0
        %v6654 = vsel %vm1191, %v6451, 0
        %v6657 = vsel %vm1191, %v6454, 0
        %v6660 = vsel %vm1191, %v6457, 0
        %v6663 = vsel %vm1191, %v6460, 0
        %6665 = vmatprep.subr.bf16.mxu0 %v6602
        %6666 = vmatpush1.bf16.msra.mxu0 %v6601
        %6667 = vmatprep.subr.bf16.mxu0 %v6600
        %6668 = vmatpush1.bf16.msra.mxu0 %v6599
        %6669 = vmatprep.subr.bf16.mxu0 %v6598
        %6670 = vmatpush1.bf16.msra.mxu0 %v6597
        %6671 = vmatprep.subr.bf16.mxu0 %v6596
        %6672 = vmatpush1.bf16.msra.mxu0 %v6595
        %6673 = vmatprep.subr.bf16.mxu0 %v6594
        %6674 = vmatpush1.bf16.msra.mxu0 %v6593
        %6675 = vmatprep.subr.bf16.mxu0 %v6592
        %6676 = vmatpush1.bf16.msra.mxu0 %v6591
        %6677 = vmatprep.subr.bf16.mxu0 %v6590
        %6678 = vmatpush1.bf16.msra.mxu0 %v6589
        %6679 = vmatprep.subr.bf16.mxu0 %v6588
        %6680 = vmatpush1.bf16.msra.mxu0 %v6587
        %6681 = vmatprep.subr.bf16.mxu0 0
        %6682 = vmatpush2.bf16.msra.mxu0 0
        %6683 = vmatprep.subr.bf16.mxu0 0
        %6684 = vmatpush2.bf16.msra.mxu0 0
        %6685 = vmatprep.subr.bf16.mxu0 0
        %6686 = vmatpush2.bf16.msra.mxu0 0
        %6687 = vmatprep.subr.bf16.mxu0 0
        %6688 = vmatpush2.bf16.msra.mxu0 0
        %6689 = vmatprep.subr.bf16.mxu0 %v6610
        %6690 = vmatpush2.bf16.msra.mxu0 %v6609
        %6691 = vmatprep.subr.bf16.mxu0 %v6608
        %6692 = vmatpush2.bf16.msra.mxu0 %v6607
        %6693 = vmatprep.subr.bf16.mxu0 %v6606
        %6694 = vmatpush2.bf16.msra.mxu0 %v6605
        %6695 = vmatprep.subr.bf16.mxu0 %v6604
        %6696 = vmatpush2.bf16.msra.mxu0 %v6603
        %6697 = vmatprep.mubr.bf16.mxu0 %v6636
        %6698 = vmatmul.mubr.bf16.gmra.mxu0 %v6462
        %v6699 = vpop.f32.mrf.mxu0
        %v6700 = vadd.f32 0.0, %v6699
        %v6701 = vpop.f32.mrf.mxu0
        %v6702 = vpop.f32.mrf.mxu0
        %v6703 = vadd.f32 0.0, %v6702
        %v6704 = vpop.f32.mrf.mxu0
        %6705 = vmatprep.mubr.bf16.mxu0 %v6639
        %6706 = vmatmul.mubr.bf16.gmra.mxu0 %v6465
        %v6707 = vpop.f32.mrf.mxu0
        %v6708 = vadd.f32 0.0, %v6707
        %v6709 = vpop.f32.mrf.mxu0
        %v6710 = vpop.f32.mrf.mxu0
        %v6711 = vadd.f32 0.0, %v6710
        %v6712 = vpop.f32.mrf.mxu0
        %6713 = vmatprep.mubr.bf16.mxu0 %v6642
        %6714 = vmatmul.mubr.bf16.gmra.mxu0 %v6468
        %v6715 = vpop.f32.mrf.mxu0
        %v6716 = vadd.f32 0.0, %v6715
        %v6717 = vpop.f32.mrf.mxu0
        %v6718 = vadd.f32 0.0, %v6717
        %v6719 = vpop.f32.mrf.mxu0
        %v6720 = vadd.f32 0.0, %v6719
        %v6721 = vpop.f32.mrf.mxu0
        %v6722 = vadd.f32 0.0, %v6721
        %6723 = vmatprep.mubr.bf16.mxu0 %v6645
        %6724 = vmatmul.mubr.bf16.gmra.mxu0 %v6471
        %v6725 = vpop.f32.mrf.mxu0
        %v6726 = vadd.f32 0.0, %v6725
        %v6727 = vpop.f32.mrf.mxu0
        %v6728 = vadd.f32 0.0, %v6727
        %v6729 = vpop.f32.mrf.mxu0
        %v6730 = vadd.f32 0.0, %v6729
        %v6731 = vpop.f32.mrf.mxu0
        %v6732 = vadd.f32 0.0, %v6731
        %6733 = vmatprep.mubr.bf16.mxu0 %v6648
        %6734 = vmatmul.mubr.bf16.gmra.mxu0 %v6474
        %v6735 = vpop.f32.mrf.mxu0
        %v6736 = vadd.f32 0.0, %v6735
        %v6737 = vpop.f32.mrf.mxu0
        %v6738 = vadd.f32 0.0, %v6737
        %v6739 = vpop.f32.mrf.mxu0
        %v6740 = vadd.f32 0.0, %v6739
        %v6741 = vpop.f32.mrf.mxu0
        %v6742 = vadd.f32 0.0, %v6741
        %6743 = vmatprep.mubr.bf16.mxu0 %v6651
        %6744 = vmatmul.mubr.bf16.gmra.mxu0 %v6477
        %v6745 = vpop.f32.mrf.mxu0
        %v6746 = vadd.f32 0.0, %v6745
        %v6747 = vpop.f32.mrf.mxu0
        %v6748 = vadd.f32 0.0, %v6747
        %v6749 = vpop.f32.mrf.mxu0
        %v6750 = vadd.f32 0.0, %v6749
        %v6751 = vpop.f32.mrf.mxu0
        %v6752 = vadd.f32 0.0, %v6751
        %6753 = vmatprep.mubr.bf16.mxu0 %v6654
        %6754 = vmatmul.mubr.bf16.gmra.mxu0 %v6480
        %v6755 = vpop.f32.mrf.mxu0
        %v6756 = vadd.f32 0.0, %v6755
        %v6757 = vpop.f32.mrf.mxu0
        %v6758 = vadd.f32 0.0, %v6757
        %v6759 = vpop.f32.mrf.mxu0
        %v6760 = vadd.f32 0.0, %v6759
        %v6761 = vpop.f32.mrf.mxu0
        %v6762 = vadd.f32 0.0, %v6761
        %6763 = vmatprep.mubr.bf16.mxu0 %v6657
        %6764 = vmatmul.mubr.bf16.gmra.mxu0 %v6483
        %v6765 = vpop.f32.mrf.mxu0
        %v6766 = vadd.f32 0.0, %v6765
        %v6767 = vpop.f32.mrf.mxu0
        %v6768 = vadd.f32 0.0, %v6767
        %v6769 = vpop.f32.mrf.mxu0
        %v6770 = vadd.f32 0.0, %v6769
        %v6771 = vpop.f32.mrf.mxu0
        %v6772 = vadd.f32 0.0, %v6771
        %6773 = vmatprep.mubr.bf16.mxu0 %v6660
        %6774 = vmatmul.mubr.bf16.gmra.mxu0 %v6486
        %v6775 = vpop.f32.mrf.mxu0
        %v6776 = vadd.f32 0.0, %v6775
        %v6777 = vpop.f32.mrf.mxu0
        %v6778 = vadd.f32 0.0, %v6777
        %v6779 = vpop.f32.mrf.mxu0
        %v6780 = vadd.f32 0.0, %v6779
        %v6781 = vpop.f32.mrf.mxu0
        %v6782 = vadd.f32 0.0, %v6781
        %6783 = vmatprep.mubr.bf16.mxu0 %v6663
        %6784 = vmatmul.mubr.bf16.gmra.mxu0 %v6489
        %v6785 = vpop.f32.mrf.mxu0
        %v6786 = vpop.f32.mrf.mxu0
        %v6787 = vadd.f32 0.0, %v6786
        %v6788 = vpop.f32.mrf.mxu0
        %v6789 = vpop.f32.mrf.mxu0
        %v6790 = vadd.f32 0.0, %v6789
        %6791 = vdwg.mxu0
        %v6792 = vadd.f32 %v6059, %v6700
        %v6793 = vadd.f32 %v6062, %v6703
        %v6794 = vadd.f32 %v6067, %v6708
        %v6795 = vadd.f32 %v6070, %v6711
        %v6796 = vadd.f32 %v6075, %v6716
        %v6797 = vadd.f32 %v6077, %v6718
        %v6798 = vadd.f32 %v6079, %v6720
        %v6799 = vadd.f32 %v6081, %v6722
        %v6800 = vadd.f32 %v6085, %v6726
        %v6801 = vadd.f32 %v6087, %v6728
        %v6802 = vadd.f32 %v6089, %v6730
        %v6803 = vadd.f32 %v6091, %v6732
        %v6804 = vadd.f32 %v6095, %v6736
        %v6805 = vadd.f32 %v6097, %v6738
        %v6806 = vadd.f32 %v6099, %v6740
        %v6807 = vadd.f32 %v6101, %v6742
        %v6808 = vadd.f32 %v6105, %v6746
        %v6809 = vadd.f32 %v6107, %v6748
        %v6810 = vadd.f32 %v6109, %v6750
        %v6811 = vadd.f32 %v6111, %v6752
        %v6812 = vadd.f32 %v6115, %v6756
        %v6813 = vadd.f32 %v6117, %v6758
        %v6814 = vadd.f32 %v6119, %v6760
        %v6815 = vadd.f32 %v6121, %v6762
        %v6816 = vadd.f32 %v6125, %v6766
        %v6817 = vadd.f32 %v6127, %v6768
        %v6818 = vadd.f32 %v6129, %v6770
        %v6819 = vadd.f32 %v6131, %v6772
        %v6820 = vadd.f32 %v6135, %v6776
        %v6821 = vadd.f32 %v6137, %v6778
        %v6822 = vadd.f32 %v6139, %v6780
        %v6823 = vadd.f32 %v6141, %v6782
        %v6824 = vadd.f32 %v6146, %v6787
        %v6825 = vadd.f32 %v6149, %v6790
        %6842 = vrot.lane.b32.xlu0 %v6794, 64
        %v6843 = vpop.permute.xlu0 %6842
        %6844 = vrot.lane.b32.xlu0 %v6795, 64
        %v6845 = vpop.permute.xlu0 %6844
        %6846 = vrot.lane.b32.xlu0 %v6796, 64
        %v6847 = vpop.permute.xlu0 %6846
        %6848 = vrot.lane.b32.xlu0 %v6798, 64
        %v6849 = vpop.permute.xlu0 %6848
        %6850 = vrot.lane.b32.xlu0 %v6800, 64
        %v6851 = vpop.permute.xlu0 %6850
        %6852 = vrot.lane.b32.xlu0 %v6802, 64
        %v6853 = vpop.permute.xlu0 %6852
        %6854 = vrot.lane.b32.xlu0 %v6804, 64
        %v6855 = vpop.permute.xlu0 %6854
        %6856 = vrot.lane.b32.xlu0 %v6806, 64
        %v6857 = vpop.permute.xlu0 %6856
        %6858 = vrot.lane.b32.xlu0 %v6808, 64
        %v6859 = vpop.permute.xlu0 %6858
        %6860 = vrot.lane.b32.xlu0 %v6810, 64
        %v6861 = vpop.permute.xlu0 %6860
        %6862 = vrot.lane.b32.xlu0 %v6812, 64
        %v6863 = vpop.permute.xlu0 %6862
        %6864 = vrot.lane.b32.xlu0 %v6814, 64
        %v6865 = vpop.permute.xlu0 %6864
        %6866 = vrot.lane.b32.xlu0 %v6816, 64
        %v6867 = vpop.permute.xlu0 %6866
        %6868 = vrot.lane.b32.xlu0 %v6818, 64
        %v6869 = vpop.permute.xlu0 %6868
        %6870 = vrot.lane.b32.xlu0 %v6820, 64
        %v6871 = vpop.permute.xlu0 %6870
        %6872 = vrot.lane.b32.xlu0 %v6822, 64
        %v6873 = vpop.permute.xlu0 %6872
        %v6890 = vadd.f32 %v6792, %v6843
        %v6891 = vadd.f32 %v6793, %v6845
        %v6892 = vadd.f32 %v6794, %v6847
        %v6893 = vadd.f32 %v6795, %v6849
        %v6894 = vadd.f32 %v6796, %v6851
        %v6895 = vadd.f32 %v6798, %v6853
        %v6896 = vadd.f32 %v6800, %v6855
        %v6897 = vadd.f32 %v6802, %v6857
        %v6898 = vadd.f32 %v6804, %v6859
        %v6899 = vadd.f32 %v6806, %v6861
        %v6900 = vadd.f32 %v6808, %v6863
        %v6901 = vadd.f32 %v6810, %v6865
        %v6902 = vadd.f32 %v6812, %v6867
        %v6903 = vadd.f32 %v6814, %v6869
        %v6904 = vadd.f32 %v6816, %v6871
        %v6905 = vadd.f32 %v6818, %v6873
        %v6906 = vadd.f32 %v6890, %v6797
        %v6907 = vadd.f32 %v6891, %v6799
        %v6908 = vadd.f32 %v6892, %v6801
        %v6909 = vadd.f32 %v6893, %v6803
        %v6910 = vadd.f32 %v6894, %v6805
        %v6911 = vadd.f32 %v6895, %v6807
        %v6912 = vadd.f32 %v6896, %v6809
        %v6913 = vadd.f32 %v6897, %v6811
        %v6914 = vadd.f32 %v6898, %v6813
        %v6915 = vadd.f32 %v6899, %v6815
        %v6916 = vadd.f32 %v6900, %v6817
        %v6917 = vadd.f32 %v6901, %v6819
        %v6918 = vadd.f32 %v6902, %v6821
        %v6919 = vadd.f32 %v6903, %v6823
        %v6920 = vadd.f32 %v6904, %v6824
        %v6921 = vadd.f32 %v6905, %v6825
        %v6922 = vld [vmem:[%s12] sm:$0x1]
        %v6924 = vlaneseq
        %v6925 = vshrl.u32 %v6924, 7
        %v6926 = vsub.s32 0, %v6925
        %v6927 = vrot.slane %v6922, %v6926
        %v6929 = vadd.f32 %v6906, %v6927
        %v6930 = vadd.f32 %v6907, %v6927
        %v6931 = vadd.f32 %v6908, %v6927
        %v6932 = vadd.f32 %v6909, %v6927
        %v6933 = vadd.f32 %v6910, %v6927
        %v6934 = vadd.f32 %v6911, %v6927
        %v6935 = vadd.f32 %v6912, %v6927
        %v6936 = vadd.f32 %v6913, %v6927
        %v6937 = vadd.f32 %v6914, %v6927
        %v6938 = vadd.f32 %v6915, %v6927
        %v6939 = vadd.f32 %v6916, %v6927
        %v6940 = vadd.f32 %v6917, %v6927
        %v6941 = vadd.f32 %v6918, %v6927
        %v6942 = vadd.f32 %v6919, %v6927
        %v6943 = vadd.f32 %v6920, %v6927
        %v6944 = vadd.f32 %v6921, %v6927
        %v6945 = vld [vmem:[%s13] sm:$0x1]
        %v6947 = vlaneseq
        %v6948 = vshrl.u32 %v6947, 7
        %v6949 = vsub.s32 0, %v6948
        %v6950 = vrot.slane %v6945, %v6949
        %6951 = vset.pattern.permute.xlu0 0
        %6952 = vperm.xlu0 %6951, %v6950
        %v6953 = vpop.permute.xlu0 %6952
        %v6955 = vmul.f32 %v602, %v6953
        %v6956 = vmul.f32 %v603, %v6953
        %v6957 = vmul.f32 %v604, %v6953
        %v6958 = vmul.f32 %v605, %v6953
        %v6959 = vmul.f32 %v606, %v6953
        %v6960 = vmul.f32 %v607, %v6953
        %v6961 = vmul.f32 %v608, %v6953
        %v6962 = vmul.f32 %v609, %v6953
        %v6963 = vmul.f32 %v610, %v6953
        %v6964 = vmul.f32 %v611, %v6953
        %v6965 = vmul.f32 %v612, %v6953
        %v6966 = vmul.f32 %v613, %v6953
        %v6967 = vmul.f32 %v614, %v6953
        %v6968 = vmul.f32 %v615, %v6953
        %v6969 = vmul.f32 %v616, %v6953
        %v6970 = vmul.f32 %v617, %v6953
        %6971 = vset.pattern.permute.xlu0 1
        %6972 = vperm.xlu0 %6971, %v6950
        %v6973 = vpop.permute.xlu0 %6972
        %v6975 = vmul.f32 %v6929, %v6973
        %v6976 = vmul.f32 %v6930, %v6973
        %v6977 = vmul.f32 %v6931, %v6973
        %v6978 = vmul.f32 %v6932, %v6973
        %v6979 = vmul.f32 %v6933, %v6973
        %v6980 = vmul.f32 %v6934, %v6973
        %v6981 = vmul.f32 %v6935, %v6973
        %v6982 = vmul.f32 %v6936, %v6973
        %v6983 = vmul.f32 %v6937, %v6973
        %v6984 = vmul.f32 %v6938, %v6973
        %v6985 = vmul.f32 %v6939, %v6973
        %v6986 = vmul.f32 %v6940, %v6973
        %v6987 = vmul.f32 %v6941, %v6973
        %v6988 = vmul.f32 %v6942, %v6973
        %v6989 = vmul.f32 %v6943, %v6973
        %v6990 = vmul.f32 %v6944, %v6973
        %v6991 = vadd.f32 %v6955, %v6975
        %v6992 = vadd.f32 %v6956, %v6976
        %v6993 = vadd.f32 %v6957, %v6977
        %v6994 = vadd.f32 %v6958, %v6978
        %v6995 = vadd.f32 %v6959, %v6979
        %v6996 = vadd.f32 %v6960, %v6980
        %v6997 = vadd.f32 %v6961, %v6981
        %v6998 = vadd.f32 %v6962, %v6982
        %v6999 = vadd.f32 %v6963, %v6983
        %v7000 = vadd.f32 %v6964, %v6984
        %v7001 = vadd.f32 %v6965, %v6985
        %v7002 = vadd.f32 %v6966, %v6986
        %v7003 = vadd.f32 %v6967, %v6987
        %v7004 = vadd.f32 %v6968, %v6988
        %v7005 = vadd.f32 %v6969, %v6989
        %v7006 = vadd.f32 %v6970, %v6990
        %7007 = vst.msk [vmem:[%s586] sm:$0xff] %vm1191, %v6991
        %7008 = vst.msk [vmem:[%s586 + $0x8] sm:$0xff] %vm1191, %v6992
        %7009 = vst.msk [vmem:[%s586 + $0x10] sm:$0xff] %vm1191, %v6993
        %7010 = vst.msk [vmem:[%s586 + $0x18] sm:$0xff] %vm1191, %v6994
        %7011 = vst.msk [vmem:[%s586 + $0x20] sm:$0xff] %vm1191, %v6995
        %7012 = vst.msk [vmem:[%s586 + $0x28] sm:$0xff] %vm1191, %v6996
        %7013 = vst.msk [vmem:[%s586 + $0x30] sm:$0xff] %vm1191, %v6997
        %7014 = vst.msk [vmem:[%s586 + $0x38] sm:$0xff] %vm1191, %v6998
        %7015 = vst.msk [vmem:[%s586 + $0x40] sm:$0xff] %vm1191, %v6999
        %7016 = vst.msk [vmem:[%s586 + $0x48] sm:$0xff] %vm1191, %v7000
        %7017 = vst.msk [vmem:[%s586 + $0x50] sm:$0xff] %vm1191, %v7001
        %7018 = vst.msk [vmem:[%s586 + $0x58] sm:$0xff] %vm1191, %v7002
        %7019 = vst.msk [vmem:[%s586 + $0x60] sm:$0xff] %vm1191, %v7003
        %7020 = vst.msk [vmem:[%s586 + $0x68] sm:$0xff] %vm1191, %v7004
        %7021 = vst.msk [vmem:[%s586 + $0x70] sm:$0xff] %vm1191, %v7005
        %7022 = vst.msk [vmem:[%s586 + $0x78] sm:$0xff] %vm1191, %v7006
        %s7023 = sand.u32 %s355, 1
        %s7024 = scalar_lea.sflag [#allocation4], %s7023
        %s7025 = sand.u32 %s355, 1
        %s7026 = smul.addr %s7025, 128
        %s7027 = scalar_lea.vmem [#allocation14], %s7026
        // Predicated region
        $region105: #{tpu_custom_call.1} parent=75 // pred_check
          %p7028 = pneg %p365
        $region106: #{tpu_custom_call.1} parent=75 // pred_check_branch
          %7030 = sbr.rel (%p7028) target = $region108
        $region107: #{tpu_custom_call.1} parent=75 // pred_region
          %s7031 = smul.u32 8, %s39
          %s7033 = ssub.s32 2048, 2048
          %7034 = vsyncadd %s7024, %s7033
          %s7035 = smul.addr %s7031, 2
          %s7036 = smul.addr %s38, 32
          %s7037 = sadd.s32 %s7035, %s7036
          %s7038 = smul.addr %s7037, 128
          %s7039 = scalar_lea.hbm %s14, %s7038
          %s7040 = sshll.u32 %s7027, 4
          %s7041 = int_to_ptr.vmem [resolvable:$true] %s7040
          %7046 = dma.vmem_to_hbm [thread:$0]  %s7041, 2048, %s7039, %s7024, 128, 128, 8
        $region108: #{tpu_custom_call.1} parent=75 // pred_fallthru
          _
      $region76: #{tpu_custom_call.1} parent=5 // pred_fallthru
        _
      %p7047 = scmp.le.s32.totalorder 2, %s29
      // Predicated region
      $region109: #{tpu_custom_call.1} parent=5 // pred_check
        %p7048 = pneg %p7047
      $region110: #{tpu_custom_call.1} parent=5 // pred_check_branch
        %7050 = sbr.rel (%p7048) target = $region112
      $region111: #{tpu_custom_call.1} parent=5 // pred_region
        %s7051 = ssub.s32 %s29, 2
        // Predicated region
        $region113: #{tpu_custom_call.1} parent=111 // pred_check
          %p7052 = pneg %p371
        $region114: #{tpu_custom_call.1} parent=111 // pred_check_branch
          %7054 = sbr.rel (%p7052) target = $region116
        $region115: #{tpu_custom_call.1} parent=111 // pred_region
          %s7055 = sand.u32 %s356, 1
          %s7056 = scalar_lea.sflag [#allocation4], %s7055
          %s7057 = sand.u32 %s356, 1
          %s7058 = smul.addr %s7057, 128
          %s7059 = scalar_lea.vmem [#allocation14], %s7058
          %7060 = dma.done %s7056, 2048
        $region116: #{tpu_custom_call.1} parent=111 // pred_fallthru
          _
      $region112: #{tpu_custom_call.1} parent=5 // pred_fallthru
        _
    $region6: #{tpu_custom_call.1} parent=1 // loop_footer
      %s33 = sadd.s32 1, %s29
    $region7: #{tpu_custom_call.1} parent=1 // loop_footer_branch
      %28 = sbr.rel target = $region3
    $region8: #{tpu_custom_call.1} parent=1 // loop_exit
      _
    %7061 = vsyncpa [#allocation3], 1
    %s7062 = scalar_lea.sflag [#allocation3], 1
    %7063 = vsyncpa %s7062, 1
    %7064 = vsyncpa [#allocation6], 1
    %7065 = vsyncpa [#allocation9], 1
    %7066 = vsyncpa [#allocation12], 1
    %7067 = vsyncpa [#allocation4], 1
    %s7068 = scalar_lea.sflag [#allocation4], 1
    %7069 = vsyncpa %s7068, 1

</llo_original>
